<compile_context>
chip_gen: v6e
topology: v6e:2x2x1
jax: 0.10.0
libtpu: 0.0.40
codegen_flags: <defaults>
</compile_context>

<pallas_src>
import functools
import numpy as np
import jax
import jax.numpy as jnp
from jax.experimental import pallas as pl
from jax.experimental.pallas import tpu as pltpu  # noqa: F401  (kept for TPU-specific tuning hooks)

# ---------------- small, self-consistent config ----------------
VOCAB = 50
MAX_SEQ_LEN = 16
NUM_LAYERS = 2
MODEL_DIM = 32          # D
NUM_HEADS = 4           # H
FFN_DIM = 64
DIM_PER_HEAD = MODEL_DIM // NUM_HEADS   # 8

SELU_ALPHA = 1.6732632423543772
SELU_SCALE = 1.0507009873554805
LN_EPS = 1e-5


# ---------------- in-kernel helpers ----------------
def _mm(a, b):
    return jnp.dot(a, b, preferred_element_type=jnp.float32)


def _selu(y):
    return SELU_SCALE * jnp.where(y > 0, y, SELU_ALPHA * (jnp.exp(y) - 1.0))


def _layernorm(z, w, b):
    mu = jnp.mean(z, axis=-1, keepdims=True)
    var = jnp.mean((z - mu) ** 2, axis=-1, keepdims=True)
    return (z - mu) * jax.lax.rsqrt(var + LN_EPS) * w + b


def _encoder_tail(x, ctx, wo, bo, ln1w, ln1b, w1, b1, w2, b2, ln2w, ln2b):
    """linear_final + LayerNorm(residual + .) + position-wise FFN + LayerNorm."""
    o = _mm(ctx, wo) + bo
    x1 = _layernorm(x + o, ln1w, ln1b)
    f = jnp.maximum(_mm(x1, w1) + b1, 0.0)      # Conv1d(k=1) == Linear, ReLU
    f = _mm(f, w2) + b2
    return _layernorm(x1 + f, ln2w, ln2b)


# ---------------- Pallas kernels ----------------
def _qkv_kernel(x_ref, w_ref, b_ref, o_ref):
    # fused Q|K|V projection: [M, D] @ [D, 3D] + [1, 3D]
    o_ref[...] = _mm(x_ref[...], w_ref[...]) + b_ref[...]


def _attn_kernel(q_ref, k_ref, v_ref, m_ref, o_ref, *, scale, num_heads):
    # q,k,v: [B*H, L, dh] (the torch view-without-transpose "head" split)
    # m_ref: [B, L, L] float (1.0 where key token is padding)
    q = q_ref[...]
    k = k_ref[...]
    v = v_ref[...]
    # torch: attn_mask.repeat(num_heads, 1, 1)  ->  group i uses mask[i % B]
    mask = jnp.concatenate([m_ref[...]] * num_heads, axis=0)        # [B*H, L, L]
    s = jnp.einsum("bqd,bkd->bqk", q, k,
                   preferred_element_type=jnp.float32) * scale
    s = jnp.where(mask > 0.5, -jnp.inf, s)                          # masked_fill_(-inf)
    mx = jnp.max(s, axis=-1, keepdims=True)
    p = jnp.exp(s - mx)
    p = p / jnp.sum(p, axis=-1, keepdims=True)                      # softmax(dim=2)
    o_ref[...] = jnp.einsum("bqk,bkd->bqd", p, v,
                            preferred_element_type=jnp.float32)


def _mid_kernel(x_ref, ctx_ref, wo_ref, bo_ref, ln1w_ref, ln1b_ref,
                w1_ref, b1_ref, w2_ref, b2_ref, ln2w_ref, ln2b_ref,
                wqkv_ref, bqkv_ref, xo_ref, qkv_ref):
    # layer tail (out-proj + LN + FFN + LN) fused with the NEXT layer's QKV proj
    x2 = _encoder_tail(x_ref[...], ctx_ref[...], wo_ref[...], bo_ref[...],
                       ln1w_ref[...], ln1b_ref[...], w1_ref[...], b1_ref[...],
                       w2_ref[...], b2_ref[...], ln2w_ref[...], ln2b_ref[...])
    xo_ref[...] = x2
    qkv_ref[...] = _mm(x2, wqkv_ref[...]) + bqkv_ref[...]


def _final_kernel(*refs):
    (x_ref, ctx_ref,
     wo_ref, bo_ref, ln1w_ref, ln1b_ref, w1_ref, b1_ref, w2_ref, b2_ref,
     ln2w_ref, ln2b_ref,
     e1_ref, e1b_ref, e2_ref, e2b_ref,
     wo4_ref, wo4b_ref, cc_ref, ccb_ref, cc2_ref, cc2b_ref,
     o1a_ref, o1b_ref, o1bias_ref, o2_ref, o2b_ref, wa_ref, wab_ref,
     mw_ref, mb_ref, nw_ref, nb_ref,
     out_ref, outf_ref, h_ref, c_ref) = refs

    # last encoder layer tail
    x2 = _encoder_tail(x_ref[...], ctx_ref[...], wo_ref[...], bo_ref[...],
                       ln1w_ref[...], ln1b_ref[...], w1_ref[...], b1_ref[...],
                       w2_ref[...], b2_ref[...], ln2w_ref[...], ln2b_ref[...])

    # linear_enc: Linear -> SELU -> Linear -> SELU   (dropout = identity)
    g = _selu(_mm(x2, e1_ref[...]) + e1b_ref[...])
    g = _selu(_mm(g, e2_ref[...]) + e2b_ref[...])

    # W_O(output)  -> [rows, 4D]  (lane-dense, 128 wide)
    w4 = _mm(x2, wo4_ref[...]) + wo4b_ref[...]

    # linear_out(cat([gamm_enc, W_O(out)], -1)) without materializing the concat:
    # the 5D-wide first Linear is pre-split into its gamm / W_O column blocks.
    out = _selu(_mm(g, o1a_ref[...]) + _mm(w4, o1b_ref[...]) + o1bias_ref[...])
    out = _selu(_mm(out, o2_ref[...]) + o2b_ref[...])               # [rows, 4D]
    out_ref[...] = out
    outf_ref[...] = _mm(out, wa_ref[...]) + wab_ref[...]            # W_A(output)

    # hidden-state branches:
    #   h[j, b, :] = sum_l m_w[j, l] * x2[b, l, :] + m_b[j]
    # == output.transpose(1,2) @ m.T followed by permute(2,0,1) -- no transposes.
    ci = _mm(x2, cc_ref[...]) + ccb_ref[...]                        # change_c
    ci = _mm(ci, cc2_ref[...]) + cc2b_ref[...]                      # change_c_
    num_b = h_ref.shape[0]
    seq = x2.shape[0] // num_b
    for b in range(num_b):                                          # static, tiny
        xb = x2[b * seq:(b + 1) * seq, :]
        cb = ci[b * seq:(b + 1) * seq, :]
        h_ref[b, :, :] = _mm(mw_ref[...], xb) + mb_ref[...]
        c_ref[b, :, :] = _mm(nw_ref[...], cb) + nb_ref[...]


# ---------------- pallas_call wrappers (whole arrays in VMEM, no grid) ----------------
def qkv_proj(x, wqkv, bqkv):
    m = x.shape[0]
    n = wqkv.shape[1]
    return pl.pallas_call(
        _qkv_kernel,
        out_shape=jax.ShapeDtypeStruct((m, n), jnp.float32),
    )(x, wqkv, bqkv)


def multihead_attention(q3, k3, v3, mask, scale):
    bh, seq, dh = q3.shape
    return pl.pallas_call(
        functools.partial(_attn_kernel, scale=scale, num_heads=NUM_HEADS),
        out_shape=jax.ShapeDtypeStruct((bh, seq, dh), jnp.float32),
    )(q3, k3, v3, mask)


def encoder_tail_and_next_qkv(x, ctx, lyr, nxt):
    m, d = x.shape
    n = nxt["wqkv"].shape[1]
    return pl.pallas_call(
        _mid_kernel,
        out_shape=(jax.ShapeDtypeStruct((m, d), jnp.float32),
                   jax.ShapeDtypeStruct((m, n), jnp.float32)),
    )(x, ctx, lyr["wo"], lyr["bo"], lyr["ln1w"], lyr["ln1b"],
      lyr["w1"], lyr["b1"], lyr["w2"], lyr["b2"], lyr["ln2w"], lyr["ln2b"],
      nxt["wqkv"], nxt["bqkv"])


def encoder_tail_and_head(x, ctx, lyr, post, batch):
    m, _ = x.shape
    d4 = 4 * MODEL_DIM
    out_shapes = (jax.ShapeDtypeStruct((m, d4), jnp.float32),
                  jax.ShapeDtypeStruct((m, d4), jnp.float32),
                  jax.ShapeDtypeStruct((batch, 2, MODEL_DIM), jnp.float32),
                  jax.ShapeDtypeStruct((batch, 2, MODEL_DIM), jnp.float32))
    return pl.pallas_call(_final_kernel, out_shape=out_shapes)(
        x, ctx, lyr["wo"], lyr["bo"], lyr["ln1w"], lyr["ln1b"],
        lyr["w1"], lyr["b1"], lyr["w2"], lyr["b2"], lyr["ln2w"], lyr["ln2b"],
        post["e1"], post["e1b"], post["e2"], post["e2b"],
        post["WO"], post["WOb"], post["cc"], post["ccb"], post["cc2"], post["cc2b"],
        post["o1a"], post["o1b"], post["o1bias"], post["o2"], post["o2b"],
        post["WA"], post["WAb"], post["mw"], post["mb"], post["nw"], post["nb"])


# ---------------- params / glue ----------------
def build_pos_table(d_model, max_seq_len):
    pe = np.array([[pos / np.power(10000, 2.0 * (j // 2) / d_model)
                    for j in range(d_model)] for pos in range(max_seq_len)])
    pe[:, 0::2] = np.sin(pe[:, 0::2])
    pe[:, 1::2] = np.cos(pe[:, 1::2])
    table = np.concatenate([np.zeros((1, d_model)), pe], axis=0).astype(np.float32)
    return jnp.asarray(table)


def init_params(key, seq_len):
    """All matmul weights are stored pre-transposed ([in, out]) / pre-fused."""
    d = MODEL_DIM
    keys = iter(jax.random.split(key, 128))

    def nrm(shape, std=0.05):
        return std * jax.random.normal(next(keys), shape, dtype=jnp.float32)

    p = {}
    # init_wt_normal overwrites the whole embedding (incl. padding row) in torch.
    p["embedding"] = 0.02 * jax.random.normal(next(keys), (VOCAB, d), jnp.float32)
    p["pos_table"] = build_pos_table(d, MAX_SEQ_LEN)

    layers = []
    for _ in range(NUM_LAYERS):
        wq, wk, wv = nrm((d, d)), nrm((d, d)), nrm((d, d))
        layers.append(dict(
            wqkv=jnp.concatenate([wq, wk, wv], axis=1),          # [D, 3D]
            bqkv=jnp.zeros((1, 3 * d), jnp.float32),
            wo=nrm((d, d)), bo=jnp.zeros((1, d), jnp.float32),
            ln1w=jnp.ones((1, d), jnp.float32), ln1b=jnp.zeros((1, d), jnp.float32),
            w1=nrm((d, FFN_DIM)), b1=jnp.zeros((1, FFN_DIM), jnp.float32),
            w2=nrm((FFN_DIM, d)), b2=jnp.zeros((1, d), jnp.float32),
            ln2w=jnp.ones((1, d), jnp.float32), ln2b=jnp.zeros((1, d), jnp.float32),
        ))
    p["layers"] = layers

    o1 = nrm((5 * d, 5 * d))                                     # linear_out[0]
    p["post"] = dict(
        e1=nrm((d, d)), e1b=jnp.zeros((1, d), jnp.float32),
        e2=nrm((d, d)), e2b=jnp.zeros((1, d), jnp.float32),
        WO=nrm((d, 4 * d)), WOb=jnp.zeros((1, 4 * d), jnp.float32),
        cc=nrm((d, 2 * d)), ccb=jnp.zeros((1, 2 * d), jnp.float32),
        cc2=nrm((2 * d, d)), cc2b=jnp.zeros((1, d), jnp.float32),
        o1a=o1[:d, :],                 # gamm_enc column block of linear_out[0]
        o1b=o1[d:, :],                 # W_O(output) column block
        o1bias=jnp.zeros((1, 5 * d), jnp.float32),
        o2=nrm((5 * d, 4 * d)), o2b=jnp.zeros((1, 4 * d), jnp.float32),
        WA=nrm((4 * d, 4 * d)), WAb=jnp.zeros((1, 4 * d), jnp.float32),
        # `m`/`n` are nn.Linear(inputs_len[0], 2) re-created inside torch forward();
        # here they are deterministic parameters instead of fresh randoms per call.
        mw=nrm((2, seq_len)), mb=jnp.zeros((2, 1), jnp.float32),
        nw=nrm((2, seq_len)), nb=jnp.zeros((2, 1), jnp.float32),
    )
    return p


def trm_encoder_forward(params, inputs, inputs_len):
    bsz, seq = inputs.shape
    d = MODEL_DIM

    emb = params["embedding"][inputs]                               # [B, L, D]
    # input_pos[b] = [1..len_b] + [0]*(L-len_b); row 0 of the table is the pad row.
    ar = jnp.arange(seq, dtype=jnp.int32)
    pos_idx = jnp.where(ar[None, :] < inputs_len[:, None].astype(jnp.int32),
                        ar[None, :] + 1, 0)
    x = (emb + params["pos_table"][pos_idx]).reshape(bsz * seq, d).astype(jnp.float32)

    # padding_mask(inputs, inputs): True where key token == 0, shape [B, L, L]
    pad = (inputs == 0)
    mask = jnp.broadcast_to(pad[:, None, :], (bsz, seq, seq)).astype(jnp.float32)

    # scale = (key.size(-1) // num_heads) ** -0.5  (integer divide, torch quirk)
    scale = float((DIM_PER_HEAD // NUM_HEADS) ** -0.5)

    layers = params["layers"]
    qkv = qkv_proj(x, layers[0]["wqkv"], layers[0]["bqkv"])         # [B*L, 3D]

    out = outf = h_t = c_t = None
    for li in range(NUM_LAYERS):
        lyr = layers[li]
        # torch `.view(B*H, -1, dim_per_head)` (row-major reshape, no head transpose)
        q3 = qkv[:, :d].reshape(bsz * NUM_HEADS, seq, DIM_PER_HEAD)
        k3 = qkv[:, d:2 * d].reshape(bsz * NUM_HEADS, seq, DIM_PER_HEAD)
        v3 = qkv[:, 2 * d:].reshape(bsz * NUM_HEADS, seq, DIM_PER_HEAD)
        ctx = multihead_attention(q3, k3, v3, mask, scale)          # [B*H, L, dh]
        ctx_flat = ctx.reshape(bsz * seq, d)                        # torch .view(B,-1,D)
        if li + 1 < NUM_LAYERS:
            x, qkv = encoder_tail_and_next_qkv(x, ctx_flat, lyr, layers[li + 1])
        else:
            out, outf, h_t, c_t = encoder_tail_and_head(x, ctx_flat, lyr,
                                                        params["post"], bsz)

    output = out.reshape(bsz, seq, 4 * d)
    h = jnp.transpose(h_t, (1, 0, 2))                               # [2, B, D]
    c = jnp.transpose(c_t, (1, 0, 2))                               # [2, B, D]
    return output, outf, (h, c)


# ---------------- main ----------------
if __name__ == "__main__":
    B, L = 2, 8
    key = jax.random.PRNGKey(0)
    k_tok, k_param = jax.random.split(key)

    # token ids in [1, VOCAB); second sequence padded with 0 beyond its length.
    # np.array(...) makes a writable host copy (np.asarray of a jax array is read-only).
    inputs_np = np.array(jax.random.randint(k_tok, (B, L), 1, VOCAB), dtype=np.int32)
    inputs_len = np.array([L, 5], dtype=np.int32)   # max == L (required by the module)
    inputs_np[1, int(inputs_len[1]):] = 0
    inputs = jnp.asarray(inputs_np)
    inputs_len_j = jnp.asarray(inputs_len)

    params = init_params(k_param, seq_len=int(inputs_len[0]))

    fwd = jax.jit(trm_encoder_forward)
    output, output_feature, (h, c) = fwd(params, inputs, inputs_len_j)
    jax.block_until_ready((output, output_feature, h, c))

    assert output.shape == (B, L, 4 * MODEL_DIM)
    assert output_feature.shape == (B * L, 4 * MODEL_DIM)
    assert h.shape == (2, B, MODEL_DIM) and c.shape == (2, B, MODEL_DIM)
    assert bool(jnp.all(jnp.isfinite(output)))
    assert bool(jnp.all(jnp.isfinite(output_feature)))

    print("KERNEL_OK")
</pallas_src>

<mosaic_0001>
module attributes {stable_mosaic.version = 11 : i64} {
  func.func @_qkv_kernel(%arg0: memref<16x32xf32, #tpu.memory_space<vmem>>, %arg1: memref<32x96xf32, #tpu.memory_space<vmem>>, %arg2: memref<1x96xf32, #tpu.memory_space<vmem>>, %arg3: memref<16x96xf32, #tpu.memory_space<vmem>>) attributes {dimension_semantics = [], scalar_prefetch = 0 : i64, scratch_operands = 0 : i64, tpu.core_type = #tpu.core_type<tc>} {
    %c0 = arith.constant 0 : index
    %c0_0 = arith.constant 0 : index
    %0 = vector.load %arg0[%c0, %c0_0] : memref<16x32xf32, #tpu.memory_space<vmem>>, vector<16x32xf32>
    %c0_1 = arith.constant 0 : index
    %c0_2 = arith.constant 0 : index
    %1 = vector.load %arg1[%c0_1, %c0_2] : memref<32x96xf32, #tpu.memory_space<vmem>>, vector<32x96xf32>
    %cst = arith.constant dense<0.000000e+00> : vector<16x96xf32>
    %2 = tpu.matmul %0, %1, %cst {dimension_numbers = #tpu.dot_dimension_numbers<[1], [0], [0], [1], [0, 0, 1, 1], [], []>} : vector<16x32xf32>, vector<32x96xf32>, vector<16x96xf32> -> vector<16x96xf32>
    %c0_3 = arith.constant 0 : index
    %c0_4 = arith.constant 0 : index
    %3 = vector.load %arg2[%c0_3, %c0_4] : memref<1x96xf32, #tpu.memory_space<vmem>>, vector<1x96xf32>
    %4 = vector.broadcast %3 : vector<1x96xf32> to vector<16x96xf32>
    %5 = arith.addf %2, %4 : vector<16x96xf32>
    %c0_5 = arith.constant 0 : index
    %c0_6 = arith.constant 0 : index
    %6 = vector.load %arg3[%c0_5, %c0_6] : memref<16x96xf32, #tpu.memory_space<vmem>>, vector<16x96xf32>
    tpu.vector_store %arg3[%c0_5, %c0_6], %5 {strides = array<i32>} : memref<16x96xf32, #tpu.memory_space<vmem>>, vector<16x96xf32>,
    return
  }
}

module attributes {stable_mosaic.version = 11 : i64} {
  func.func @_attn_kernel(%arg0: memref<8x8x8xf32, #tpu.memory_space<vmem>>, %arg1: memref<8x8x8xf32, #tpu.memory_space<vmem>>, %arg2: memref<8x8x8xf32, #tpu.memory_space<vmem>>, %arg3: memref<2x8x8xf32, #tpu.memory_space<vmem>>, %arg4: memref<8x8x8xf32, #tpu.memory_space<vmem>>) attributes {dimension_semantics = [], scalar_prefetch = 0 : i64, scratch_operands = 0 : i64, tpu.core_type = #tpu.core_type<tc>} {
    %c0 = arith.constant 0 : index
    %c0_0 = arith.constant 0 : index
    %c0_1 = arith.constant 0 : index
    %0 = vector.load %arg0[%c0, %c0_0, %c0_1] : memref<8x8x8xf32, #tpu.memory_space<vmem>>, vector<8x8x8xf32>
    %c0_2 = arith.constant 0 : index
    %c0_3 = arith.constant 0 : index
    %c0_4 = arith.constant 0 : index
    %1 = vector.load %arg1[%c0_2, %c0_3, %c0_4] : memref<8x8x8xf32, #tpu.memory_space<vmem>>, vector<8x8x8xf32>
    %c0_5 = arith.constant 0 : index
    %c0_6 = arith.constant 0 : index
    %c0_7 = arith.constant 0 : index
    %2 = vector.load %arg2[%c0_5, %c0_6, %c0_7] : memref<8x8x8xf32, #tpu.memory_space<vmem>>, vector<8x8x8xf32>
    %c0_8 = arith.constant 0 : index
    %c0_9 = arith.constant 0 : index
    %c0_10 = arith.constant 0 : index
    %3 = vector.load %arg3[%c0_8, %c0_9, %c0_10] : memref<2x8x8xf32, #tpu.memory_space<vmem>>, vector<2x8x8xf32>
    %4 = tpu.concatenate %3, %3, %3, %3 in 0 : vector<2x8x8xf32>, vector<2x8x8xf32>, vector<2x8x8xf32>, vector<2x8x8xf32> -> vector<8x8x8xf32>
    "tpu.trace_start"() <{level = 10 : i32, message = "bqd,bkd->bqk"}> : () -> ()
    %cst = arith.constant dense<0.000000e+00> : vector<8x8x8xf32>
    %5 = tpu.matmul %0, %1, %cst {dimension_numbers = #tpu.dot_dimension_numbers<[2], [2], [1], [1], [0, 0, 0, 1, 1, 1], [0], [0]>} : vector<8x8x8xf32>, vector<8x8x8xf32>, vector<8x8x8xf32> -> vector<8x8x8xf32>
    "tpu.trace_stop"() : () -> ()
    %cst_11 = arith.constant 0.707106769 : f32
    %6 = vector.broadcast %cst_11 : f32 to vector<8x8x8xf32>
    %7 = arith.mulf %5, %6 : vector<8x8x8xf32>
    %cst_12 = arith.constant 5.000000e-01 : f32
    %8 = vector.broadcast %cst_12 : f32 to vector<8x8x8xf32>
    %9 = arith.cmpf ogt, %4, %8 : vector<8x8x8xf32>
    %cst_13 = arith.constant 0xFF800000 : f32
    %10 = vector.broadcast %cst_13 : f32 to vector<8x8x8xf32>
    %11 = arith.select %9, %10, %7 : vector<8x8x8xi1>, vector<8x8x8xf32>
    %cst_14 = arith.constant dense<0xFF800000> : vector<8x8xf32>
    %12 = vector.multi_reduction <maximumf>, %11, %cst_14 [2] : vector<8x8x8xf32> to vector<8x8xf32>
    %13 = vector.shape_cast %12 : vector<8x8xf32> to vector<8x8x1xf32>
    %14 = vector.broadcast %13 : vector<8x8x1xf32> to vector<8x8x8xf32>
    %15 = arith.subf %11, %14 : vector<8x8x8xf32>
    %16 = math.exp %15 : vector<8x8x8xf32>
    %cst_15 = arith.constant dense<0.000000e+00> : vector<8x8xf32>
    %17 = vector.multi_reduction <add>, %16, %cst_15 [2] : vector<8x8x8xf32> to vector<8x8xf32>
    %18 = vector.shape_cast %17 : vector<8x8xf32> to vector<8x8x1xf32>
    %19 = vector.broadcast %18 : vector<8x8x1xf32> to vector<8x8x8xf32>
    %20 = arith.divf %16, %19 : vector<8x8x8xf32>
    "tpu.trace_start"() <{level = 10 : i32, message = "bqk,bkd->bqd"}> : () -> ()
    %cst_16 = arith.constant dense<0.000000e+00> : vector<8x8x8xf32>
    %21 = tpu.matmul %20, %2, %cst_16 {dimension_numbers = #tpu.dot_dimension_numbers<[2], [1], [1], [2], [0, 0, 0, 1, 1, 2], [0], [0]>} : vector<8x8x8xf32>, vector<8x8x8xf32>, vector<8x8x8xf32> -> vector<8x8x8xf32>
    "tpu.trace_stop"() : () -> ()
    %c0_17 = arith.constant 0 : index
    %c0_18 = arith.constant 0 : index
    %c0_19 = arith.constant 0 : index
    %22 = vector.load %arg4[%c0_17, %c0_18, %c0_19] : memref<8x8x8xf32, #tpu.memory_space<vmem>>, vector<8x8x8xf32>
    tpu.vector_store %arg4[%c0_17, %c0_18, %c0_19], %21 {strides = array<i32>} : memref<8x8x8xf32, #tpu.memory_space<vmem>>, vector<8x8x8xf32>,
    return
  }
}

module attributes {stable_mosaic.version = 11 : i64} {
  func.func @_mid_kernel(%arg0: memref<16x32xf32, #tpu.memory_space<vmem>>, %arg1: memref<16x32xf32, #tpu.memory_space<vmem>>, %arg2: memref<32x32xf32, #tpu.memory_space<vmem>>, %arg3: memref<1x32xf32, #tpu.memory_space<vmem>>, %arg4: memref<1x32xf32, #tpu.memory_space<vmem>>, %arg5: memref<1x32xf32, #tpu.memory_space<vmem>>, %arg6: memref<32x64xf32, #tpu.memory_space<vmem>>, %arg7: memref<1x64xf32, #tpu.memory_space<vmem>>, %arg8: memref<64x32xf32, #tpu.memory_space<vmem>>, %arg9: memref<1x32xf32, #tpu.memory_space<vmem>>, %arg10: memref<1x32xf32, #tpu.memory_space<vmem>>, %arg11: memref<1x32xf32, #tpu.memory_space<vmem>>, %arg12: memref<32x96xf32, #tpu.memory_space<vmem>>, %arg13: memref<1x96xf32, #tpu.memory_space<vmem>>, %arg14: memref<16x32xf32, #tpu.memory_space<vmem>>, %arg15: memref<16x96xf32, #tpu.memory_space<vmem>>) attributes {dimension_semantics = [], scalar_prefetch = 0 : i64, scratch_operands = 0 : i64, tpu.core_type = #tpu.core_type<tc>} {
    %c0 = arith.constant 0 : index
    %c0_0 = arith.constant 0 : index
    %0 = vector.load %arg0[%c0, %c0_0] : memref<16x32xf32, #tpu.memory_space<vmem>>, vector<16x32xf32>
    %c0_1 = arith.constant 0 : index
    %c0_2 = arith.constant 0 : index
    %1 = vector.load %arg1[%c0_1, %c0_2] : memref<16x32xf32, #tpu.memory_space<vmem>>, vector<16x32xf32>
    %c0_3 = arith.constant 0 : index
    %c0_4 = arith.constant 0 : index
    %2 = vector.load %arg2[%c0_3, %c0_4] : memref<32x32xf32, #tpu.memory_space<vmem>>, vector<32x32xf32>
    %c0_5 = arith.constant 0 : index
    %c0_6 = arith.constant 0 : index
    %3 = vector.load %arg3[%c0_5, %c0_6] : memref<1x32xf32, #tpu.memory_space<vmem>>, vector<1x32xf32>
    %c0_7 = arith.constant 0 : index
    %c0_8 = arith.constant 0 : index
    %4 = vector.load %arg4[%c0_7, %c0_8] : memref<1x32xf32, #tpu.memory_space<vmem>>, vector<1x32xf32>
    %c0_9 = arith.constant 0 : index
    %c0_10 = arith.constant 0 : index
    %5 = vector.load %arg5[%c0_9, %c0_10] : memref<1x32xf32, #tpu.memory_space<vmem>>, vector<1x32xf32>
    %c0_11 = arith.constant 0 : index
    %c0_12 = arith.constant 0 : index
    %6 = vector.load %arg6[%c0_11, %c0_12] : memref<32x64xf32, #tpu.memory_space<vmem>>, vector<32x64xf32>
    %c0_13 = arith.constant 0 : index
    %c0_14 = arith.constant 0 : index
    %7 = vector.load %arg7[%c0_13, %c0_14] : memref<1x64xf32, #tpu.memory_space<vmem>>, vector<1x64xf32>
    %c0_15 = arith.constant 0 : index
    %c0_16 = arith.constant 0 : index
    %8 = vector.load %arg8[%c0_15, %c0_16] : memref<64x32xf32, #tpu.memory_space<vmem>>, vector<64x32xf32>
    %c0_17 = arith.constant 0 : index
    %c0_18 = arith.constant 0 : index
    %9 = vector.load %arg9[%c0_17, %c0_18] : memref<1x32xf32, #tpu.memory_space<vmem>>, vector<1x32xf32>
    %c0_19 = arith.constant 0 : index
    %c0_20 = arith.constant 0 : index
    %10 = vector.load %arg10[%c0_19, %c0_20] : memref<1x32xf32, #tpu.memory_space<vmem>>, vector<1x32xf32>
    %c0_21 = arith.constant 0 : index
    %c0_22 = arith.constant 0 : index
    %11 = vector.load %arg11[%c0_21, %c0_22] : memref<1x32xf32, #tpu.memory_space<vmem>>, vector<1x32xf32>
    %cst = arith.constant dense<0.000000e+00> : vector<16x32xf32>
    %12 = tpu.matmul %1, %2, %cst {dimension_numbers = #tpu.dot_dimension_numbers<[1], [0], [0], [1], [0, 0, 1, 1], [], []>} : vector<16x32xf32>, vector<32x32xf32>, vector<16x32xf32> -> vector<16x32xf32>
    %13 = vector.broadcast %3 : vector<1x32xf32> to vector<16x32xf32>
    %14 = arith.addf %12, %13 : vector<16x32xf32>
    %15 = arith.addf %0, %14 : vector<16x32xf32>
    %cst_23 = arith.constant dense<0.000000e+00> : vector<16xf32>
    %16 = vector.multi_reduction <add>, %15, %cst_23 [1] : vector<16x32xf32> to vector<16xf32>
    %17 = vector.shape_cast %16 : vector<16xf32> to vector<16x1xf32>
    %cst_24 = arith.constant 3.200000e+01 : f32
    %18 = vector.broadcast %cst_24 : f32 to vector<16x1xf32>
    %19 = arith.divf %17, %18 : vector<16x1xf32>
    %20 = vector.broadcast %19 : vector<16x1xf32> to vector<16x32xf32>
    %21 = arith.subf %15, %20 : vector<16x32xf32>
    %22 = arith.mulf %21, %21 : vector<16x32xf32>
    %cst_25 = arith.constant dense<0.000000e+00> : vector<16xf32>
    %23 = vector.multi_reduction <add>, %22, %cst_25 [1] : vector<16x32xf32> to vector<16xf32>
    %24 = vector.shape_cast %23 : vector<16xf32> to vector<16x1xf32>
    %cst_26 = arith.constant 3.200000e+01 : f32
    %25 = vector.broadcast %cst_26 : f32 to vector<16x1xf32>
    %26 = arith.divf %24, %25 : vector<16x1xf32>
    %27 = vector.broadcast %19 : vector<16x1xf32> to vector<16x32xf32>
    %28 = arith.subf %15, %27 : vector<16x32xf32>
    %cst_27 = arith.constant 9.99999974E-6 : f32
    %29 = vector.broadcast %cst_27 : f32 to vector<16x1xf32>
    %30 = arith.addf %26, %29 : vector<16x1xf32>
    %31 = math.rsqrt %30 : vector<16x1xf32>
    %32 = vector.broadcast %31 : vector<16x1xf32> to vector<16x32xf32>
    %33 = arith.mulf %28, %32 : vector<16x32xf32>
    %34 = vector.broadcast %4 : vector<1x32xf32> to vector<16x32xf32>
    %35 = arith.mulf %33, %34 : vector<16x32xf32>
    %36 = vector.broadcast %5 : vector<1x32xf32> to vector<16x32xf32>
    %37 = arith.addf %35, %36 : vector<16x32xf32>
    %cst_28 = arith.constant dense<0.000000e+00> : vector<16x64xf32>
    %38 = tpu.matmul %37, %6, %cst_28 {dimension_numbers = #tpu.dot_dimension_numbers<[1], [0], [0], [1], [0, 0, 1, 1], [], []>} : vector<16x32xf32>, vector<32x64xf32>, vector<16x64xf32> -> vector<16x64xf32>
    %39 = vector.broadcast %7 : vector<1x64xf32> to vector<16x64xf32>
    %40 = arith.addf %38, %39 : vector<16x64xf32>
    %cst_29 = arith.constant 0.000000e+00 : f32
    %41 = vector.broadcast %cst_29 : f32 to vector<16x64xf32>
    %42 = arith.maximumf %40, %41 : vector<16x64xf32>
    %cst_30 = arith.constant dense<0.000000e+00> : vector<16x32xf32>
    %43 = tpu.matmul %42, %8, %cst_30 {dimension_numbers = #tpu.dot_dimension_numbers<[1], [0], [0], [1], [0, 0, 1, 1], [], []>} : vector<16x64xf32>, vector<64x32xf32>, vector<16x32xf32> -> vector<16x32xf32>
    %44 = vector.broadcast %9 : vector<1x32xf32> to vector<16x32xf32>
    %45 = arith.addf %43, %44 : vector<16x32xf32>
    %46 = arith.addf %37, %45 : vector<16x32xf32>
    %cst_31 = arith.constant dense<0.000000e+00> : vector<16xf32>
    %47 = vector.multi_reduction <add>, %46, %cst_31 [1] : vector<16x32xf32> to vector<16xf32>
    %48 = vector.shape_cast %47 : vector<16xf32> to vector<16x1xf32>
    %cst_32 = arith.constant 3.200000e+01 : f32
    %49 = vector.broadcast %cst_32 : f32 to vector<16x1xf32>
    %50 = arith.divf %48, %49 : vector<16x1xf32>
    %51 = vector.broadcast %50 : vector<16x1xf32> to vector<16x32xf32>
    %52 = arith.subf %46, %51 : vector<16x32xf32>
    %53 = arith.mulf %52, %52 : vector<16x32xf32>
    %cst_33 = arith.constant dense<0.000000e+00> : vector<16xf32>
    %54 = vector.multi_reduction <add>, %53, %cst_33 [1] : vector<16x32xf32> to vector<16xf32>
    %55 = vector.shape_cast %54 : vector<16xf32> to vector<16x1xf32>
    %cst_34 = arith.constant 3.200000e+01 : f32
    %56 = vector.broadcast %cst_34 : f32 to vector<16x1xf32>
    %57 = arith.divf %55, %56 : vector<16x1xf32>
    %58 = vector.broadcast %50 : vector<16x1xf32> to vector<16x32xf32>
    %59 = arith.subf %46, %58 : vector<16x32xf32>
    %cst_35 = arith.constant 9.99999974E-6 : f32
    %60 = vector.broadcast %cst_35 : f32 to vector<16x1xf32>
    %61 = arith.addf %57, %60 : vector<16x1xf32>
    %62 = math.rsqrt %61 : vector<16x1xf32>
    %63 = vector.broadcast %62 : vector<16x1xf32> to vector<16x32xf32>
    %64 = arith.mulf %59, %63 : vector<16x32xf32>
    %65 = vector.broadcast %10 : vector<1x32xf32> to vector<16x32xf32>
    %66 = arith.mulf %64, %65 : vector<16x32xf32>
    %67 = vector.broadcast %11 : vector<1x32xf32> to vector<16x32xf32>
    %68 = arith.addf %66, %67 : vector<16x32xf32>
    %c0_36 = arith.constant 0 : index
    %c0_37 = arith.constant 0 : index
    %69 = vector.load %arg14[%c0_36, %c0_37] : memref<16x32xf32, #tpu.memory_space<vmem>>, vector<16x32xf32>
    tpu.vector_store %arg14[%c0_36, %c0_37], %68 {strides = array<i32>} : memref<16x32xf32, #tpu.memory_space<vmem>>, vector<16x32xf32>,
    %c0_38 = arith.constant 0 : index
    %c0_39 = arith.constant 0 : index
    %70 = vector.load %arg12[%c0_38, %c0_39] : memref<32x96xf32, #tpu.memory_space<vmem>>, vector<32x96xf32>
    %cst_40 = arith.constant dense<0.000000e+00> : vector<16x96xf32>
    %71 = tpu.matmul %68, %70, %cst_40 {dimension_numbers = #tpu.dot_dimension_numbers<[1], [0], [0], [1], [0, 0, 1, 1], [], []>} : vector<16x32xf32>, vector<32x96xf32>, vector<16x96xf32> -> vector<16x96xf32>
    %c0_41 = arith.constant 0 : index
    %c0_42 = arith.constant 0 : index
    %72 = vector.load %arg13[%c0_41, %c0_42] : memref<1x96xf32, #tpu.memory_space<vmem>>, vector<1x96xf32>
    %73 = vector.broadcast %72 : vector<1x96xf32> to vector<16x96xf32>
    %74 = arith.addf %71, %73 : vector<16x96xf32>
    %c0_43 = arith.constant 0 : index
    %c0_44 = arith.constant 0 : index
    %75 = vector.load %arg15[%c0_43, %c0_44] : memref<16x96xf32, #tpu.memory_space<vmem>>, vector<16x96xf32>
    tpu.vector_store %arg15[%c0_43, %c0_44], %74 {strides = array<i32>} : memref<16x96xf32, #tpu.memory_space<vmem>>, vector<16x96xf32>,
    return
  }
}

module attributes {stable_mosaic.version = 11 : i64} {
  func.func @_final_kernel(%arg0: memref<16x32xf32, #tpu.memory_space<vmem>>, %arg1: memref<16x32xf32, #tpu.memory_space<vmem>>, %arg2: memref<32x32xf32, #tpu.memory_space<vmem>>, %arg3: memref<1x32xf32, #tpu.memory_space<vmem>>, %arg4: memref<1x32xf32, #tpu.memory_space<vmem>>, %arg5: memref<1x32xf32, #tpu.memory_space<vmem>>, %arg6: memref<32x64xf32, #tpu.memory_space<vmem>>, %arg7: memref<1x64xf32, #tpu.memory_space<vmem>>, %arg8: memref<64x32xf32, #tpu.memory_space<vmem>>, %arg9: memref<1x32xf32, #tpu.memory_space<vmem>>, %arg10: memref<1x32xf32, #tpu.memory_space<vmem>>, %arg11: memref<1x32xf32, #tpu.memory_space<vmem>>, %arg12: memref<32x32xf32, #tpu.memory_space<vmem>>, %arg13: memref<1x32xf32, #tpu.memory_space<vmem>>, %arg14: memref<32x32xf32, #tpu.memory_space<vmem>>, %arg15: memref<1x32xf32, #tpu.memory_space<vmem>>, %arg16: memref<32x128xf32, #tpu.memory_space<vmem>>, %arg17: memref<1x128xf32, #tpu.memory_space<vmem>>, %arg18: memref<32x64xf32, #tpu.memory_space<vmem>>, %arg19: memref<1x64xf32, #tpu.memory_space<vmem>>, %arg20: memref<64x32xf32, #tpu.memory_space<vmem>>, %arg21: memref<1x32xf32, #tpu.memory_space<vmem>>, %arg22: memref<32x160xf32, #tpu.memory_space<vmem>>, %arg23: memref<128x160xf32, #tpu.memory_space<vmem>>, %arg24: memref<1x160xf32, #tpu.memory_space<vmem>>, %arg25: memref<160x128xf32, #tpu.memory_space<vmem>>, %arg26: memref<1x128xf32, #tpu.memory_space<vmem>>, %arg27: memref<128x128xf32, #tpu.memory_space<vmem>>, %arg28: memref<1x128xf32, #tpu.memory_space<vmem>>, %arg29: memref<2x8xf32, #tpu.memory_space<vmem>>, %arg30: memref<2x1xf32, #tpu.memory_space<vmem>>, %arg31: memref<2x8xf32, #tpu.memory_space<vmem>>, %arg32: memref<2x1xf32, #tpu.memory_space<vmem>>, %arg33: memref<16x128xf32, #tpu.memory_space<vmem>>, %arg34: memref<16x128xf32, #tpu.memory_space<vmem>>, %arg35: memref<2x2x32xf32, #tpu.memory_space<vmem>>, %arg36: memref<2x2x32xf32, #tpu.memory_space<vmem>>) attributes {dimension_semantics = [], scalar_prefetch = 0 : i64, scratch_operands = 0 : i64, tpu.core_type = #tpu.core_type<tc>} {
    %c0 = arith.constant 0 : index
    %c0_0 = arith.constant 0 : index
    %0 = vector.load %arg0[%c0, %c0_0] : memref<16x32xf32, #tpu.memory_space<vmem>>, vector<16x32xf32>
    %c0_1 = arith.constant 0 : index
    %c0_2 = arith.constant 0 : index
    %1 = vector.load %arg1[%c0_1, %c0_2] : memref<16x32xf32, #tpu.memory_space<vmem>>, vector<16x32xf32>
    %c0_3 = arith.constant 0 : index
    %c0_4 = arith.constant 0 : index
    %2 = vector.load %arg2[%c0_3, %c0_4] : memref<32x32xf32, #tpu.memory_space<vmem>>, vector<32x32xf32>
    %c0_5 = arith.constant 0 : index
    %c0_6 = arith.constant 0 : index
    %3 = vector.load %arg3[%c0_5, %c0_6] : memref<1x32xf32, #tpu.memory_space<vmem>>, vector<1x32xf32>
    %c0_7 = arith.constant 0 : index
    %c0_8 = arith.constant 0 : index
    %4 = vector.load %arg4[%c0_7, %c0_8] : memref<1x32xf32, #tpu.memory_space<vmem>>, vector<1x32xf32>
    %c0_9 = arith.constant 0 : index
    %c0_10 = arith.constant 0 : index
    %5 = vector.load %arg5[%c0_9, %c0_10] : memref<1x32xf32, #tpu.memory_space<vmem>>, vector<1x32xf32>
    %c0_11 = arith.constant 0 : index
    %c0_12 = arith.constant 0 : index
    %6 = vector.load %arg6[%c0_11, %c0_12] : memref<32x64xf32, #tpu.memory_space<vmem>>, vector<32x64xf32>
    %c0_13 = arith.constant 0 : index
    %c0_14 = arith.constant 0 : index
    %7 = vector.load %arg7[%c0_13, %c0_14] : memref<1x64xf32, #tpu.memory_space<vmem>>, vector<1x64xf32>
    %c0_15 = arith.constant 0 : index
    %c0_16 = arith.constant 0 : index
    %8 = vector.load %arg8[%c0_15, %c0_16] : memref<64x32xf32, #tpu.memory_space<vmem>>, vector<64x32xf32>
    %c0_17 = arith.constant 0 : index
    %c0_18 = arith.constant 0 : index
    %9 = vector.load %arg9[%c0_17, %c0_18] : memref<1x32xf32, #tpu.memory_space<vmem>>, vector<1x32xf32>
    %c0_19 = arith.constant 0 : index
    %c0_20 = arith.constant 0 : index
    %10 = vector.load %arg10[%c0_19, %c0_20] : memref<1x32xf32, #tpu.memory_space<vmem>>, vector<1x32xf32>
    %c0_21 = arith.constant 0 : index
    %c0_22 = arith.constant 0 : index
    %11 = vector.load %arg11[%c0_21, %c0_22] : memref<1x32xf32, #tpu.memory_space<vmem>>, vector<1x32xf32>
    %cst = arith.constant dense<0.000000e+00> : vector<16x32xf32>
    %12 = tpu.matmul %1, %2, %cst {dimension_numbers = #tpu.dot_dimension_numbers<[1], [0], [0], [1], [0, 0, 1, 1], [], []>} : vector<16x32xf32>, vector<32x32xf32>, vector<16x32xf32> -> vector<16x32xf32>
    %13 = vector.broadcast %3 : vector<1x32xf32> to vector<16x32xf32>
    %14 = arith.addf %12, %13 : vector<16x32xf32>
    %15 = arith.addf %0, %14 : vector<16x32xf32>
    %cst_23 = arith.constant dense<0.000000e+00> : vector<16xf32>
    %16 = vector.multi_reduction <add>, %15, %cst_23 [1] : vector<16x32xf32> to vector<16xf32>
    %17 = vector.shape_cast %16 : vector<16xf32> to vector<16x1xf32>
    %cst_24 = arith.constant 3.200000e+01 : f32
    %18 = vector.broadcast %cst_24 : f32 to vector<16x1xf32>
    %19 = arith.divf %17, %18 : vector<16x1xf32>
    %20 = vector.broadcast %19 : vector<16x1xf32> to vector<16x32xf32>
    %21 = arith.subf %15, %20 : vector<16x32xf32>
    %22 = arith.mulf %21, %21 : vector<16x32xf32>
    %cst_25 = arith.constant dense<0.000000e+00> : vector<16xf32>
    %23 = vector.multi_reduction <add>, %22, %cst_25 [1] : vector<16x32xf32> to vector<16xf32>
    %24 = vector.shape_cast %23 : vector<16xf32> to vector<16x1xf32>
    %cst_26 = arith.constant 3.200000e+01 : f32
    %25 = vector.broadcast %cst_26 : f32 to vector<16x1xf32>
    %26 = arith.divf %24, %25 : vector<16x1xf32>
    %27 = vector.broadcast %19 : vector<16x1xf32> to vector<16x32xf32>
    %28 = arith.subf %15, %27 : vector<16x32xf32>
    %cst_27 = arith.constant 9.99999974E-6 : f32
    %29 = vector.broadcast %cst_27 : f32 to vector<16x1xf32>
    %30 = arith.addf %26, %29 : vector<16x1xf32>
    %31 = math.rsqrt %30 : vector<16x1xf32>
    %32 = vector.broadcast %31 : vector<16x1xf32> to vector<16x32xf32>
    %33 = arith.mulf %28, %32 : vector<16x32xf32>
    %34 = vector.broadcast %4 : vector<1x32xf32> to vector<16x32xf32>
    %35 = arith.mulf %33, %34 : vector<16x32xf32>
    %36 = vector.broadcast %5 : vector<1x32xf32> to vector<16x32xf32>
    %37 = arith.addf %35, %36 : vector<16x32xf32>
    %cst_28 = arith.constant dense<0.000000e+00> : vector<16x64xf32>
    %38 = tpu.matmul %37, %6, %cst_28 {dimension_numbers = #tpu.dot_dimension_numbers<[1], [0], [0], [1], [0, 0, 1, 1], [], []>} : vector<16x32xf32>, vector<32x64xf32>, vector<16x64xf32> -> vector<16x64xf32>
    %39 = vector.broadcast %7 : vector<1x64xf32> to vector<16x64xf32>
    %40 = arith.addf %38, %39 : vector<16x64xf32>
    %cst_29 = arith.constant 0.000000e+00 : f32
    %41 = vector.broadcast %cst_29 : f32 to vector<16x64xf32>
    %42 = arith.maximumf %40, %41 : vector<16x64xf32>
    %cst_30 = arith.constant dense<0.000000e+00> : vector<16x32xf32>
    %43 = tpu.matmul %42, %8, %cst_30 {dimension_numbers = #tpu.dot_dimension_numbers<[1], [0], [0], [1], [0, 0, 1, 1], [], []>} : vector<16x64xf32>, vector<64x32xf32>, vector<16x32xf32> -> vector<16x32xf32>
    %44 = vector.broadcast %9 : vector<1x32xf32> to vector<16x32xf32>
    %45 = arith.addf %43, %44 : vector<16x32xf32>
    %46 = arith.addf %37, %45 : vector<16x32xf32>
    %cst_31 = arith.constant dense<0.000000e+00> : vector<16xf32>
    %47 = vector.multi_reduction <add>, %46, %cst_31 [1] : vector<16x32xf32> to vector<16xf32>
    %48 = vector.shape_cast %47 : vector<16xf32> to vector<16x1xf32>
    %cst_32 = arith.constant 3.200000e+01 : f32
    %49 = vector.broadcast %cst_32 : f32 to vector<16x1xf32>
    %50 = arith.divf %48, %49 : vector<16x1xf32>
    %51 = vector.broadcast %50 : vector<16x1xf32> to vector<16x32xf32>
    %52 = arith.subf %46, %51 : vector<16x32xf32>
    %53 = arith.mulf %52, %52 : vector<16x32xf32>
    %cst_33 = arith.constant dense<0.000000e+00> : vector<16xf32>
    %54 = vector.multi_reduction <add>, %53, %cst_33 [1] : vector<16x32xf32> to vector<16xf32>
    %55 = vector.shape_cast %54 : vector<16xf32> to vector<16x1xf32>
    %cst_34 = arith.constant 3.200000e+01 : f32
    %56 = vector.broadcast %cst_34 : f32 to vector<16x1xf32>
    %57 = arith.divf %55, %56 : vector<16x1xf32>
    %58 = vector.broadcast %50 : vector<16x1xf32> to vector<16x32xf32>
    %59 = arith.subf %46, %58 : vector<16x32xf32>
    %cst_35 = arith.constant 9.99999974E-6 : f32
    %60 = vector.broadcast %cst_35 : f32 to vector<16x1xf32>
    %61 = arith.addf %57, %60 : vector<16x1xf32>
    %62 = math.rsqrt %61 : vector<16x1xf32>
    %63 = vector.broadcast %62 : vector<16x1xf32> to vector<16x32xf32>
    %64 = arith.mulf %59, %63 : vector<16x32xf32>
    %65 = vector.broadcast %10 : vector<1x32xf32> to vector<16x32xf32>
    %66 = arith.mulf %64, %65 : vector<16x32xf32>
    %67 = vector.broadcast %11 : vector<1x32xf32> to vector<16x32xf32>
    %68 = arith.addf %66, %67 : vector<16x32xf32>
    %c0_36 = arith.constant 0 : index
    %c0_37 = arith.constant 0 : index
    %69 = vector.load %arg12[%c0_36, %c0_37] : memref<32x32xf32, #tpu.memory_space<vmem>>, vector<32x32xf32>
    %cst_38 = arith.constant dense<0.000000e+00> : vector<16x32xf32>
    %70 = tpu.matmul %68, %69, %cst_38 {dimension_numbers = #tpu.dot_dimension_numbers<[1], [0], [0], [1], [0, 0, 1, 1], [], []>} : vector<16x32xf32>, vector<32x32xf32>, vector<16x32xf32> -> vector<16x32xf32>
    %c0_39 = arith.constant 0 : index
    %c0_40 = arith.constant 0 : index
    %71 = vector.load %arg13[%c0_39, %c0_40] : memref<1x32xf32, #tpu.memory_space<vmem>>, vector<1x32xf32>
    %72 = vector.broadcast %71 : vector<1x32xf32> to vector<16x32xf32>
    %73 = arith.addf %70, %72 : vector<16x32xf32>
    %cst_41 = arith.constant 0.000000e+00 : f32
    %74 = vector.broadcast %cst_41 : f32 to vector<16x32xf32>
    %75 = arith.cmpf ogt, %73, %74 : vector<16x32xf32>
    %76 = math.exp %73 : vector<16x32xf32>
    %cst_42 = arith.constant 1.000000e+00 : f32
    %77 = vector.broadcast %cst_42 : f32 to vector<16x32xf32>
    %78 = arith.subf %76, %77 : vector<16x32xf32>
    %cst_43 = arith.constant 1.67326319 : f32
    %79 = vector.broadcast %cst_43 : f32 to vector<16x32xf32>
    %80 = arith.mulf %79, %78 : vector<16x32xf32>
    %81 = arith.select %75, %73, %80 : vector<16x32xi1>, vector<16x32xf32>
    %cst_44 = arith.constant 1.05070102 : f32
    %82 = vector.broadcast %cst_44 : f32 to vector<16x32xf32>
    %83 = arith.mulf %82, %81 : vector<16x32xf32>
    %c0_45 = arith.constant 0 : index
    %c0_46 = arith.constant 0 : index
    %84 = vector.load %arg14[%c0_45, %c0_46] : memref<32x32xf32, #tpu.memory_space<vmem>>, vector<32x32xf32>
    %cst_47 = arith.constant dense<0.000000e+00> : vector<16x32xf32>
    %85 = tpu.matmul %83, %84, %cst_47 {dimension_numbers = #tpu.dot_dimension_numbers<[1], [0], [0], [1], [0, 0, 1, 1], [], []>} : vector<16x32xf32>, vector<32x32xf32>, vector<16x32xf32> -> vector<16x32xf32>
    %c0_48 = arith.constant 0 : index
    %c0_49 = arith.constant 0 : index
    %86 = vector.load %arg15[%c0_48, %c0_49] : memref<1x32xf32, #tpu.memory_space<vmem>>, vector<1x32xf32>
    %87 = vector.broadcast %86 : vector<1x32xf32> to vector<16x32xf32>
    %88 = arith.addf %85, %87 : vector<16x32xf32>
    %cst_50 = arith.constant 0.000000e+00 : f32
    %89 = vector.broadcast %cst_50 : f32 to vector<16x32xf32>
    %90 = arith.cmpf ogt, %88, %89 : vector<16x32xf32>
    %91 = math.exp %88 : vector<16x32xf32>
    %cst_51 = arith.constant 1.000000e+00 : f32
    %92 = vector.broadcast %cst_51 : f32 to vector<16x32xf32>
    %93 = arith.subf %91, %92 : vector<16x32xf32>
    %cst_52 = arith.constant 1.67326319 : f32
    %94 = vector.broadcast %cst_52 : f32 to vector<16x32xf32>
    %95 = arith.mulf %94, %93 : vector<16x32xf32>
    %96 = arith.select %90, %88, %95 : vector<16x32xi1>, vector<16x32xf32>
    %cst_53 = arith.constant 1.05070102 : f32
    %97 = vector.broadcast %cst_53 : f32 to vector<16x32xf32>
    %98 = arith.mulf %97, %96 : vector<16x32xf32>
    %c0_54 = arith.constant 0 : index
    %c0_55 = arith.constant 0 : index
    %99 = vector.load %arg16[%c0_54, %c0_55] : memref<32x128xf32, #tpu.memory_space<vmem>>, vector<32x128xf32>
    %cst_56 = arith.constant dense<0.000000e+00> : vector<16x128xf32>
    %100 = tpu.matmul %68, %99, %cst_56 {dimension_numbers = #tpu.dot_dimension_numbers<[1], [0], [0], [1], [0, 0, 1, 1], [], []>} : vector<16x32xf32>, vector<32x128xf32>, vector<16x128xf32> -> vector<16x128xf32>
    %c0_57 = arith.constant 0 : index
    %c0_58 = arith.constant 0 : index
    %101 = vector.load %arg17[%c0_57, %c0_58] : memref<1x128xf32, #tpu.memory_space<vmem>>, vector<1x128xf32>
    %102 = vector.broadcast %101 : vector<1x128xf32> to vector<16x128xf32>
    %103 = arith.addf %100, %102 : vector<16x128xf32>
    %c0_59 = arith.constant 0 : index
    %c0_60 = arith.constant 0 : index
    %104 = vector.load %arg22[%c0_59, %c0_60] : memref<32x160xf32, #tpu.memory_space<vmem>>, vector<32x160xf32>
    %cst_61 = arith.constant dense<0.000000e+00> : vector<16x160xf32>
    %105 = tpu.matmul %98, %104, %cst_61 {dimension_numbers = #tpu.dot_dimension_numbers<[1], [0], [0], [1], [0, 0, 1, 1], [], []>} : vector<16x32xf32>, vector<32x160xf32>, vector<16x160xf32> -> vector<16x160xf32>
    %c0_62 = arith.constant 0 : index
    %c0_63 = arith.constant 0 : index
    %106 = vector.load %arg23[%c0_62, %c0_63] : memref<128x160xf32, #tpu.memory_space<vmem>>, vector<128x160xf32>
    %cst_64 = arith.constant dense<0.000000e+00> : vector<16x160xf32>
    %107 = tpu.matmul %103, %106, %cst_64 {dimension_numbers = #tpu.dot_dimension_numbers<[1], [0], [0], [1], [0, 0, 1, 1], [], []>} : vector<16x128xf32>, vector<128x160xf32>, vector<16x160xf32> -> vector<16x160xf32>
    %108 = arith.addf %105, %107 : vector<16x160xf32>
    %c0_65 = arith.constant 0 : index
    %c0_66 = arith.constant 0 : index
    %109 = vector.load %arg24[%c0_65, %c0_66] : memref<1x160xf32, #tpu.memory_space<vmem>>, vector<1x160xf32>
    %110 = vector.broadcast %109 : vector<1x160xf32> to vector<16x160xf32>
    %111 = arith.addf %108, %110 : vector<16x160xf32>
    %cst_67 = arith.constant 0.000000e+00 : f32
    %112 = vector.broadcast %cst_67 : f32 to vector<16x160xf32>
    %113 = arith.cmpf ogt, %111, %112 : vector<16x160xf32>
    %114 = math.exp %111 : vector<16x160xf32>
    %cst_68 = arith.constant 1.000000e+00 : f32
    %115 = vector.broadcast %cst_68 : f32 to vector<16x160xf32>
    %116 = arith.subf %114, %115 : vector<16x160xf32>
    %cst_69 = arith.constant 1.67326319 : f32
    %117 = vector.broadcast %cst_69 : f32 to vector<16x160xf32>
    %118 = arith.mulf %117, %116 : vector<16x160xf32>
    %119 = arith.select %113, %111, %118 : vector<16x160xi1>, vector<16x160xf32>
    %cst_70 = arith.constant 1.05070102 : f32
    %120 = vector.broadcast %cst_70 : f32 to vector<16x160xf32>
    %121 = arith.mulf %120, %119 : vector<16x160xf32>
    %c0_71 = arith.constant 0 : index
    %c0_72 = arith.constant 0 : index
    %122 = vector.load %arg25[%c0_71, %c0_72] : memref<160x128xf32, #tpu.memory_space<vmem>>, vector<160x128xf32>
    %cst_73 = arith.constant dense<0.000000e+00> : vector<16x128xf32>
    %123 = tpu.matmul %121, %122, %cst_73 {dimension_numbers = #tpu.dot_dimension_numbers<[1], [0], [0], [1], [0, 0, 1, 1], [], []>} : vector<16x160xf32>, vector<160x128xf32>, vector<16x128xf32> -> vector<16x128xf32>
    %c0_74 = arith.constant 0 : index
    %c0_75 = arith.constant 0 : index
    %124 = vector.load %arg26[%c0_74, %c0_75] : memref<1x128xf32, #tpu.memory_space<vmem>>, vector<1x128xf32>
    %125 = vector.broadcast %124 : vector<1x128xf32> to vector<16x128xf32>
    %126 = arith.addf %123, %125 : vector<16x128xf32>
    %cst_76 = arith.constant 0.000000e+00 : f32
    %127 = vector.broadcast %cst_76 : f32 to vector<16x128xf32>
    %128 = arith.cmpf ogt, %126, %127 : vector<16x128xf32>
    %129 = math.exp %126 : vector<16x128xf32>
    %cst_77 = arith.constant 1.000000e+00 : f32
    %130 = vector.broadcast %cst_77 : f32 to vector<16x128xf32>
    %131 = arith.subf %129, %130 : vector<16x128xf32>
    %cst_78 = arith.constant 1.67326319 : f32
    %132 = vector.broadcast %cst_78 : f32 to vector<16x128xf32>
    %133 = arith.mulf %132, %131 : vector<16x128xf32>
    %134 = arith.select %128, %126, %133 : vector<16x128xi1>, vector<16x128xf32>
    %cst_79 = arith.constant 1.05070102 : f32
    %135 = vector.broadcast %cst_79 : f32 to vector<16x128xf32>
    %136 = arith.mulf %135, %134 : vector<16x128xf32>
    %c0_80 = arith.constant 0 : index
    %c0_81 = arith.constant 0 : index
    %137 = vector.load %arg33[%c0_80, %c0_81] : memref<16x128xf32, #tpu.memory_space<vmem>>, vector<16x128xf32>
    tpu.vector_store %arg33[%c0_80, %c0_81], %136 {strides = array<i32>} : memref<16x128xf32, #tpu.memory_space<vmem>>, vector<16x128xf32>,
    %c0_82 = arith.constant 0 : index
    %c0_83 = arith.constant 0 : index
    %138 = vector.load %arg27[%c0_82, %c0_83] : memref<128x128xf32, #tpu.memory_space<vmem>>, vector<128x128xf32>
    %cst_84 = arith.constant dense<0.000000e+00> : vector<16x128xf32>
    %139 = tpu.matmul %136, %138, %cst_84 {dimension_numbers = #tpu.dot_dimension_numbers<[1], [0], [0], [1], [0, 0, 1, 1], [], []>} : vector<16x128xf32>, vector<128x128xf32>, vector<16x128xf32> -> vector<16x128xf32>
    %c0_85 = arith.constant 0 : index
    %c0_86 = arith.constant 0 : index
    %140 = vector.load %arg28[%c0_85, %c0_86] : memref<1x128xf32, #tpu.memory_space<vmem>>, vector<1x128xf32>
    %141 = vector.broadcast %140 : vector<1x128xf32> to vector<16x128xf32>
    %142 = arith.addf %139, %141 : vector<16x128xf32>
    %c0_87 = arith.constant 0 : index
    %c0_88 = arith.constant 0 : index
    %143 = vector.load %arg34[%c0_87, %c0_88] : memref<16x128xf32, #tpu.memory_space<vmem>>, vector<16x128xf32>
    tpu.vector_store %arg34[%c0_87, %c0_88], %142 {strides = array<i32>} : memref<16x128xf32, #tpu.memory_space<vmem>>, vector<16x128xf32>,
    %c0_89 = arith.constant 0 : index
    %c0_90 = arith.constant 0 : index
    %144 = vector.load %arg18[%c0_89, %c0_90] : memref<32x64xf32, #tpu.memory_space<vmem>>, vector<32x64xf32>
    %cst_91 = arith.constant dense<0.000000e+00> : vector<16x64xf32>
    %145 = tpu.matmul %68, %144, %cst_91 {dimension_numbers = #tpu.dot_dimension_numbers<[1], [0], [0], [1], [0, 0, 1, 1], [], []>} : vector<16x32xf32>, vector<32x64xf32>, vector<16x64xf32> -> vector<16x64xf32>
    %c0_92 = arith.constant 0 : index
    %c0_93 = arith.constant 0 : index
    %146 = vector.load %arg19[%c0_92, %c0_93] : memref<1x64xf32, #tpu.memory_space<vmem>>, vector<1x64xf32>
    %147 = vector.broadcast %146 : vector<1x64xf32> to vector<16x64xf32>
    %148 = arith.addf %145, %147 : vector<16x64xf32>
    %c0_94 = arith.constant 0 : index
    %c0_95 = arith.constant 0 : index
    %149 = vector.load %arg20[%c0_94, %c0_95] : memref<64x32xf32, #tpu.memory_space<vmem>>, vector<64x32xf32>
    %cst_96 = arith.constant dense<0.000000e+00> : vector<16x32xf32>
    %150 = tpu.matmul %148, %149, %cst_96 {dimension_numbers = #tpu.dot_dimension_numbers<[1], [0], [0], [1], [0, 0, 1, 1], [], []>} : vector<16x64xf32>, vector<64x32xf32>, vector<16x32xf32> -> vector<16x32xf32>
    %c0_97 = arith.constant 0 : index
    %c0_98 = arith.constant 0 : index
    %151 = vector.load %arg21[%c0_97, %c0_98] : memref<1x32xf32, #tpu.memory_space<vmem>>, vector<1x32xf32>
    %152 = vector.broadcast %151 : vector<1x32xf32> to vector<16x32xf32>
    %153 = arith.addf %150, %152 : vector<16x32xf32>
    %154 = vector.extract_strided_slice %68 {offsets = [0, 0], sizes = [8, 32], strides = [1, 1]} : vector<16x32xf32> to vector<8x32xf32>
    %155 = vector.extract_strided_slice %153 {offsets = [0, 0], sizes = [8, 32], strides = [1, 1]} : vector<16x32xf32> to vector<8x32xf32>
    %c0_99 = arith.constant 0 : index
    %c0_100 = arith.constant 0 : index
    %156 = vector.load %arg29[%c0_99, %c0_100] : memref<2x8xf32, #tpu.memory_space<vmem>>, vector<2x8xf32>
    %cst_101 = arith.constant dense<0.000000e+00> : vector<2x32xf32>
    %157 = tpu.matmul %156, %154, %cst_101 {dimension_numbers = #tpu.dot_dimension_numbers<[1], [0], [0], [1], [0, 0, 1, 1], [], []>} : vector<2x8xf32>, vector<8x32xf32>, vector<2x32xf32> -> vector<2x32xf32>
    %c0_102 = arith.constant 0 : index
    %c0_103 = arith.constant 0 : index
    %158 = vector.load %arg30[%c0_102, %c0_103] : memref<2x1xf32, #tpu.memory_space<vmem>>, vector<2x1xf32>
    %159 = vector.broadcast %158 : vector<2x1xf32> to vector<2x32xf32>
    %160 = arith.addf %157, %159 : vector<2x32xf32>
    %c0_104 = arith.constant 0 : index
    %c0_105 = arith.constant 0 : index
    %c0_106 = arith.constant 0 : index
    %161 = vector.load %arg35[%c0_104, %c0_105, %c0_106] : memref<2x2x32xf32, #tpu.memory_space<vmem>>, vector<1x2x32xf32>
    %162 = vector.shape_cast %161 : vector<1x2x32xf32> to vector<2x32xf32>
    %163 = vector.shape_cast %160 : vector<2x32xf32> to vector<1x2x32xf32>
    tpu.vector_store %arg35[%c0_104, %c0_105, %c0_106], %163 {strides = array<i32>} : memref<2x2x32xf32, #tpu.memory_space<vmem>>, vector<1x2x32xf32>,
    %c0_107 = arith.constant 0 : index
    %c0_108 = arith.constant 0 : index
    %164 = vector.load %arg31[%c0_107, %c0_108] : memref<2x8xf32, #tpu.memory_space<vmem>>, vector<2x8xf32>
    %cst_109 = arith.constant dense<0.000000e+00> : vector<2x32xf32>
    %165 = tpu.matmul %164, %155, %cst_109 {dimension_numbers = #tpu.dot_dimension_numbers<[1], [0], [0], [1], [0, 0, 1, 1], [], []>} : vector<2x8xf32>, vector<8x32xf32>, vector<2x32xf32> -> vector<2x32xf32>
    %c0_110 = arith.constant 0 : index
    %c0_111 = arith.constant 0 : index
    %166 = vector.load %arg32[%c0_110, %c0_111] : memref<2x1xf32, #tpu.memory_space<vmem>>, vector<2x1xf32>
    %167 = vector.broadcast %166 : vector<2x1xf32> to vector<2x32xf32>
    %168 = arith.addf %165, %167 : vector<2x32xf32>
    %c0_112 = arith.constant 0 : index
    %c0_113 = arith.constant 0 : index
    %c0_114 = arith.constant 0 : index
    %169 = vector.load %arg36[%c0_112, %c0_113, %c0_114] : memref<2x2x32xf32, #tpu.memory_space<vmem>>, vector<1x2x32xf32>
    %170 = vector.shape_cast %169 : vector<1x2x32xf32> to vector<2x32xf32>
    %171 = vector.shape_cast %168 : vector<2x32xf32> to vector<1x2x32xf32>
    tpu.vector_store %arg36[%c0_112, %c0_113, %c0_114], %171 {strides = array<i32>} : memref<2x2x32xf32, #tpu.memory_space<vmem>>, vector<1x2x32xf32>,
    %172 = vector.extract_strided_slice %68 {offsets = [8, 0], sizes = [8, 32], strides = [1, 1]} : vector<16x32xf32> to vector<8x32xf32>
    %173 = vector.extract_strided_slice %153 {offsets = [8, 0], sizes = [8, 32], strides = [1, 1]} : vector<16x32xf32> to vector<8x32xf32>
    %c0_115 = arith.constant 0 : index
    %c0_116 = arith.constant 0 : index
    %174 = vector.load %arg29[%c0_115, %c0_116] : memref<2x8xf32, #tpu.memory_space<vmem>>, vector<2x8xf32>
    %cst_117 = arith.constant dense<0.000000e+00> : vector<2x32xf32>
    %175 = tpu.matmul %174, %172, %cst_117 {dimension_numbers = #tpu.dot_dimension_numbers<[1], [0], [0], [1], [0, 0, 1, 1], [], []>} : vector<2x8xf32>, vector<8x32xf32>, vector<2x32xf32> -> vector<2x32xf32>
    %c0_118 = arith.constant 0 : index
    %c0_119 = arith.constant 0 : index
    %176 = vector.load %arg30[%c0_118, %c0_119] : memref<2x1xf32, #tpu.memory_space<vmem>>, vector<2x1xf32>
    %177 = vector.broadcast %176 : vector<2x1xf32> to vector<2x32xf32>
    %178 = arith.addf %175, %177 : vector<2x32xf32>
    %c1 = arith.constant 1 : index
    %c0_120 = arith.constant 0 : index
    %c0_121 = arith.constant 0 : index
    %179 = vector.load %arg35[%c1, %c0_120, %c0_121] : memref<2x2x32xf32, #tpu.memory_space<vmem>>, vector<1x2x32xf32>
    %180 = vector.shape_cast %179 : vector<1x2x32xf32> to vector<2x32xf32>
    %181 = vector.shape_cast %178 : vector<2x32xf32> to vector<1x2x32xf32>
    tpu.vector_store %arg35[%c1, %c0_120, %c0_121], %181 {strides = array<i32>} : memref<2x2x32xf32, #tpu.memory_space<vmem>>, vector<1x2x32xf32>,
    %c0_122 = arith.constant 0 : index
    %c0_123 = arith.constant 0 : index
    %182 = vector.load %arg31[%c0_122, %c0_123] : memref<2x8xf32, #tpu.memory_space<vmem>>, vector<2x8xf32>
    %cst_124 = arith.constant dense<0.000000e+00> : vector<2x32xf32>
    %183 = tpu.matmul %182, %173, %cst_124 {dimension_numbers = #tpu.dot_dimension_numbers<[1], [0], [0], [1], [0, 0, 1, 1], [], []>} : vector<2x8xf32>, vector<8x32xf32>, vector<2x32xf32> -> vector<2x32xf32>
    %c0_125 = arith.constant 0 : index
    %c0_126 = arith.constant 0 : index
    %184 = vector.load %arg32[%c0_125, %c0_126] : memref<2x1xf32, #tpu.memory_space<vmem>>, vector<2x1xf32>
    %185 = vector.broadcast %184 : vector<2x1xf32> to vector<2x32xf32>
    %186 = arith.addf %183, %185 : vector<2x32xf32>
    %c1_127 = arith.constant 1 : index
    %c0_128 = arith.constant 0 : index
    %c0_129 = arith.constant 0 : index
    %187 = vector.load %arg36[%c1_127, %c0_128, %c0_129] : memref<2x2x32xf32, #tpu.memory_space<vmem>>, vector<1x2x32xf32>
    %188 = vector.shape_cast %187 : vector<1x2x32xf32> to vector<2x32xf32>
    %189 = vector.shape_cast %186 : vector<2x32xf32> to vector<1x2x32xf32>
    tpu.vector_store %arg36[%c1_127, %c0_128, %c0_129], %189 {strides = array<i32>} : memref<2x2x32xf32, #tpu.memory_space<vmem>>, vector<1x2x32xf32>,
    return
  }
}

</mosaic_0001>

<llo_original>
// kernel: trm_encoder_forward.5
$region0: #{trm_encoder_forward.5}
  #allocation0 [shape = 'u32[]', space=smem, size = 0x4, offset = 0x4, fixed_abs, tag = 'smem constant byte address 0x4 - core index']
  #allocation1 [shape = 'u32[144,128]{1,0:T(1,128)}', space=vmem, size = 0x12000, scoped, tag = 'internal scratch']
  %s0 = inlined_call_operand.vmem [shape: f32[16,32], index: 0, kind: input, shape index: {}]
  %s1 = inlined_call_operand.vmem [shape: f32[32,96], index: 1, kind: input, shape index: {}]
  %s2 = inlined_call_operand.vmem [shape: f32[1,96], index: 2, kind: input, shape index: {}]
  %s3 = inlined_call_operand.vmem [shape: f32[16,96], index: 3, kind: output, shape index: {}]
  %s4 = sld [smem:[#allocation0]]
  $region22: #{trm_encoder_forward.5} parent=0
    _
  %s6 = ssub.s32 1, %s4
  %s7 = scalar_select 0, %s6, %s4
  // Predicated region
  $region2: #{trm_encoder_forward.5} parent=0 // pred_check
    _
  $region3: #{trm_encoder_forward.5} parent=0 // pred_check_branch
    %9 = sbr.rel (0) target = $region5
  $region4: #{trm_encoder_forward.5} parent=0 // pred_region
    _
  $region5: #{trm_encoder_forward.5} parent=0 // pred_fallthru
    _
  // Predicated region
  $region6: #{trm_encoder_forward.5} parent=0 // pred_check
    _
  $region7: #{trm_encoder_forward.5} parent=0 // pred_check_branch
    %11 = sbr.rel (0) target = $region9
  $region8: #{trm_encoder_forward.5} parent=0 // pred_region
    _
  $region9: #{trm_encoder_forward.5} parent=0 // pred_fallthru
    _
  // Predicated region
  $region10: #{trm_encoder_forward.5} parent=0 // pred_check
    _
  $region11: #{trm_encoder_forward.5} parent=0 // pred_check_branch
    %13 = sbr.rel (0) target = $region13
  $region12: #{trm_encoder_forward.5} parent=0 // pred_region
    _
  $region13: #{trm_encoder_forward.5} parent=0 // pred_fallthru
    _
  %v14 = vld [vmem:[%s0] sm:$0xff]
  %v15 = vld [vmem:[%s0 + $0x8] sm:$0xff]
  %v16 = vld [vmem:[%s1] sm:$0xff]
  %v17 = vld [vmem:[%s1 + $0x8] sm:$0xff]
  %v18 = vld [vmem:[%s1 + $0x10] sm:$0xff]
  %v19 = vld [vmem:[%s1 + $0x18] sm:$0xff]
  %v20 = vld [vmem:[%s2] sm:$0x1]
  %v22 = vlaneseq
  %v23 = vshrl.u32 %v22, 7
  %v24 = vsub.s32 0, %v23
  %v25 = vrot.slane %v20, %v24
  %vm27 = vcmask 261120
  %v29 = vsel %vm27, %v14, 0
  %v32 = vsel %vm27, %v15, 0
  %34 = vmatprep.subr.mxu0 0.0
  %35 = vmatpush1.msra.mxu0 0.0
  %36 = vmatprep.subr.mxu0 0.0
  %37 = vmatpush1.msra.mxu0 0.0
  %38 = vmatprep.subr.mxu0 0.0
  %39 = vmatpush1.msra.mxu0 0.0
  %40 = vmatprep.subr.mxu0 0.0
  %41 = vmatpush1.msra.mxu0 0.0
  %42 = vmatprep.subr.mxu0 0.0
  %43 = vmatpush1.msra.mxu0 0.0
  %44 = vmatprep.subr.mxu0 0.0
  %45 = vmatpush1.msra.mxu0 0.0
  %46 = vmatprep.subr.mxu0 0.0
  %47 = vmatpush1.msra.mxu0 0.0
  %48 = vmatprep.subr.mxu0 0.0
  %49 = vmatpush1.msra.mxu0 0.0
  %50 = vmatprep.subr.mxu0 0.0
  %51 = vmatpush1.msra.mxu0 0.0
  %52 = vmatprep.subr.mxu0 0.0
  %53 = vmatpush1.msra.mxu0 0.0
  %54 = vmatprep.subr.mxu0 0.0
  %55 = vmatpush1.msra.mxu0 0.0
  %56 = vmatprep.subr.mxu0 0.0
  %57 = vmatpush1.msra.mxu0 0.0
  %58 = vmatprep.subr.mxu0 0.0
  %59 = vmatpush1.msra.mxu0 %v19
  %60 = vmatprep.subr.mxu0 0.0
  %61 = vmatpush1.msra.mxu0 %v18
  %62 = vmatprep.subr.mxu0 0.0
  %63 = vmatpush1.msra.mxu0 %v17
  %64 = vmatprep.subr.mxu0 0.0
  %65 = vmatpush1.msra.mxu0 %v16
  %66 = vmatprep.subr.mxu0 0.0
  %67 = vmatpush2.msra.mxu0 0.0
  %68 = vmatprep.subr.mxu0 0.0
  %69 = vmatpush2.msra.mxu0 0.0
  %70 = vmatprep.subr.mxu0 0.0
  %71 = vmatpush2.msra.mxu0 0.0
  %72 = vmatprep.subr.mxu0 0.0
  %73 = vmatpush2.msra.mxu0 0.0
  %74 = vmatprep.subr.mxu0 0.0
  %75 = vmatpush2.msra.mxu0 0.0
  %76 = vmatprep.subr.mxu0 0.0
  %77 = vmatpush2.msra.mxu0 0.0
  %78 = vmatprep.subr.mxu0 0.0
  %79 = vmatpush2.msra.mxu0 0.0
  %80 = vmatprep.subr.mxu0 0.0
  %81 = vmatpush2.msra.mxu0 0.0
  %82 = vmatprep.subr.mxu0 0.0
  %83 = vmatpush2.msra.mxu0 0.0
  %84 = vmatprep.subr.mxu0 0.0
  %85 = vmatpush2.msra.mxu0 0.0
  %86 = vmatprep.subr.mxu0 0.0
  %87 = vmatpush2.msra.mxu0 0.0
  %88 = vmatprep.subr.mxu0 0.0
  %89 = vmatpush2.msra.mxu0 0.0
  %90 = vmatprep.subr.mxu0 0.0
  %91 = vmatpush2.msra.mxu0 0.0
  %92 = vmatprep.subr.mxu0 0.0
  %93 = vmatpush2.msra.mxu0 0.0
  %94 = vmatprep.subr.mxu0 0.0
  %95 = vmatpush2.msra.mxu0 0.0
  %96 = vmatprep.subr.mxu0 0.0
  %97 = vmatpush2.msra.mxu0 0.0
  %98 = vmatprep.mubr.f32.mxu0 0.0
  %99 = vmatmul.mubr.f32.gmra.mxu0 %v29
  %v100 = vpop.f32.mrf.mxu0
  %v101 = vadd.f32 %v25, %v100
  %v102 = vpop.f32.mrf.mxu0
  %103 = vmatprep.mubr.f32.mxu0 0.0
  %104 = vmatmul.mubr.f32.gmra.mxu0 %v32
  %v105 = vpop.f32.mrf.mxu0
  %v106 = vadd.f32 %v25, %v105
  %v107 = vpop.f32.mrf.mxu0
  %108 = vdwg.mxu0
  %vm109 = vcmask 785408
  %110 = vst.msk [vmem:[%s3] sm:$0xff] %vm109, %v101
  %111 = vst.msk [vmem:[%s3 + $0x8] sm:$0xff] %vm109, %v106
  // Predicated region
  $region14: #{trm_encoder_forward.5} parent=0 // pred_check
    _
  $region15: #{trm_encoder_forward.5} parent=0 // pred_check_branch
    %113 = sbr.rel (0) target = $region17
  $region16: #{trm_encoder_forward.5} parent=0 // pred_region
    _
  $region17: #{trm_encoder_forward.5} parent=0 // pred_fallthru
    _
  // Predicated region
  $region18: #{trm_encoder_forward.5} parent=0 // pred_check
    _
  $region19: #{trm_encoder_forward.5} parent=0 // pred_check_branch
    %115 = sbr.rel (0) target = $region21
  $region20: #{trm_encoder_forward.5} parent=0 // pred_region
    _
  $region21: #{trm_encoder_forward.5} parent=0 // pred_fallthru
    _

// kernel: trm_encoder_forward.7
$region0: #{trm_encoder_forward.7}
  #allocation0 [shape = 'u32[]', space=smem, size = 0x4, offset = 0x4, fixed_abs, tag = 'smem constant byte address 0x4 - core index']
  #allocation1 [shape = 'u32[144,128]{1,0:T(1,128)}', space=vmem, size = 0x12000, scoped, tag = 'internal scratch']
  %s0 = inlined_call_operand.vmem [shape: f32[16,32], index: 0, kind: input, shape index: {}]
  %s1 = inlined_call_operand.vmem [shape: f32[16,32], index: 1, kind: input, shape index: {}]
  %s2 = inlined_call_operand.vmem [shape: f32[32,32], index: 2, kind: input, shape index: {}]
  %s3 = inlined_call_operand.vmem [shape: f32[1,32], index: 3, kind: input, shape index: {}]
  %s4 = inlined_call_operand.vmem [shape: f32[1,32], index: 4, kind: input, shape index: {}]
  %s5 = inlined_call_operand.vmem [shape: f32[1,32], index: 5, kind: input, shape index: {}]
  %s6 = inlined_call_operand.vmem [shape: f32[32,64], index: 6, kind: input, shape index: {}]
  %s7 = inlined_call_operand.vmem [shape: f32[1,64], index: 7, kind: input, shape index: {}]
  %s8 = inlined_call_operand.vmem [shape: f32[64,32], index: 8, kind: input, shape index: {}]
  %s9 = inlined_call_operand.vmem [shape: f32[1,32], index: 9, kind: input, shape index: {}]
  %s10 = inlined_call_operand.vmem [shape: f32[1,32], index: 10, kind: input, shape index: {}]
  %s11 = inlined_call_operand.vmem [shape: f32[1,32], index: 11, kind: input, shape index: {}]
  %s12 = inlined_call_operand.vmem [shape: f32[32,96], index: 12, kind: input, shape index: {}]
  %s13 = inlined_call_operand.vmem [shape: f32[1,96], index: 13, kind: input, shape index: {}]
  %s14 = inlined_call_operand.vmem [shape: f32[16,32], index: 14, kind: output, shape index: {0}]
  %s15 = inlined_call_operand.vmem [shape: f32[16,96], index: 15, kind: output, shape index: {1}]
  %16 = xla_tuple %s14, %s15
  %s17 = sld [smem:[#allocation0]]
  $region74: #{trm_encoder_forward.7} parent=0
    _
  %s19 = ssub.s32 1, %s17
  %s20 = scalar_select 0, %s19, %s17
  // Predicated region
  $region2: #{trm_encoder_forward.7} parent=0 // pred_check
    _
  $region3: #{trm_encoder_forward.7} parent=0 // pred_check_branch
    %22 = sbr.rel (0) target = $region5
  $region4: #{trm_encoder_forward.7} parent=0 // pred_region
    _
  $region5: #{trm_encoder_forward.7} parent=0 // pred_fallthru
    _
  // Predicated region
  $region6: #{trm_encoder_forward.7} parent=0 // pred_check
    _
  $region7: #{trm_encoder_forward.7} parent=0 // pred_check_branch
    %24 = sbr.rel (0) target = $region9
  $region8: #{trm_encoder_forward.7} parent=0 // pred_region
    _
  $region9: #{trm_encoder_forward.7} parent=0 // pred_fallthru
    _
  // Predicated region
  $region10: #{trm_encoder_forward.7} parent=0 // pred_check
    _
  $region11: #{trm_encoder_forward.7} parent=0 // pred_check_branch
    %26 = sbr.rel (0) target = $region13
  $region12: #{trm_encoder_forward.7} parent=0 // pred_region
    _
  $region13: #{trm_encoder_forward.7} parent=0 // pred_fallthru
    _
  // Predicated region
  $region14: #{trm_encoder_forward.7} parent=0 // pred_check
    _
  $region15: #{trm_encoder_forward.7} parent=0 // pred_check_branch
    %28 = sbr.rel (0) target = $region17
  $region16: #{trm_encoder_forward.7} parent=0 // pred_region
    _
  $region17: #{trm_encoder_forward.7} parent=0 // pred_fallthru
    _
  // Predicated region
  $region18: #{trm_encoder_forward.7} parent=0 // pred_check
    _
  $region19: #{trm_encoder_forward.7} parent=0 // pred_check_branch
    %30 = sbr.rel (0) target = $region21
  $region20: #{trm_encoder_forward.7} parent=0 // pred_region
    _
  $region21: #{trm_encoder_forward.7} parent=0 // pred_fallthru
    _
  // Predicated region
  $region22: #{trm_encoder_forward.7} parent=0 // pred_check
    _
  $region23: #{trm_encoder_forward.7} parent=0 // pred_check_branch
    %32 = sbr.rel (0) target = $region25
  $region24: #{trm_encoder_forward.7} parent=0 // pred_region
    _
  $region25: #{trm_encoder_forward.7} parent=0 // pred_fallthru
    _
  // Predicated region
  $region26: #{trm_encoder_forward.7} parent=0 // pred_check
    _
  $region27: #{trm_encoder_forward.7} parent=0 // pred_check_branch
    %34 = sbr.rel (0) target = $region29
  $region28: #{trm_encoder_forward.7} parent=0 // pred_region
    _
  $region29: #{trm_encoder_forward.7} parent=0 // pred_fallthru
    _
  // Predicated region
  $region30: #{trm_encoder_forward.7} parent=0 // pred_check
    _
  $region31: #{trm_encoder_forward.7} parent=0 // pred_check_branch
    %36 = sbr.rel (0) target = $region33
  $region32: #{trm_encoder_forward.7} parent=0 // pred_region
    _
  $region33: #{trm_encoder_forward.7} parent=0 // pred_fallthru
    _
  // Predicated region
  $region34: #{trm_encoder_forward.7} parent=0 // pred_check
    _
  $region35: #{trm_encoder_forward.7} parent=0 // pred_check_branch
    %38 = sbr.rel (0) target = $region37
  $region36: #{trm_encoder_forward.7} parent=0 // pred_region
    _
  $region37: #{trm_encoder_forward.7} parent=0 // pred_fallthru
    _
  // Predicated region
  $region38: #{trm_encoder_forward.7} parent=0 // pred_check
    _
  $region39: #{trm_encoder_forward.7} parent=0 // pred_check_branch
    %40 = sbr.rel (0) target = $region41
  $region40: #{trm_encoder_forward.7} parent=0 // pred_region
    _
  $region41: #{trm_encoder_forward.7} parent=0 // pred_fallthru
    _
  // Predicated region
  $region42: #{trm_encoder_forward.7} parent=0 // pred_check
    _
  $region43: #{trm_encoder_forward.7} parent=0 // pred_check_branch
    %42 = sbr.rel (0) target = $region45
  $region44: #{trm_encoder_forward.7} parent=0 // pred_region
    _
  $region45: #{trm_encoder_forward.7} parent=0 // pred_fallthru
    _
  // Predicated region
  $region46: #{trm_encoder_forward.7} parent=0 // pred_check
    _
  $region47: #{trm_encoder_forward.7} parent=0 // pred_check_branch
    %44 = sbr.rel (0) target = $region49
  $region48: #{trm_encoder_forward.7} parent=0 // pred_region
    _
  $region49: #{trm_encoder_forward.7} parent=0 // pred_fallthru
    _
  // Predicated region
  $region50: #{trm_encoder_forward.7} parent=0 // pred_check
    _
  $region51: #{trm_encoder_forward.7} parent=0 // pred_check_branch
    %46 = sbr.rel (0) target = $region53
  $region52: #{trm_encoder_forward.7} parent=0 // pred_region
    _
  $region53: #{trm_encoder_forward.7} parent=0 // pred_fallthru
    _
  // Predicated region
  $region54: #{trm_encoder_forward.7} parent=0 // pred_check
    _
  $region55: #{trm_encoder_forward.7} parent=0 // pred_check_branch
    %48 = sbr.rel (0) target = $region57
  $region56: #{trm_encoder_forward.7} parent=0 // pred_region
    _
  $region57: #{trm_encoder_forward.7} parent=0 // pred_fallthru
    _
  %v49 = vld [vmem:[%s0] sm:$0xff]
  %v50 = vld [vmem:[%s0 + $0x8] sm:$0xff]
  %v51 = vld [vmem:[%s1] sm:$0xff]
  %v52 = vld [vmem:[%s1 + $0x8] sm:$0xff]
  %v53 = vld [vmem:[%s2] sm:$0xff]
  %v54 = vld [vmem:[%s2 + $0x8] sm:$0xff]
  %v55 = vld [vmem:[%s2 + $0x10] sm:$0xff]
  %v56 = vld [vmem:[%s2 + $0x18] sm:$0xff]
  %v57 = vld [vmem:[%s3] sm:$0x1]
  %v58 = vld [vmem:[%s4] sm:$0x1]
  %v59 = vld [vmem:[%s5] sm:$0x1]
  %v60 = vld [vmem:[%s6] sm:$0xff]
  %v61 = vld [vmem:[%s6 + $0x8] sm:$0xff]
  %v62 = vld [vmem:[%s6 + $0x10] sm:$0xff]
  %v63 = vld [vmem:[%s6 + $0x18] sm:$0xff]
  %v64 = vld [vmem:[%s7] sm:$0x1]
  %v65 = vld [vmem:[%s8] sm:$0xff]
  %v66 = vld [vmem:[%s8 + $0x8] sm:$0xff]
  %v67 = vld [vmem:[%s8 + $0x10] sm:$0xff]
  %v68 = vld [vmem:[%s8 + $0x18] sm:$0xff]
  %v69 = vld [vmem:[%s8 + $0x20] sm:$0xff]
  %v70 = vld [vmem:[%s8 + $0x28] sm:$0xff]
  %v71 = vld [vmem:[%s8 + $0x30] sm:$0xff]
  %v72 = vld [vmem:[%s8 + $0x38] sm:$0xff]
  %v73 = vld [vmem:[%s9] sm:$0x1]
  %v74 = vld [vmem:[%s10] sm:$0x1]
  %v75 = vld [vmem:[%s11] sm:$0x1]
  %v77 = vlaneseq
  %v78 = vshrl.u32 %v77, 7
  %v79 = vsub.s32 0, %v78
  %v80 = vrot.slane %v57, %v79
  %vm82 = vcmask 261120
  %v84 = vsel %vm82, %v51, 0
  %v87 = vsel %vm82, %v52, 0
  %89 = vmatprep.subr.mxu0 0.0
  %90 = vmatpush1.msra.mxu0 0.0
  %91 = vmatprep.subr.mxu0 0.0
  %92 = vmatpush1.msra.mxu0 0.0
  %93 = vmatprep.subr.mxu0 0.0
  %94 = vmatpush1.msra.mxu0 0.0
  %95 = vmatprep.subr.mxu0 0.0
  %96 = vmatpush1.msra.mxu0 0.0
  %97 = vmatprep.subr.mxu0 0.0
  %98 = vmatpush1.msra.mxu0 0.0
  %99 = vmatprep.subr.mxu0 0.0
  %100 = vmatpush1.msra.mxu0 0.0
  %101 = vmatprep.subr.mxu0 0.0
  %102 = vmatpush1.msra.mxu0 0.0
  %103 = vmatprep.subr.mxu0 0.0
  %104 = vmatpush1.msra.mxu0 0.0
  %105 = vmatprep.subr.mxu0 0.0
  %106 = vmatpush1.msra.mxu0 0.0
  %107 = vmatprep.subr.mxu0 0.0
  %108 = vmatpush1.msra.mxu0 0.0
  %109 = vmatprep.subr.mxu0 0.0
  %110 = vmatpush1.msra.mxu0 0.0
  %111 = vmatprep.subr.mxu0 0.0
  %112 = vmatpush1.msra.mxu0 0.0
  %113 = vmatprep.subr.mxu0 0.0
  %114 = vmatpush1.msra.mxu0 %v56
  %115 = vmatprep.subr.mxu0 0.0
  %116 = vmatpush1.msra.mxu0 %v55
  %117 = vmatprep.subr.mxu0 0.0
  %118 = vmatpush1.msra.mxu0 %v54
  %119 = vmatprep.subr.mxu0 0.0
  %120 = vmatpush1.msra.mxu0 %v53
  %121 = vmatprep.subr.mxu0 0.0
  %122 = vmatpush2.msra.mxu0 0.0
  %123 = vmatprep.subr.mxu0 0.0
  %124 = vmatpush2.msra.mxu0 0.0
  %125 = vmatprep.subr.mxu0 0.0
  %126 = vmatpush2.msra.mxu0 0.0
  %127 = vmatprep.subr.mxu0 0.0
  %128 = vmatpush2.msra.mxu0 0.0
  %129 = vmatprep.subr.mxu0 0.0
  %130 = vmatpush2.msra.mxu0 0.0
  %131 = vmatprep.subr.mxu0 0.0
  %132 = vmatpush2.msra.mxu0 0.0
  %133 = vmatprep.subr.mxu0 0.0
  %134 = vmatpush2.msra.mxu0 0.0
  %135 = vmatprep.subr.mxu0 0.0
  %136 = vmatpush2.msra.mxu0 0.0
  %137 = vmatprep.subr.mxu0 0.0
  %138 = vmatpush2.msra.mxu0 0.0
  %139 = vmatprep.subr.mxu0 0.0
  %140 = vmatpush2.msra.mxu0 0.0
  %141 = vmatprep.subr.mxu0 0.0
  %142 = vmatpush2.msra.mxu0 0.0
  %143 = vmatprep.subr.mxu0 0.0
  %144 = vmatpush2.msra.mxu0 0.0
  %145 = vmatprep.subr.mxu0 0.0
  %146 = vmatpush2.msra.mxu0 0.0
  %147 = vmatprep.subr.mxu0 0.0
  %148 = vmatpush2.msra.mxu0 0.0
  %149 = vmatprep.subr.mxu0 0.0
  %150 = vmatpush2.msra.mxu0 0.0
  %151 = vmatprep.subr.mxu0 0.0
  %152 = vmatpush2.msra.mxu0 0.0
  %153 = vmatprep.mubr.f32.mxu0 0.0
  %154 = vmatmul.mubr.f32.gmra.mxu0 %v84
  %v155 = vpop.f32.mrf.mxu0
  %v156 = vadd.f32 %v80, %v155
  %v157 = vpop.f32.mrf.mxu0
  %158 = vmatprep.mubr.f32.mxu0 0.0
  %159 = vmatmul.mubr.f32.gmra.mxu0 %v87
  %v160 = vpop.f32.mrf.mxu0
  %v161 = vadd.f32 %v80, %v160
  %v162 = vpop.f32.mrf.mxu0
  %163 = vdwg.mxu0
  %v164 = vadd.f32 %v49, %v156
  %v165 = vadd.f32 %v50, %v161
  %v166 = vsel %vm82, %v164, 0.0
  %167 = vadd.xlane.f32.xlu0 %v166
  %v168 = vpop.xlane.xlu0 %167
  %v169 = vsel %vm82, %v165, 0.0
  %170 = vadd.xlane.f32.xlu0 %v169
  %v171 = vpop.xlane.xlu0 %170
  %v172 = vrcp.pop 32.0
  %v173 = vmul.f32 %v168, %v172
  %v174 = vmul.f32 %v171, %v172
  %v175 = vsub.f32 %v164, %v173
  %v176 = vsub.f32 %v165, %v174
  %v177 = vmul.f32 %v175, %v175
  %v178 = vmul.f32 %v176, %v176
  %v179 = vsel %vm82, %v177, 0.0
  %180 = vadd.xlane.f32.xlu0 %v179
  %v181 = vpop.xlane.xlu0 %180
  %v182 = vsel %vm82, %v178, 0.0
  %183 = vadd.xlane.f32.xlu0 %v182
  %v184 = vpop.xlane.xlu0 %183
  %v185 = vmul.f32 %v181, %v172
  %v186 = vmul.f32 %v184, %v172
  %v187 = vadd.f32 %v185, 1e-05
  %v188 = vadd.f32 %v186, 1e-05
  %v189 = vrsqrt.pop %v187
  %v190 = vrsqrt.pop %v188
  %v191 = vmul.f32 %v175, %v189
  %v192 = vmul.f32 %v176, %v190
  %v194 = vlaneseq
  %v195 = vshrl.u32 %v194, 7
  %v196 = vsub.s32 0, %v195
  %v197 = vrot.slane %v58, %v196
  %v199 = vmul.f32 %v191, %v197
  %v200 = vmul.f32 %v192, %v197
  %v202 = vlaneseq
  %v203 = vshrl.u32 %v202, 7
  %v204 = vsub.s32 0, %v203
  %v205 = vrot.slane %v59, %v204
  %v207 = vadd.f32 %v199, %v205
  %v208 = vadd.f32 %v200, %v205
  %v210 = vlaneseq
  %v211 = vshrl.u32 %v210, 7
  %v212 = vsub.s32 0, %v211
  %v213 = vrot.slane %v64, %v212
  %v216 = vsel %vm82, %v207, 0
  %v219 = vsel %vm82, %v208, 0
  %221 = vmatprep.subr.mxu0 0.0
  %222 = vmatpush1.msra.mxu0 0.0
  %223 = vmatprep.subr.mxu0 0.0
  %224 = vmatpush1.msra.mxu0 0.0
  %225 = vmatprep.subr.mxu0 0.0
  %226 = vmatpush1.msra.mxu0 0.0
  %227 = vmatprep.subr.mxu0 0.0
  %228 = vmatpush1.msra.mxu0 0.0
  %229 = vmatprep.subr.mxu0 0.0
  %230 = vmatpush1.msra.mxu0 0.0
  %231 = vmatprep.subr.mxu0 0.0
  %232 = vmatpush1.msra.mxu0 0.0
  %233 = vmatprep.subr.mxu0 0.0
  %234 = vmatpush1.msra.mxu0 0.0
  %235 = vmatprep.subr.mxu0 0.0
  %236 = vmatpush1.msra.mxu0 0.0
  %237 = vmatprep.subr.mxu0 0.0
  %238 = vmatpush1.msra.mxu0 0.0
  %239 = vmatprep.subr.mxu0 0.0
  %240 = vmatpush1.msra.mxu0 0.0
  %241 = vmatprep.subr.mxu0 0.0
  %242 = vmatpush1.msra.mxu0 0.0
  %243 = vmatprep.subr.mxu0 0.0
  %244 = vmatpush1.msra.mxu0 0.0
  %245 = vmatprep.subr.mxu0 0.0
  %246 = vmatpush1.msra.mxu0 %v63
  %247 = vmatprep.subr.mxu0 0.0
  %248 = vmatpush1.msra.mxu0 %v62
  %249 = vmatprep.subr.mxu0 0.0
  %250 = vmatpush1.msra.mxu0 %v61
  %251 = vmatprep.subr.mxu0 0.0
  %252 = vmatpush1.msra.mxu0 %v60
  %253 = vmatprep.subr.mxu0 0.0
  %254 = vmatpush2.msra.mxu0 0.0
  %255 = vmatprep.subr.mxu0 0.0
  %256 = vmatpush2.msra.mxu0 0.0
  %257 = vmatprep.subr.mxu0 0.0
  %258 = vmatpush2.msra.mxu0 0.0
  %259 = vmatprep.subr.mxu0 0.0
  %260 = vmatpush2.msra.mxu0 0.0
  %261 = vmatprep.subr.mxu0 0.0
  %262 = vmatpush2.msra.mxu0 0.0
  %263 = vmatprep.subr.mxu0 0.0
  %264 = vmatpush2.msra.mxu0 0.0
  %265 = vmatprep.subr.mxu0 0.0
  %266 = vmatpush2.msra.mxu0 0.0
  %267 = vmatprep.subr.mxu0 0.0
  %268 = vmatpush2.msra.mxu0 0.0
  %269 = vmatprep.subr.mxu0 0.0
  %270 = vmatpush2.msra.mxu0 0.0
  %271 = vmatprep.subr.mxu0 0.0
  %272 = vmatpush2.msra.mxu0 0.0
  %273 = vmatprep.subr.mxu0 0.0
  %274 = vmatpush2.msra.mxu0 0.0
  %275 = vmatprep.subr.mxu0 0.0
  %276 = vmatpush2.msra.mxu0 0.0
  %277 = vmatprep.subr.mxu0 0.0
  %278 = vmatpush2.msra.mxu0 0.0
  %279 = vmatprep.subr.mxu0 0.0
  %280 = vmatpush2.msra.mxu0 0.0
  %281 = vmatprep.subr.mxu0 0.0
  %282 = vmatpush2.msra.mxu0 0.0
  %283 = vmatprep.subr.mxu0 0.0
  %284 = vmatpush2.msra.mxu0 0.0
  %285 = vmatprep.mubr.f32.mxu0 0.0
  %286 = vmatmul.mubr.f32.gmra.mxu0 %v216
  %v287 = vpop.f32.mrf.mxu0
  %v288 = vadd.f32 %v213, %v287
  %v289 = vpop.f32.mrf.mxu0
  %290 = vmatprep.mubr.f32.mxu0 0.0
  %291 = vmatmul.mubr.f32.gmra.mxu0 %v219
  %v292 = vpop.f32.mrf.mxu0
  %v293 = vadd.f32 %v213, %v292
  %v294 = vpop.f32.mrf.mxu0
  %295 = vdwg.mxu0
  %v296 = vmax.f32 %v288, 0.0
  %v297 = vmax.f32 %v293, 0.0
  %v299 = vlaneseq
  %v300 = vshrl.u32 %v299, 7
  %v301 = vsub.s32 0, %v300
  %v302 = vrot.slane %v73, %v301
  %vm304 = vcmask 523264
  %v306 = vsel %vm304, %v296, 0
  %v309 = vsel %vm304, %v297, 0
  %311 = vmatprep.subr.mxu0 0.0
  %312 = vmatpush1.msra.mxu0 0.0
  %313 = vmatprep.subr.mxu0 0.0
  %314 = vmatpush1.msra.mxu0 0.0
  %315 = vmatprep.subr.mxu0 0.0
  %316 = vmatpush1.msra.mxu0 0.0
  %317 = vmatprep.subr.mxu0 0.0
  %318 = vmatpush1.msra.mxu0 0.0
  %319 = vmatprep.subr.mxu0 0.0
  %320 = vmatpush1.msra.mxu0 0.0
  %321 = vmatprep.subr.mxu0 0.0
  %322 = vmatpush1.msra.mxu0 0.0
  %323 = vmatprep.subr.mxu0 0.0
  %324 = vmatpush1.msra.mxu0 0.0
  %325 = vmatprep.subr.mxu0 0.0
  %326 = vmatpush1.msra.mxu0 0.0
  %327 = vmatprep.subr.mxu0 0.0
  %328 = vmatpush1.msra.mxu0 %v72
  %329 = vmatprep.subr.mxu0 0.0
  %330 = vmatpush1.msra.mxu0 %v71
  %331 = vmatprep.subr.mxu0 0.0
  %332 = vmatpush1.msra.mxu0 %v70
  %333 = vmatprep.subr.mxu0 0.0
  %334 = vmatpush1.msra.mxu0 %v69
  %335 = vmatprep.subr.mxu0 0.0
  %336 = vmatpush1.msra.mxu0 %v68
  %337 = vmatprep.subr.mxu0 0.0
  %338 = vmatpush1.msra.mxu0 %v67
  %339 = vmatprep.subr.mxu0 0.0
  %340 = vmatpush1.msra.mxu0 %v66
  %341 = vmatprep.subr.mxu0 0.0
  %342 = vmatpush1.msra.mxu0 %v65
  %343 = vmatprep.subr.mxu0 0.0
  %344 = vmatpush2.msra.mxu0 0.0
  %345 = vmatprep.subr.mxu0 0.0
  %346 = vmatpush2.msra.mxu0 0.0
  %347 = vmatprep.subr.mxu0 0.0
  %348 = vmatpush2.msra.mxu0 0.0
  %349 = vmatprep.subr.mxu0 0.0
  %350 = vmatpush2.msra.mxu0 0.0
  %351 = vmatprep.subr.mxu0 0.0
  %352 = vmatpush2.msra.mxu0 0.0
  %353 = vmatprep.subr.mxu0 0.0
  %354 = vmatpush2.msra.mxu0 0.0
  %355 = vmatprep.subr.mxu0 0.0
  %356 = vmatpush2.msra.mxu0 0.0
  %357 = vmatprep.subr.mxu0 0.0
  %358 = vmatpush2.msra.mxu0 0.0
  %359 = vmatprep.subr.mxu0 0.0
  %360 = vmatpush2.msra.mxu0 0.0
  %361 = vmatprep.subr.mxu0 0.0
  %362 = vmatpush2.msra.mxu0 0.0
  %363 = vmatprep.subr.mxu0 0.0
  %364 = vmatpush2.msra.mxu0 0.0
  %365 = vmatprep.subr.mxu0 0.0
  %366 = vmatpush2.msra.mxu0 0.0
  %367 = vmatprep.subr.mxu0 0.0
  %368 = vmatpush2.msra.mxu0 0.0
  %369 = vmatprep.subr.mxu0 0.0
  %370 = vmatpush2.msra.mxu0 0.0
  %371 = vmatprep.subr.mxu0 0.0
  %372 = vmatpush2.msra.mxu0 0.0
  %373 = vmatprep.subr.mxu0 0.0
  %374 = vmatpush2.msra.mxu0 0.0
  %375 = vmatprep.mubr.f32.mxu0 0.0
  %376 = vmatmul.mubr.f32.gmra.mxu0 %v306
  %v377 = vpop.f32.mrf.mxu0
  %v378 = vadd.f32 %v302, %v377
  %v379 = vpop.f32.mrf.mxu0
  %380 = vmatprep.mubr.f32.mxu0 0.0
  %381 = vmatmul.mubr.f32.gmra.mxu0 %v309
  %v382 = vpop.f32.mrf.mxu0
  %v383 = vadd.f32 %v302, %v382
  %v384 = vpop.f32.mrf.mxu0
  %385 = vdwg.mxu0
  %v386 = vadd.f32 %v207, %v378
  %v387 = vadd.f32 %v208, %v383
  %v388 = vsel %vm82, %v386, 0.0
  %389 = vadd.xlane.f32.xlu0 %v388
  %v390 = vpop.xlane.xlu0 %389
  %v391 = vsel %vm82, %v387, 0.0
  %392 = vadd.xlane.f32.xlu0 %v391
  %v393 = vpop.xlane.xlu0 %392
  %v394 = vmul.f32 %v390, %v172
  %v395 = vmul.f32 %v393, %v172
  %v396 = vsub.f32 %v386, %v394
  %v397 = vsub.f32 %v387, %v395
  %v398 = vmul.f32 %v396, %v396
  %v399 = vmul.f32 %v397, %v397
  %v400 = vsel %vm82, %v398, 0.0
  %401 = vadd.xlane.f32.xlu0 %v400
  %v402 = vpop.xlane.xlu0 %401
  %v403 = vsel %vm82, %v399, 0.0
  %404 = vadd.xlane.f32.xlu0 %v403
  %v405 = vpop.xlane.xlu0 %404
  %v406 = vmul.f32 %v402, %v172
  %v407 = vmul.f32 %v405, %v172
  %v408 = vadd.f32 %v406, 1e-05
  %v409 = vadd.f32 %v407, 1e-05
  %v410 = vrsqrt.pop %v408
  %v411 = vrsqrt.pop %v409
  %v412 = vmul.f32 %v396, %v410
  %v413 = vmul.f32 %v397, %v411
  %v415 = vlaneseq
  %v416 = vshrl.u32 %v415, 7
  %v417 = vsub.s32 0, %v416
  %v418 = vrot.slane %v74, %v417
  %v420 = vmul.f32 %v412, %v418
  %v421 = vmul.f32 %v413, %v418
  %v423 = vlaneseq
  %v424 = vshrl.u32 %v423, 7
  %v425 = vsub.s32 0, %v424
  %v426 = vrot.slane %v75, %v425
  %v428 = vadd.f32 %v420, %v426
  %v429 = vadd.f32 %v421, %v426
  %430 = vst.msk [vmem:[%s14] sm:$0xff] %vm82, %v428
  %431 = vst.msk [vmem:[%s14 + $0x8] sm:$0xff] %vm82, %v429
  %v432 = vld [vmem:[%s12] sm:$0xff]
  %v433 = vld [vmem:[%s12 + $0x8] sm:$0xff]
  %v434 = vld [vmem:[%s12 + $0x10] sm:$0xff]
  %v435 = vld [vmem:[%s12 + $0x18] sm:$0xff]
  %v436 = vld [vmem:[%s13] sm:$0x1]
  %v438 = vlaneseq
  %v439 = vshrl.u32 %v438, 7
  %v440 = vsub.s32 0, %v439
  %v441 = vrot.slane %v436, %v440
  %v444 = vsel %vm82, %v428, 0
  %v447 = vsel %vm82, %v429, 0
  %449 = vmatprep.subr.mxu0 0.0
  %450 = vmatpush1.msra.mxu0 0.0
  %451 = vmatprep.subr.mxu0 0.0
  %452 = vmatpush1.msra.mxu0 0.0
  %453 = vmatprep.subr.mxu0 0.0
  %454 = vmatpush1.msra.mxu0 0.0
  %455 = vmatprep.subr.mxu0 0.0
  %456 = vmatpush1.msra.mxu0 0.0
  %457 = vmatprep.subr.mxu0 0.0
  %458 = vmatpush1.msra.mxu0 0.0
  %459 = vmatprep.subr.mxu0 0.0
  %460 = vmatpush1.msra.mxu0 0.0
  %461 = vmatprep.subr.mxu0 0.0
  %462 = vmatpush1.msra.mxu0 0.0
  %463 = vmatprep.subr.mxu0 0.0
  %464 = vmatpush1.msra.mxu0 0.0
  %465 = vmatprep.subr.mxu0 0.0
  %466 = vmatpush1.msra.mxu0 0.0
  %467 = vmatprep.subr.mxu0 0.0
  %468 = vmatpush1.msra.mxu0 0.0
  %469 = vmatprep.subr.mxu0 0.0
  %470 = vmatpush1.msra.mxu0 0.0
  %471 = vmatprep.subr.mxu0 0.0
  %472 = vmatpush1.msra.mxu0 0.0
  %473 = vmatprep.subr.mxu0 0.0
  %474 = vmatpush1.msra.mxu0 %v435
  %475 = vmatprep.subr.mxu0 0.0
  %476 = vmatpush1.msra.mxu0 %v434
  %477 = vmatprep.subr.mxu0 0.0
  %478 = vmatpush1.msra.mxu0 %v433
  %479 = vmatprep.subr.mxu0 0.0
  %480 = vmatpush1.msra.mxu0 %v432
  %481 = vmatprep.subr.mxu0 0.0
  %482 = vmatpush2.msra.mxu0 0.0
  %483 = vmatprep.subr.mxu0 0.0
  %484 = vmatpush2.msra.mxu0 0.0
  %485 = vmatprep.subr.mxu0 0.0
  %486 = vmatpush2.msra.mxu0 0.0
  %487 = vmatprep.subr.mxu0 0.0
  %488 = vmatpush2.msra.mxu0 0.0
  %489 = vmatprep.subr.mxu0 0.0
  %490 = vmatpush2.msra.mxu0 0.0
  %491 = vmatprep.subr.mxu0 0.0
  %492 = vmatpush2.msra.mxu0 0.0
  %493 = vmatprep.subr.mxu0 0.0
  %494 = vmatpush2.msra.mxu0 0.0
  %495 = vmatprep.subr.mxu0 0.0
  %496 = vmatpush2.msra.mxu0 0.0
  %497 = vmatprep.subr.mxu0 0.0
  %498 = vmatpush2.msra.mxu0 0.0
  %499 = vmatprep.subr.mxu0 0.0
  %500 = vmatpush2.msra.mxu0 0.0
  %501 = vmatprep.subr.mxu0 0.0
  %502 = vmatpush2.msra.mxu0 0.0
  %503 = vmatprep.subr.mxu0 0.0
  %504 = vmatpush2.msra.mxu0 0.0
  %505 = vmatprep.subr.mxu0 0.0
  %506 = vmatpush2.msra.mxu0 0.0
  %507 = vmatprep.subr.mxu0 0.0
  %508 = vmatpush2.msra.mxu0 0.0
  %509 = vmatprep.subr.mxu0 0.0
  %510 = vmatpush2.msra.mxu0 0.0
  %511 = vmatprep.subr.mxu0 0.0
  %512 = vmatpush2.msra.mxu0 0.0
  %513 = vmatprep.mubr.f32.mxu0 0.0
  %514 = vmatmul.mubr.f32.gmra.mxu0 %v444
  %v515 = vpop.f32.mrf.mxu0
  %v516 = vadd.f32 %v441, %v515
  %v517 = vpop.f32.mrf.mxu0
  %518 = vmatprep.mubr.f32.mxu0 0.0
  %519 = vmatmul.mubr.f32.gmra.mxu0 %v447
  %v520 = vpop.f32.mrf.mxu0
  %v521 = vadd.f32 %v441, %v520
  %v522 = vpop.f32.mrf.mxu0
  %523 = vdwg.mxu0
  %vm524 = vcmask 785408
  %525 = vst.msk [vmem:[%s15] sm:$0xff] %vm524, %v516
  %526 = vst.msk [vmem:[%s15 + $0x8] sm:$0xff] %vm524, %v521
  // Predicated region
  $region58: #{trm_encoder_forward.7} parent=0 // pred_check
    _
  $region59: #{trm_encoder_forward.7} parent=0 // pred_check_branch
    %528 = sbr.rel (0) target = $region61
  $region60: #{trm_encoder_forward.7} parent=0 // pred_region
    _
  $region61: #{trm_encoder_forward.7} parent=0 // pred_fallthru
    _
  // Predicated region
  $region62: #{trm_encoder_forward.7} parent=0 // pred_check
    _
  $region63: #{trm_encoder_forward.7} parent=0 // pred_check_branch
    %530 = sbr.rel (0) target = $region65
  $region64: #{trm_encoder_forward.7} parent=0 // pred_region
    _
  $region65: #{trm_encoder_forward.7} parent=0 // pred_fallthru
    _
  // Predicated region
  $region66: #{trm_encoder_forward.7} parent=0 // pred_check
    _
  $region67: #{trm_encoder_forward.7} parent=0 // pred_check_branch
    %532 = sbr.rel (0) target = $region69
  $region68: #{trm_encoder_forward.7} parent=0 // pred_region
    _
  $region69: #{trm_encoder_forward.7} parent=0 // pred_fallthru
    _
  // Predicated region
  $region70: #{trm_encoder_forward.7} parent=0 // pred_check
    _
  $region71: #{trm_encoder_forward.7} parent=0 // pred_check_branch
    %534 = sbr.rel (0) target = $region73
  $region72: #{trm_encoder_forward.7} parent=0 // pred_region
    _
  $region73: #{trm_encoder_forward.7} parent=0 // pred_fallthru
    _

// kernel: trm_encoder_forward.6
$region0: #{trm_encoder_forward.6}
  #allocation0 [shape = 'u32[]', space=smem, size = 0x4, offset = 0x4, fixed_abs, tag = 'smem constant byte address 0x4 - core index']
  #allocation1 [shape = 'u32[144,128]{1,0:T(1,128)}', space=vmem, size = 0x12000, scoped, tag = 'internal scratch']
  %s0 = inlined_call_operand.vmem [shape: f32[8,8,8], index: 0, kind: input, shape index: {}]
  %s1 = inlined_call_operand.vmem [shape: f32[8,8,8], index: 1, kind: input, shape index: {}]
  %s2 = inlined_call_operand.vmem [shape: f32[8,8,8], index: 2, kind: input, shape index: {}]
  %s3 = inlined_call_operand.vmem [shape: f32[2,8,8], index: 3, kind: input, shape index: {}]
  %s4 = inlined_call_operand.vmem [shape: f32[8,8,8], index: 4, kind: output, shape index: {}]
  %s5 = sld [smem:[#allocation0]]
  $region26: #{trm_encoder_forward.6} parent=0
    _
  %s7 = ssub.s32 1, %s5
  %s8 = scalar_select 0, %s7, %s5
  // Predicated region
  $region2: #{trm_encoder_forward.6} parent=0 // pred_check
    _
  $region3: #{trm_encoder_forward.6} parent=0 // pred_check_branch
    %10 = sbr.rel (0) target = $region5
  $region4: #{trm_encoder_forward.6} parent=0 // pred_region
    _
  $region5: #{trm_encoder_forward.6} parent=0 // pred_fallthru
    _
  // Predicated region
  $region6: #{trm_encoder_forward.6} parent=0 // pred_check
    _
  $region7: #{trm_encoder_forward.6} parent=0 // pred_check_branch
    %12 = sbr.rel (0) target = $region9
  $region8: #{trm_encoder_forward.6} parent=0 // pred_region
    _
  $region9: #{trm_encoder_forward.6} parent=0 // pred_fallthru
    _
  // Predicated region
  $region10: #{trm_encoder_forward.6} parent=0 // pred_check
    _
  $region11: #{trm_encoder_forward.6} parent=0 // pred_check_branch
    %14 = sbr.rel (0) target = $region13
  $region12: #{trm_encoder_forward.6} parent=0 // pred_region
    _
  $region13: #{trm_encoder_forward.6} parent=0 // pred_fallthru
    _
  // Predicated region
  $region14: #{trm_encoder_forward.6} parent=0 // pred_check
    _
  $region15: #{trm_encoder_forward.6} parent=0 // pred_check_branch
    %16 = sbr.rel (0) target = $region17
  $region16: #{trm_encoder_forward.6} parent=0 // pred_region
    _
  $region17: #{trm_encoder_forward.6} parent=0 // pred_fallthru
    _
  %v17 = vld [vmem:[%s0] sm:$0xff]
  %v18 = vld [vmem:[%s0 + $0x8] sm:$0xff]
  %v19 = vld [vmem:[%s0 + $0x10] sm:$0xff]
  %v20 = vld [vmem:[%s0 + $0x18] sm:$0xff]
  %v21 = vld [vmem:[%s0 + $0x20] sm:$0xff]
  %v22 = vld [vmem:[%s0 + $0x28] sm:$0xff]
  %v23 = vld [vmem:[%s0 + $0x30] sm:$0xff]
  %v24 = vld [vmem:[%s0 + $0x38] sm:$0xff]
  %v25 = vld [vmem:[%s1] sm:$0xff]
  %v26 = vld [vmem:[%s1 + $0x8] sm:$0xff]
  %v27 = vld [vmem:[%s1 + $0x10] sm:$0xff]
  %v28 = vld [vmem:[%s1 + $0x18] sm:$0xff]
  %v29 = vld [vmem:[%s1 + $0x20] sm:$0xff]
  %v30 = vld [vmem:[%s1 + $0x28] sm:$0xff]
  %v31 = vld [vmem:[%s1 + $0x30] sm:$0xff]
  %v32 = vld [vmem:[%s1 + $0x38] sm:$0xff]
  %v33 = vld [vmem:[%s2] sm:$0xff]
  %v34 = vld [vmem:[%s2 + $0x8] sm:$0xff]
  %v35 = vld [vmem:[%s2 + $0x10] sm:$0xff]
  %v36 = vld [vmem:[%s2 + $0x18] sm:$0xff]
  %v37 = vld [vmem:[%s2 + $0x20] sm:$0xff]
  %v38 = vld [vmem:[%s2 + $0x28] sm:$0xff]
  %v39 = vld [vmem:[%s2 + $0x30] sm:$0xff]
  %v40 = vld [vmem:[%s2 + $0x38] sm:$0xff]
  %v41 = vld [vmem:[%s3] sm:$0xff]
  %v42 = vld [vmem:[%s3 + $0x8] sm:$0xff]
  %vm43 = vcmask 64512
  %v45 = vsel %vm43, %v17, 0
  %v48 = vsel %vm43, %v25, 0
  %50 = vmatprep.subr.mxu0 0.0
  %51 = vmatpush1.xpose.msra.mxu0 0.0
  %52 = vmatprep.subr.mxu0 0.0
  %53 = vmatpush1.xpose.msra.mxu0 0.0
  %54 = vmatprep.subr.mxu0 0.0
  %55 = vmatpush1.xpose.msra.mxu0 0.0
  %56 = vmatprep.subr.mxu0 0.0
  %57 = vmatpush1.xpose.msra.mxu0 0.0
  %58 = vmatprep.subr.mxu0 0.0
  %59 = vmatpush1.xpose.msra.mxu0 0.0
  %60 = vmatprep.subr.mxu0 0.0
  %61 = vmatpush1.xpose.msra.mxu0 0.0
  %62 = vmatprep.subr.mxu0 0.0
  %63 = vmatpush1.xpose.msra.mxu0 0.0
  %64 = vmatprep.subr.mxu0 0.0
  %65 = vmatpush1.xpose.msra.mxu0 0.0
  %66 = vmatprep.subr.mxu0 0.0
  %67 = vmatpush1.xpose.msra.mxu0 0.0
  %68 = vmatprep.subr.mxu0 0.0
  %69 = vmatpush1.xpose.msra.mxu0 0.0
  %70 = vmatprep.subr.mxu0 0.0
  %71 = vmatpush1.xpose.msra.mxu0 0.0
  %72 = vmatprep.subr.mxu0 0.0
  %73 = vmatpush1.xpose.msra.mxu0 0.0
  %74 = vmatprep.subr.mxu0 0.0
  %75 = vmatpush1.xpose.msra.mxu0 0.0
  %76 = vmatprep.subr.mxu0 0.0
  %77 = vmatpush1.xpose.msra.mxu0 0.0
  %78 = vmatprep.subr.mxu0 0.0
  %79 = vmatpush1.xpose.msra.mxu0 0.0
  %80 = vmatprep.subr.mxu0 0.0
  %81 = vmatpush1.xpose.msra.mxu0 %v48
  %82 = vmatprep.subr.mxu0 0.0
  %83 = vmatpush2.xpose.msra.mxu0 0.0
  %84 = vmatprep.subr.mxu0 0.0
  %85 = vmatpush2.xpose.msra.mxu0 0.0
  %86 = vmatprep.subr.mxu0 0.0
  %87 = vmatpush2.xpose.msra.mxu0 0.0
  %88 = vmatprep.subr.mxu0 0.0
  %89 = vmatpush2.xpose.msra.mxu0 0.0
  %90 = vmatprep.subr.mxu0 0.0
  %91 = vmatpush2.xpose.msra.mxu0 0.0
  %92 = vmatprep.subr.mxu0 0.0
  %93 = vmatpush2.xpose.msra.mxu0 0.0
  %94 = vmatprep.subr.mxu0 0.0
  %95 = vmatpush2.xpose.msra.mxu0 0.0
  %96 = vmatprep.subr.mxu0 0.0
  %97 = vmatpush2.xpose.msra.mxu0 0.0
  %98 = vmatprep.subr.mxu0 0.0
  %99 = vmatpush2.xpose.msra.mxu0 0.0
  %100 = vmatprep.subr.mxu0 0.0
  %101 = vmatpush2.xpose.msra.mxu0 0.0
  %102 = vmatprep.subr.mxu0 0.0
  %103 = vmatpush2.xpose.msra.mxu0 0.0
  %104 = vmatprep.subr.mxu0 0.0
  %105 = vmatpush2.xpose.msra.mxu0 0.0
  %106 = vmatprep.subr.mxu0 0.0
  %107 = vmatpush2.xpose.msra.mxu0 0.0
  %108 = vmatprep.subr.mxu0 0.0
  %109 = vmatpush2.xpose.msra.mxu0 0.0
  %110 = vmatprep.subr.mxu0 0.0
  %111 = vmatpush2.xpose.msra.mxu0 0.0
  %112 = vmatprep.subr.mxu0 0.0
  %113 = vmatpush2.xpose.msra.mxu0 0.0
  %114 = vmatprep.mubr.f32.mxu0 0.0
  %115 = vmatmul.mubr.f32.gmra.mxu0 %v45
  %v116 = vpop.f32.mrf.mxu0
  %v117 = vadd.f32 0.0, %v116
  %v118 = vpop.f32.mrf.mxu0
  %119 = vdwg.mxu0
  %v121 = vsel %vm43, %v18, 0
  %v124 = vsel %vm43, %v26, 0
  %126 = vmatprep.subr.mxu0 0.0
  %127 = vmatpush1.xpose.msra.mxu0 0.0
  %128 = vmatprep.subr.mxu0 0.0
  %129 = vmatpush1.xpose.msra.mxu0 0.0
  %130 = vmatprep.subr.mxu0 0.0
  %131 = vmatpush1.xpose.msra.mxu0 0.0
  %132 = vmatprep.subr.mxu0 0.0
  %133 = vmatpush1.xpose.msra.mxu0 0.0
  %134 = vmatprep.subr.mxu0 0.0
  %135 = vmatpush1.xpose.msra.mxu0 0.0
  %136 = vmatprep.subr.mxu0 0.0
  %137 = vmatpush1.xpose.msra.mxu0 0.0
  %138 = vmatprep.subr.mxu0 0.0
  %139 = vmatpush1.xpose.msra.mxu0 0.0
  %140 = vmatprep.subr.mxu0 0.0
  %141 = vmatpush1.xpose.msra.mxu0 0.0
  %142 = vmatprep.subr.mxu0 0.0
  %143 = vmatpush1.xpose.msra.mxu0 0.0
  %144 = vmatprep.subr.mxu0 0.0
  %145 = vmatpush1.xpose.msra.mxu0 0.0
  %146 = vmatprep.subr.mxu0 0.0
  %147 = vmatpush1.xpose.msra.mxu0 0.0
  %148 = vmatprep.subr.mxu0 0.0
  %149 = vmatpush1.xpose.msra.mxu0 0.0
  %150 = vmatprep.subr.mxu0 0.0
  %151 = vmatpush1.xpose.msra.mxu0 0.0
  %152 = vmatprep.subr.mxu0 0.0
  %153 = vmatpush1.xpose.msra.mxu0 0.0
  %154 = vmatprep.subr.mxu0 0.0
  %155 = vmatpush1.xpose.msra.mxu0 0.0
  %156 = vmatprep.subr.mxu0 0.0
  %157 = vmatpush1.xpose.msra.mxu0 %v124
  %158 = vmatprep.subr.mxu0 0.0
  %159 = vmatpush2.xpose.msra.mxu0 0.0
  %160 = vmatprep.subr.mxu0 0.0
  %161 = vmatpush2.xpose.msra.mxu0 0.0
  %162 = vmatprep.subr.mxu0 0.0
  %163 = vmatpush2.xpose.msra.mxu0 0.0
  %164 = vmatprep.subr.mxu0 0.0
  %165 = vmatpush2.xpose.msra.mxu0 0.0
  %166 = vmatprep.subr.mxu0 0.0
  %167 = vmatpush2.xpose.msra.mxu0 0.0
  %168 = vmatprep.subr.mxu0 0.0
  %169 = vmatpush2.xpose.msra.mxu0 0.0
  %170 = vmatprep.subr.mxu0 0.0
  %171 = vmatpush2.xpose.msra.mxu0 0.0
  %172 = vmatprep.subr.mxu0 0.0
  %173 = vmatpush2.xpose.msra.mxu0 0.0
  %174 = vmatprep.subr.mxu0 0.0
  %175 = vmatpush2.xpose.msra.mxu0 0.0
  %176 = vmatprep.subr.mxu0 0.0
  %177 = vmatpush2.xpose.msra.mxu0 0.0
  %178 = vmatprep.subr.mxu0 0.0
  %179 = vmatpush2.xpose.msra.mxu0 0.0
  %180 = vmatprep.subr.mxu0 0.0
  %181 = vmatpush2.xpose.msra.mxu0 0.0
  %182 = vmatprep.subr.mxu0 0.0
  %183 = vmatpush2.xpose.msra.mxu0 0.0
  %184 = vmatprep.subr.mxu0 0.0
  %185 = vmatpush2.xpose.msra.mxu0 0.0
  %186 = vmatprep.subr.mxu0 0.0
  %187 = vmatpush2.xpose.msra.mxu0 0.0
  %188 = vmatprep.subr.mxu0 0.0
  %189 = vmatpush2.xpose.msra.mxu0 0.0
  %190 = vmatprep.mubr.f32.mxu0 0.0
  %191 = vmatmul.mubr.f32.gmra.mxu0 %v121
  %v192 = vpop.f32.mrf.mxu0
  %v193 = vadd.f32 0.0, %v192
  %v194 = vpop.f32.mrf.mxu0
  %195 = vdwg.mxu0
  %v197 = vsel %vm43, %v19, 0
  %v200 = vsel %vm43, %v27, 0
  %202 = vmatprep.subr.mxu0 0.0
  %203 = vmatpush1.xpose.msra.mxu0 0.0
  %204 = vmatprep.subr.mxu0 0.0
  %205 = vmatpush1.xpose.msra.mxu0 0.0
  %206 = vmatprep.subr.mxu0 0.0
  %207 = vmatpush1.xpose.msra.mxu0 0.0
  %208 = vmatprep.subr.mxu0 0.0
  %209 = vmatpush1.xpose.msra.mxu0 0.0
  %210 = vmatprep.subr.mxu0 0.0
  %211 = vmatpush1.xpose.msra.mxu0 0.0
  %212 = vmatprep.subr.mxu0 0.0
  %213 = vmatpush1.xpose.msra.mxu0 0.0
  %214 = vmatprep.subr.mxu0 0.0
  %215 = vmatpush1.xpose.msra.mxu0 0.0
  %216 = vmatprep.subr.mxu0 0.0
  %217 = vmatpush1.xpose.msra.mxu0 0.0
  %218 = vmatprep.subr.mxu0 0.0
  %219 = vmatpush1.xpose.msra.mxu0 0.0
  %220 = vmatprep.subr.mxu0 0.0
  %221 = vmatpush1.xpose.msra.mxu0 0.0
  %222 = vmatprep.subr.mxu0 0.0
  %223 = vmatpush1.xpose.msra.mxu0 0.0
  %224 = vmatprep.subr.mxu0 0.0
  %225 = vmatpush1.xpose.msra.mxu0 0.0
  %226 = vmatprep.subr.mxu0 0.0
  %227 = vmatpush1.xpose.msra.mxu0 0.0
  %228 = vmatprep.subr.mxu0 0.0
  %229 = vmatpush1.xpose.msra.mxu0 0.0
  %230 = vmatprep.subr.mxu0 0.0
  %231 = vmatpush1.xpose.msra.mxu0 0.0
  %232 = vmatprep.subr.mxu0 0.0
  %233 = vmatpush1.xpose.msra.mxu0 %v200
  %234 = vmatprep.subr.mxu0 0.0
  %235 = vmatpush2.xpose.msra.mxu0 0.0
  %236 = vmatprep.subr.mxu0 0.0
  %237 = vmatpush2.xpose.msra.mxu0 0.0
  %238 = vmatprep.subr.mxu0 0.0
  %239 = vmatpush2.xpose.msra.mxu0 0.0
  %240 = vmatprep.subr.mxu0 0.0
  %241 = vmatpush2.xpose.msra.mxu0 0.0
  %242 = vmatprep.subr.mxu0 0.0
  %243 = vmatpush2.xpose.msra.mxu0 0.0
  %244 = vmatprep.subr.mxu0 0.0
  %245 = vmatpush2.xpose.msra.mxu0 0.0
  %246 = vmatprep.subr.mxu0 0.0
  %247 = vmatpush2.xpose.msra.mxu0 0.0
  %248 = vmatprep.subr.mxu0 0.0
  %249 = vmatpush2.xpose.msra.mxu0 0.0
  %250 = vmatprep.subr.mxu0 0.0
  %251 = vmatpush2.xpose.msra.mxu0 0.0
  %252 = vmatprep.subr.mxu0 0.0
  %253 = vmatpush2.xpose.msra.mxu0 0.0
  %254 = vmatprep.subr.mxu0 0.0
  %255 = vmatpush2.xpose.msra.mxu0 0.0
  %256 = vmatprep.subr.mxu0 0.0
  %257 = vmatpush2.xpose.msra.mxu0 0.0
  %258 = vmatprep.subr.mxu0 0.0
  %259 = vmatpush2.xpose.msra.mxu0 0.0
  %260 = vmatprep.subr.mxu0 0.0
  %261 = vmatpush2.xpose.msra.mxu0 0.0
  %262 = vmatprep.subr.mxu0 0.0
  %263 = vmatpush2.xpose.msra.mxu0 0.0
  %264 = vmatprep.subr.mxu0 0.0
  %265 = vmatpush2.xpose.msra.mxu0 0.0
  %266 = vmatprep.mubr.f32.mxu0 0.0
  %267 = vmatmul.mubr.f32.gmra.mxu0 %v197
  %v268 = vpop.f32.mrf.mxu0
  %v269 = vadd.f32 0.0, %v268
  %v270 = vpop.f32.mrf.mxu0
  %271 = vdwg.mxu0
  %v273 = vsel %vm43, %v20, 0
  %v276 = vsel %vm43, %v28, 0
  %278 = vmatprep.subr.mxu0 0.0
  %279 = vmatpush1.xpose.msra.mxu0 0.0
  %280 = vmatprep.subr.mxu0 0.0
  %281 = vmatpush1.xpose.msra.mxu0 0.0
  %282 = vmatprep.subr.mxu0 0.0
  %283 = vmatpush1.xpose.msra.mxu0 0.0
  %284 = vmatprep.subr.mxu0 0.0
  %285 = vmatpush1.xpose.msra.mxu0 0.0
  %286 = vmatprep.subr.mxu0 0.0
  %287 = vmatpush1.xpose.msra.mxu0 0.0
  %288 = vmatprep.subr.mxu0 0.0
  %289 = vmatpush1.xpose.msra.mxu0 0.0
  %290 = vmatprep.subr.mxu0 0.0
  %291 = vmatpush1.xpose.msra.mxu0 0.0
  %292 = vmatprep.subr.mxu0 0.0
  %293 = vmatpush1.xpose.msra.mxu0 0.0
  %294 = vmatprep.subr.mxu0 0.0
  %295 = vmatpush1.xpose.msra.mxu0 0.0
  %296 = vmatprep.subr.mxu0 0.0
  %297 = vmatpush1.xpose.msra.mxu0 0.0
  %298 = vmatprep.subr.mxu0 0.0
  %299 = vmatpush1.xpose.msra.mxu0 0.0
  %300 = vmatprep.subr.mxu0 0.0
  %301 = vmatpush1.xpose.msra.mxu0 0.0
  %302 = vmatprep.subr.mxu0 0.0
  %303 = vmatpush1.xpose.msra.mxu0 0.0
  %304 = vmatprep.subr.mxu0 0.0
  %305 = vmatpush1.xpose.msra.mxu0 0.0
  %306 = vmatprep.subr.mxu0 0.0
  %307 = vmatpush1.xpose.msra.mxu0 0.0
  %308 = vmatprep.subr.mxu0 0.0
  %309 = vmatpush1.xpose.msra.mxu0 %v276
  %310 = vmatprep.subr.mxu0 0.0
  %311 = vmatpush2.xpose.msra.mxu0 0.0
  %312 = vmatprep.subr.mxu0 0.0
  %313 = vmatpush2.xpose.msra.mxu0 0.0
  %314 = vmatprep.subr.mxu0 0.0
  %315 = vmatpush2.xpose.msra.mxu0 0.0
  %316 = vmatprep.subr.mxu0 0.0
  %317 = vmatpush2.xpose.msra.mxu0 0.0
  %318 = vmatprep.subr.mxu0 0.0
  %319 = vmatpush2.xpose.msra.mxu0 0.0
  %320 = vmatprep.subr.mxu0 0.0
  %321 = vmatpush2.xpose.msra.mxu0 0.0
  %322 = vmatprep.subr.mxu0 0.0
  %323 = vmatpush2.xpose.msra.mxu0 0.0
  %324 = vmatprep.subr.mxu0 0.0
  %325 = vmatpush2.xpose.msra.mxu0 0.0
  %326 = vmatprep.subr.mxu0 0.0
  %327 = vmatpush2.xpose.msra.mxu0 0.0
  %328 = vmatprep.subr.mxu0 0.0
  %329 = vmatpush2.xpose.msra.mxu0 0.0
  %330 = vmatprep.subr.mxu0 0.0
  %331 = vmatpush2.xpose.msra.mxu0 0.0
  %332 = vmatprep.subr.mxu0 0.0
  %333 = vmatpush2.xpose.msra.mxu0 0.0
  %334 = vmatprep.subr.mxu0 0.0
  %335 = vmatpush2.xpose.msra.mxu0 0.0
  %336 = vmatprep.subr.mxu0 0.0
  %337 = vmatpush2.xpose.msra.mxu0 0.0
  %338 = vmatprep.subr.mxu0 0.0
  %339 = vmatpush2.xpose.msra.mxu0 0.0
  %340 = vmatprep.subr.mxu0 0.0
  %341 = vmatpush2.xpose.msra.mxu0 0.0
  %342 = vmatprep.mubr.f32.mxu0 0.0
  %343 = vmatmul.mubr.f32.gmra.mxu0 %v273
  %v344 = vpop.f32.mrf.mxu0
  %v345 = vadd.f32 0.0, %v344
  %v346 = vpop.f32.mrf.mxu0
  %347 = vdwg.mxu0
  %v349 = vsel %vm43, %v21, 0
  %v352 = vsel %vm43, %v29, 0
  %354 = vmatprep.subr.mxu0 0.0
  %355 = vmatpush1.xpose.msra.mxu0 0.0
  %356 = vmatprep.subr.mxu0 0.0
  %357 = vmatpush1.xpose.msra.mxu0 0.0
  %358 = vmatprep.subr.mxu0 0.0
  %359 = vmatpush1.xpose.msra.mxu0 0.0
  %360 = vmatprep.subr.mxu0 0.0
  %361 = vmatpush1.xpose.msra.mxu0 0.0
  %362 = vmatprep.subr.mxu0 0.0
  %363 = vmatpush1.xpose.msra.mxu0 0.0
  %364 = vmatprep.subr.mxu0 0.0
  %365 = vmatpush1.xpose.msra.mxu0 0.0
  %366 = vmatprep.subr.mxu0 0.0
  %367 = vmatpush1.xpose.msra.mxu0 0.0
  %368 = vmatprep.subr.mxu0 0.0
  %369 = vmatpush1.xpose.msra.mxu0 0.0
  %370 = vmatprep.subr.mxu0 0.0
  %371 = vmatpush1.xpose.msra.mxu0 0.0
  %372 = vmatprep.subr.mxu0 0.0
  %373 = vmatpush1.xpose.msra.mxu0 0.0
  %374 = vmatprep.subr.mxu0 0.0
  %375 = vmatpush1.xpose.msra.mxu0 0.0
  %376 = vmatprep.subr.mxu0 0.0
  %377 = vmatpush1.xpose.msra.mxu0 0.0
  %378 = vmatprep.subr.mxu0 0.0
  %379 = vmatpush1.xpose.msra.mxu0 0.0
  %380 = vmatprep.subr.mxu0 0.0
  %381 = vmatpush1.xpose.msra.mxu0 0.0
  %382 = vmatprep.subr.mxu0 0.0
  %383 = vmatpush1.xpose.msra.mxu0 0.0
  %384 = vmatprep.subr.mxu0 0.0
  %385 = vmatpush1.xpose.msra.mxu0 %v352
  %386 = vmatprep.subr.mxu0 0.0
  %387 = vmatpush2.xpose.msra.mxu0 0.0
  %388 = vmatprep.subr.mxu0 0.0
  %389 = vmatpush2.xpose.msra.mxu0 0.0
  %390 = vmatprep.subr.mxu0 0.0
  %391 = vmatpush2.xpose.msra.mxu0 0.0
  %392 = vmatprep.subr.mxu0 0.0
  %393 = vmatpush2.xpose.msra.mxu0 0.0
  %394 = vmatprep.subr.mxu0 0.0
  %395 = vmatpush2.xpose.msra.mxu0 0.0
  %396 = vmatprep.subr.mxu0 0.0
  %397 = vmatpush2.xpose.msra.mxu0 0.0
  %398 = vmatprep.subr.mxu0 0.0
  %399 = vmatpush2.xpose.msra.mxu0 0.0
  %400 = vmatprep.subr.mxu0 0.0
  %401 = vmatpush2.xpose.msra.mxu0 0.0
  %402 = vmatprep.subr.mxu0 0.0
  %403 = vmatpush2.xpose.msra.mxu0 0.0
  %404 = vmatprep.subr.mxu0 0.0
  %405 = vmatpush2.xpose.msra.mxu0 0.0
  %406 = vmatprep.subr.mxu0 0.0
  %407 = vmatpush2.xpose.msra.mxu0 0.0
  %408 = vmatprep.subr.mxu0 0.0
  %409 = vmatpush2.xpose.msra.mxu0 0.0
  %410 = vmatprep.subr.mxu0 0.0
  %411 = vmatpush2.xpose.msra.mxu0 0.0
  %412 = vmatprep.subr.mxu0 0.0
  %413 = vmatpush2.xpose.msra.mxu0 0.0
  %414 = vmatprep.subr.mxu0 0.0
  %415 = vmatpush2.xpose.msra.mxu0 0.0
  %416 = vmatprep.subr.mxu0 0.0
  %417 = vmatpush2.xpose.msra.mxu0 0.0
  %418 = vmatprep.mubr.f32.mxu0 0.0
  %419 = vmatmul.mubr.f32.gmra.mxu0 %v349
  %v420 = vpop.f32.mrf.mxu0
  %v421 = vadd.f32 0.0, %v420
  %v422 = vpop.f32.mrf.mxu0
  %423 = vdwg.mxu0
  %v425 = vsel %vm43, %v22, 0
  %v428 = vsel %vm43, %v30, 0
  %430 = vmatprep.subr.mxu0 0.0
  %431 = vmatpush1.xpose.msra.mxu0 0.0
  %432 = vmatprep.subr.mxu0 0.0
  %433 = vmatpush1.xpose.msra.mxu0 0.0
  %434 = vmatprep.subr.mxu0 0.0
  %435 = vmatpush1.xpose.msra.mxu0 0.0
  %436 = vmatprep.subr.mxu0 0.0
  %437 = vmatpush1.xpose.msra.mxu0 0.0
  %438 = vmatprep.subr.mxu0 0.0
  %439 = vmatpush1.xpose.msra.mxu0 0.0
  %440 = vmatprep.subr.mxu0 0.0
  %441 = vmatpush1.xpose.msra.mxu0 0.0
  %442 = vmatprep.subr.mxu0 0.0
  %443 = vmatpush1.xpose.msra.mxu0 0.0
  %444 = vmatprep.subr.mxu0 0.0
  %445 = vmatpush1.xpose.msra.mxu0 0.0
  %446 = vmatprep.subr.mxu0 0.0
  %447 = vmatpush1.xpose.msra.mxu0 0.0
  %448 = vmatprep.subr.mxu0 0.0
  %449 = vmatpush1.xpose.msra.mxu0 0.0
  %450 = vmatprep.subr.mxu0 0.0
  %451 = vmatpush1.xpose.msra.mxu0 0.0
  %452 = vmatprep.subr.mxu0 0.0
  %453 = vmatpush1.xpose.msra.mxu0 0.0
  %454 = vmatprep.subr.mxu0 0.0
  %455 = vmatpush1.xpose.msra.mxu0 0.0
  %456 = vmatprep.subr.mxu0 0.0
  %457 = vmatpush1.xpose.msra.mxu0 0.0
  %458 = vmatprep.subr.mxu0 0.0
  %459 = vmatpush1.xpose.msra.mxu0 0.0
  %460 = vmatprep.subr.mxu0 0.0
  %461 = vmatpush1.xpose.msra.mxu0 %v428
  %462 = vmatprep.subr.mxu0 0.0
  %463 = vmatpush2.xpose.msra.mxu0 0.0
  %464 = vmatprep.subr.mxu0 0.0
  %465 = vmatpush2.xpose.msra.mxu0 0.0
  %466 = vmatprep.subr.mxu0 0.0
  %467 = vmatpush2.xpose.msra.mxu0 0.0
  %468 = vmatprep.subr.mxu0 0.0
  %469 = vmatpush2.xpose.msra.mxu0 0.0
  %470 = vmatprep.subr.mxu0 0.0
  %471 = vmatpush2.xpose.msra.mxu0 0.0
  %472 = vmatprep.subr.mxu0 0.0
  %473 = vmatpush2.xpose.msra.mxu0 0.0
  %474 = vmatprep.subr.mxu0 0.0
  %475 = vmatpush2.xpose.msra.mxu0 0.0
  %476 = vmatprep.subr.mxu0 0.0
  %477 = vmatpush2.xpose.msra.mxu0 0.0
  %478 = vmatprep.subr.mxu0 0.0
  %479 = vmatpush2.xpose.msra.mxu0 0.0
  %480 = vmatprep.subr.mxu0 0.0
  %481 = vmatpush2.xpose.msra.mxu0 0.0
  %482 = vmatprep.subr.mxu0 0.0
  %483 = vmatpush2.xpose.msra.mxu0 0.0
  %484 = vmatprep.subr.mxu0 0.0
  %485 = vmatpush2.xpose.msra.mxu0 0.0
  %486 = vmatprep.subr.mxu0 0.0
  %487 = vmatpush2.xpose.msra.mxu0 0.0
  %488 = vmatprep.subr.mxu0 0.0
  %489 = vmatpush2.xpose.msra.mxu0 0.0
  %490 = vmatprep.subr.mxu0 0.0
  %491 = vmatpush2.xpose.msra.mxu0 0.0
  %492 = vmatprep.subr.mxu0 0.0
  %493 = vmatpush2.xpose.msra.mxu0 0.0
  %494 = vmatprep.mubr.f32.mxu0 0.0
  %495 = vmatmul.mubr.f32.gmra.mxu0 %v425
  %v496 = vpop.f32.mrf.mxu0
  %v497 = vadd.f32 0.0, %v496
  %v498 = vpop.f32.mrf.mxu0
  %499 = vdwg.mxu0
  %v501 = vsel %vm43, %v23, 0
  %v504 = vsel %vm43, %v31, 0
  %506 = vmatprep.subr.mxu0 0.0
  %507 = vmatpush1.xpose.msra.mxu0 0.0
  %508 = vmatprep.subr.mxu0 0.0
  %509 = vmatpush1.xpose.msra.mxu0 0.0
  %510 = vmatprep.subr.mxu0 0.0
  %511 = vmatpush1.xpose.msra.mxu0 0.0
  %512 = vmatprep.subr.mxu0 0.0
  %513 = vmatpush1.xpose.msra.mxu0 0.0
  %514 = vmatprep.subr.mxu0 0.0
  %515 = vmatpush1.xpose.msra.mxu0 0.0
  %516 = vmatprep.subr.mxu0 0.0
  %517 = vmatpush1.xpose.msra.mxu0 0.0
  %518 = vmatprep.subr.mxu0 0.0
  %519 = vmatpush1.xpose.msra.mxu0 0.0
  %520 = vmatprep.subr.mxu0 0.0
  %521 = vmatpush1.xpose.msra.mxu0 0.0
  %522 = vmatprep.subr.mxu0 0.0
  %523 = vmatpush1.xpose.msra.mxu0 0.0
  %524 = vmatprep.subr.mxu0 0.0
  %525 = vmatpush1.xpose.msra.mxu0 0.0
  %526 = vmatprep.subr.mxu0 0.0
  %527 = vmatpush1.xpose.msra.mxu0 0.0
  %528 = vmatprep.subr.mxu0 0.0
  %529 = vmatpush1.xpose.msra.mxu0 0.0
  %530 = vmatprep.subr.mxu0 0.0
  %531 = vmatpush1.xpose.msra.mxu0 0.0
  %532 = vmatprep.subr.mxu0 0.0
  %533 = vmatpush1.xpose.msra.mxu0 0.0
  %534 = vmatprep.subr.mxu0 0.0
  %535 = vmatpush1.xpose.msra.mxu0 0.0
  %536 = vmatprep.subr.mxu0 0.0
  %537 = vmatpush1.xpose.msra.mxu0 %v504
  %538 = vmatprep.subr.mxu0 0.0
  %539 = vmatpush2.xpose.msra.mxu0 0.0
  %540 = vmatprep.subr.mxu0 0.0
  %541 = vmatpush2.xpose.msra.mxu0 0.0
  %542 = vmatprep.subr.mxu0 0.0
  %543 = vmatpush2.xpose.msra.mxu0 0.0
  %544 = vmatprep.subr.mxu0 0.0
  %545 = vmatpush2.xpose.msra.mxu0 0.0
  %546 = vmatprep.subr.mxu0 0.0
  %547 = vmatpush2.xpose.msra.mxu0 0.0
  %548 = vmatprep.subr.mxu0 0.0
  %549 = vmatpush2.xpose.msra.mxu0 0.0
  %550 = vmatprep.subr.mxu0 0.0
  %551 = vmatpush2.xpose.msra.mxu0 0.0
  %552 = vmatprep.subr.mxu0 0.0
  %553 = vmatpush2.xpose.msra.mxu0 0.0
  %554 = vmatprep.subr.mxu0 0.0
  %555 = vmatpush2.xpose.msra.mxu0 0.0
  %556 = vmatprep.subr.mxu0 0.0
  %557 = vmatpush2.xpose.msra.mxu0 0.0
  %558 = vmatprep.subr.mxu0 0.0
  %559 = vmatpush2.xpose.msra.mxu0 0.0
  %560 = vmatprep.subr.mxu0 0.0
  %561 = vmatpush2.xpose.msra.mxu0 0.0
  %562 = vmatprep.subr.mxu0 0.0
  %563 = vmatpush2.xpose.msra.mxu0 0.0
  %564 = vmatprep.subr.mxu0 0.0
  %565 = vmatpush2.xpose.msra.mxu0 0.0
  %566 = vmatprep.subr.mxu0 0.0
  %567 = vmatpush2.xpose.msra.mxu0 0.0
  %568 = vmatprep.subr.mxu0 0.0
  %569 = vmatpush2.xpose.msra.mxu0 0.0
  %570 = vmatprep.mubr.f32.mxu0 0.0
  %571 = vmatmul.mubr.f32.gmra.mxu0 %v501
  %v572 = vpop.f32.mrf.mxu0
  %v573 = vadd.f32 0.0, %v572
  %v574 = vpop.f32.mrf.mxu0
  %575 = vdwg.mxu0
  %v577 = vsel %vm43, %v24, 0
  %v580 = vsel %vm43, %v32, 0
  %582 = vmatprep.subr.mxu0 0.0
  %583 = vmatpush1.xpose.msra.mxu0 0.0
  %584 = vmatprep.subr.mxu0 0.0
  %585 = vmatpush1.xpose.msra.mxu0 0.0
  %586 = vmatprep.subr.mxu0 0.0
  %587 = vmatpush1.xpose.msra.mxu0 0.0
  %588 = vmatprep.subr.mxu0 0.0
  %589 = vmatpush1.xpose.msra.mxu0 0.0
  %590 = vmatprep.subr.mxu0 0.0
  %591 = vmatpush1.xpose.msra.mxu0 0.0
  %592 = vmatprep.subr.mxu0 0.0
  %593 = vmatpush1.xpose.msra.mxu0 0.0
  %594 = vmatprep.subr.mxu0 0.0
  %595 = vmatpush1.xpose.msra.mxu0 0.0
  %596 = vmatprep.subr.mxu0 0.0
  %597 = vmatpush1.xpose.msra.mxu0 0.0
  %598 = vmatprep.subr.mxu0 0.0
  %599 = vmatpush1.xpose.msra.mxu0 0.0
  %600 = vmatprep.subr.mxu0 0.0
  %601 = vmatpush1.xpose.msra.mxu0 0.0
  %602 = vmatprep.subr.mxu0 0.0
  %603 = vmatpush1.xpose.msra.mxu0 0.0
  %604 = vmatprep.subr.mxu0 0.0
  %605 = vmatpush1.xpose.msra.mxu0 0.0
  %606 = vmatprep.subr.mxu0 0.0
  %607 = vmatpush1.xpose.msra.mxu0 0.0
  %608 = vmatprep.subr.mxu0 0.0
  %609 = vmatpush1.xpose.msra.mxu0 0.0
  %610 = vmatprep.subr.mxu0 0.0
  %611 = vmatpush1.xpose.msra.mxu0 0.0
  %612 = vmatprep.subr.mxu0 0.0
  %613 = vmatpush1.xpose.msra.mxu0 %v580
  %614 = vmatprep.subr.mxu0 0.0
  %615 = vmatpush2.xpose.msra.mxu0 0.0
  %616 = vmatprep.subr.mxu0 0.0
  %617 = vmatpush2.xpose.msra.mxu0 0.0
  %618 = vmatprep.subr.mxu0 0.0
  %619 = vmatpush2.xpose.msra.mxu0 0.0
  %620 = vmatprep.subr.mxu0 0.0
  %621 = vmatpush2.xpose.msra.mxu0 0.0
  %622 = vmatprep.subr.mxu0 0.0
  %623 = vmatpush2.xpose.msra.mxu0 0.0
  %624 = vmatprep.subr.mxu0 0.0
  %625 = vmatpush2.xpose.msra.mxu0 0.0
  %626 = vmatprep.subr.mxu0 0.0
  %627 = vmatpush2.xpose.msra.mxu0 0.0
  %628 = vmatprep.subr.mxu0 0.0
  %629 = vmatpush2.xpose.msra.mxu0 0.0
  %630 = vmatprep.subr.mxu0 0.0
  %631 = vmatpush2.xpose.msra.mxu0 0.0
  %632 = vmatprep.subr.mxu0 0.0
  %633 = vmatpush2.xpose.msra.mxu0 0.0
  %634 = vmatprep.subr.mxu0 0.0
  %635 = vmatpush2.xpose.msra.mxu0 0.0
  %636 = vmatprep.subr.mxu0 0.0
  %637 = vmatpush2.xpose.msra.mxu0 0.0
  %638 = vmatprep.subr.mxu0 0.0
  %639 = vmatpush2.xpose.msra.mxu0 0.0
  %640 = vmatprep.subr.mxu0 0.0
  %641 = vmatpush2.xpose.msra.mxu0 0.0
  %642 = vmatprep.subr.mxu0 0.0
  %643 = vmatpush2.xpose.msra.mxu0 0.0
  %644 = vmatprep.subr.mxu0 0.0
  %645 = vmatpush2.xpose.msra.mxu0 0.0
  %646 = vmatprep.mubr.f32.mxu0 0.0
  %647 = vmatmul.mubr.f32.gmra.mxu0 %v577
  %v648 = vpop.f32.mrf.mxu0
  %v649 = vadd.f32 0.0, %v648
  %v650 = vpop.f32.mrf.mxu0
  %651 = vdwg.mxu0
  %v652 = vmul.f32 %v117, 0.70710677
  %v653 = vmul.f32 %v193, 0.70710677
  %v654 = vmul.f32 %v269, 0.70710677
  %v655 = vmul.f32 %v345, 0.70710677
  %v656 = vmul.f32 %v421, 0.70710677
  %v657 = vmul.f32 %v497, 0.70710677
  %v658 = vmul.f32 %v573, 0.70710677
  %v659 = vmul.f32 %v649, 0.70710677
  %vm660 = vcmp.gt.f32.partialorder %v41, 0.5
  %vm661 = vcmp.gt.f32.partialorder %v42, 0.5
  %v662 = vsel %vm660, -inf, %v652
  %v663 = vsel %vm661, -inf, %v653
  %v664 = vsel %vm660, -inf, %v654
  %v665 = vsel %vm661, -inf, %v655
  %v666 = vsel %vm660, -inf, %v656
  %v667 = vsel %vm661, -inf, %v657
  %v668 = vsel %vm660, -inf, %v658
  %v669 = vsel %vm661, -inf, %v659
  %v670 = vsel %vm43, %v662, -inf
  %671 = vmax.xlane.f32.xlu0 %v670
  %v672 = vpop.xlane.xlu0 %671
  %v673 = vsel %vm43, %v663, -inf
  %674 = vmax.xlane.f32.xlu0 %v673
  %v675 = vpop.xlane.xlu0 %674
  %v676 = vsel %vm43, %v664, -inf
  %677 = vmax.xlane.f32.xlu0 %v676
  %v678 = vpop.xlane.xlu0 %677
  %v679 = vsel %vm43, %v665, -inf
  %680 = vmax.xlane.f32.xlu0 %v679
  %v681 = vpop.xlane.xlu0 %680
  %v682 = vsel %vm43, %v666, -inf
  %683 = vmax.xlane.f32.xlu0 %v682
  %v684 = vpop.xlane.xlu0 %683
  %v685 = vsel %vm43, %v667, -inf
  %686 = vmax.xlane.f32.xlu0 %v685
  %v687 = vpop.xlane.xlu0 %686
  %v688 = vsel %vm43, %v668, -inf
  %689 = vmax.xlane.f32.xlu0 %v688
  %v690 = vpop.xlane.xlu0 %689
  %v691 = vsel %vm43, %v669, -inf
  %692 = vmax.xlane.f32.xlu0 %v691
  %v693 = vpop.xlane.xlu0 %692
  %v694 = vsub.f32 %v662, %v672
  %v695 = vsub.f32 %v663, %v675
  %v696 = vsub.f32 %v664, %v678
  %v697 = vsub.f32 %v665, %v681
  %v698 = vsub.f32 %v666, %v684
  %v699 = vsub.f32 %v667, %v687
  %v700 = vsub.f32 %v668, %v690
  %v701 = vsub.f32 %v669, %v693
  %v702 = vmul.f32 %v694, 1.442695
  %v703 = vpow.pop %v702
  %v704 = vmul.f32 %v695, 1.442695
  %v705 = vpow.pop %v704
  %v706 = vmul.f32 %v696, 1.442695
  %v707 = vpow.pop %v706
  %v708 = vmul.f32 %v697, 1.442695
  %v709 = vpow.pop %v708
  %v710 = vmul.f32 %v698, 1.442695
  %v711 = vpow.pop %v710
  %v712 = vmul.f32 %v699, 1.442695
  %v713 = vpow.pop %v712
  %v714 = vmul.f32 %v700, 1.442695
  %v715 = vpow.pop %v714
  %v716 = vmul.f32 %v701, 1.442695
  %v717 = vpow.pop %v716
  %v718 = vsel %vm43, %v703, 0.0
  %719 = vadd.xlane.f32.xlu0 %v718
  %v720 = vpop.xlane.xlu0 %719
  %v721 = vsel %vm43, %v705, 0.0
  %722 = vadd.xlane.f32.xlu0 %v721
  %v723 = vpop.xlane.xlu0 %722
  %v724 = vsel %vm43, %v707, 0.0
  %725 = vadd.xlane.f32.xlu0 %v724
  %v726 = vpop.xlane.xlu0 %725
  %v727 = vsel %vm43, %v709, 0.0
  %728 = vadd.xlane.f32.xlu0 %v727
  %v729 = vpop.xlane.xlu0 %728
  %v730 = vsel %vm43, %v711, 0.0
  %731 = vadd.xlane.f32.xlu0 %v730
  %v732 = vpop.xlane.xlu0 %731
  %v733 = vsel %vm43, %v713, 0.0
  %734 = vadd.xlane.f32.xlu0 %v733
  %v735 = vpop.xlane.xlu0 %734
  %v736 = vsel %vm43, %v715, 0.0
  %737 = vadd.xlane.f32.xlu0 %v736
  %v738 = vpop.xlane.xlu0 %737
  %v739 = vsel %vm43, %v717, 0.0
  %740 = vadd.xlane.f32.xlu0 %v739
  %v741 = vpop.xlane.xlu0 %740
  %v742 = vrcp.pop %v720
  %v743 = vmul.f32 %v703, %v742
  %v744 = vrcp.pop %v723
  %v745 = vmul.f32 %v705, %v744
  %v746 = vrcp.pop %v726
  %v747 = vmul.f32 %v707, %v746
  %v748 = vrcp.pop %v729
  %v749 = vmul.f32 %v709, %v748
  %v750 = vrcp.pop %v732
  %v751 = vmul.f32 %v711, %v750
  %v752 = vrcp.pop %v735
  %v753 = vmul.f32 %v713, %v752
  %v754 = vrcp.pop %v738
  %v755 = vmul.f32 %v715, %v754
  %v756 = vrcp.pop %v741
  %v757 = vmul.f32 %v717, %v756
  %v759 = vsel %vm43, %v743, 0
  %761 = vmatprep.subr.mxu0 0.0
  %762 = vmatpush1.msra.mxu0 0.0
  %763 = vmatprep.subr.mxu0 0.0
  %764 = vmatpush1.msra.mxu0 0.0
  %765 = vmatprep.subr.mxu0 0.0
  %766 = vmatpush1.msra.mxu0 0.0
  %767 = vmatprep.subr.mxu0 0.0
  %768 = vmatpush1.msra.mxu0 0.0
  %769 = vmatprep.subr.mxu0 0.0
  %770 = vmatpush1.msra.mxu0 0.0
  %771 = vmatprep.subr.mxu0 0.0
  %772 = vmatpush1.msra.mxu0 0.0
  %773 = vmatprep.subr.mxu0 0.0
  %774 = vmatpush1.msra.mxu0 0.0
  %775 = vmatprep.subr.mxu0 0.0
  %776 = vmatpush1.msra.mxu0 0.0
  %777 = vmatprep.subr.mxu0 0.0
  %778 = vmatpush1.msra.mxu0 0.0
  %779 = vmatprep.subr.mxu0 0.0
  %780 = vmatpush1.msra.mxu0 0.0
  %781 = vmatprep.subr.mxu0 0.0
  %782 = vmatpush1.msra.mxu0 0.0
  %783 = vmatprep.subr.mxu0 0.0
  %784 = vmatpush1.msra.mxu0 0.0
  %785 = vmatprep.subr.mxu0 0.0
  %786 = vmatpush1.msra.mxu0 0.0
  %787 = vmatprep.subr.mxu0 0.0
  %788 = vmatpush1.msra.mxu0 0.0
  %789 = vmatprep.subr.mxu0 0.0
  %790 = vmatpush1.msra.mxu0 0.0
  %791 = vmatprep.subr.mxu0 0.0
  %792 = vmatpush1.msra.mxu0 %v33
  %793 = vmatprep.subr.mxu0 0.0
  %794 = vmatpush2.msra.mxu0 0.0
  %795 = vmatprep.subr.mxu0 0.0
  %796 = vmatpush2.msra.mxu0 0.0
  %797 = vmatprep.subr.mxu0 0.0
  %798 = vmatpush2.msra.mxu0 0.0
  %799 = vmatprep.subr.mxu0 0.0
  %800 = vmatpush2.msra.mxu0 0.0
  %801 = vmatprep.subr.mxu0 0.0
  %802 = vmatpush2.msra.mxu0 0.0
  %803 = vmatprep.subr.mxu0 0.0
  %804 = vmatpush2.msra.mxu0 0.0
  %805 = vmatprep.subr.mxu0 0.0
  %806 = vmatpush2.msra.mxu0 0.0
  %807 = vmatprep.subr.mxu0 0.0
  %808 = vmatpush2.msra.mxu0 0.0
  %809 = vmatprep.subr.mxu0 0.0
  %810 = vmatpush2.msra.mxu0 0.0
  %811 = vmatprep.subr.mxu0 0.0
  %812 = vmatpush2.msra.mxu0 0.0
  %813 = vmatprep.subr.mxu0 0.0
  %814 = vmatpush2.msra.mxu0 0.0
  %815 = vmatprep.subr.mxu0 0.0
  %816 = vmatpush2.msra.mxu0 0.0
  %817 = vmatprep.subr.mxu0 0.0
  %818 = vmatpush2.msra.mxu0 0.0
  %819 = vmatprep.subr.mxu0 0.0
  %820 = vmatpush2.msra.mxu0 0.0
  %821 = vmatprep.subr.mxu0 0.0
  %822 = vmatpush2.msra.mxu0 0.0
  %823 = vmatprep.subr.mxu0 0.0
  %824 = vmatpush2.msra.mxu0 0.0
  %825 = vmatprep.mubr.f32.mxu0 0.0
  %826 = vmatmul.mubr.f32.gmra.mxu0 %v759
  %v827 = vpop.f32.mrf.mxu0
  %v828 = vadd.f32 0.0, %v827
  %v829 = vpop.f32.mrf.mxu0
  %830 = vdwg.mxu0
  %v832 = vsel %vm43, %v745, 0
  %834 = vmatprep.subr.mxu0 0.0
  %835 = vmatpush1.msra.mxu0 0.0
  %836 = vmatprep.subr.mxu0 0.0
  %837 = vmatpush1.msra.mxu0 0.0
  %838 = vmatprep.subr.mxu0 0.0
  %839 = vmatpush1.msra.mxu0 0.0
  %840 = vmatprep.subr.mxu0 0.0
  %841 = vmatpush1.msra.mxu0 0.0
  %842 = vmatprep.subr.mxu0 0.0
  %843 = vmatpush1.msra.mxu0 0.0
  %844 = vmatprep.subr.mxu0 0.0
  %845 = vmatpush1.msra.mxu0 0.0
  %846 = vmatprep.subr.mxu0 0.0
  %847 = vmatpush1.msra.mxu0 0.0
  %848 = vmatprep.subr.mxu0 0.0
  %849 = vmatpush1.msra.mxu0 0.0
  %850 = vmatprep.subr.mxu0 0.0
  %851 = vmatpush1.msra.mxu0 0.0
  %852 = vmatprep.subr.mxu0 0.0
  %853 = vmatpush1.msra.mxu0 0.0
  %854 = vmatprep.subr.mxu0 0.0
  %855 = vmatpush1.msra.mxu0 0.0
  %856 = vmatprep.subr.mxu0 0.0
  %857 = vmatpush1.msra.mxu0 0.0
  %858 = vmatprep.subr.mxu0 0.0
  %859 = vmatpush1.msra.mxu0 0.0
  %860 = vmatprep.subr.mxu0 0.0
  %861 = vmatpush1.msra.mxu0 0.0
  %862 = vmatprep.subr.mxu0 0.0
  %863 = vmatpush1.msra.mxu0 0.0
  %864 = vmatprep.subr.mxu0 0.0
  %865 = vmatpush1.msra.mxu0 %v34
  %866 = vmatprep.subr.mxu0 0.0
  %867 = vmatpush2.msra.mxu0 0.0
  %868 = vmatprep.subr.mxu0 0.0
  %869 = vmatpush2.msra.mxu0 0.0
  %870 = vmatprep.subr.mxu0 0.0
  %871 = vmatpush2.msra.mxu0 0.0
  %872 = vmatprep.subr.mxu0 0.0
  %873 = vmatpush2.msra.mxu0 0.0
  %874 = vmatprep.subr.mxu0 0.0
  %875 = vmatpush2.msra.mxu0 0.0
  %876 = vmatprep.subr.mxu0 0.0
  %877 = vmatpush2.msra.mxu0 0.0
  %878 = vmatprep.subr.mxu0 0.0
  %879 = vmatpush2.msra.mxu0 0.0
  %880 = vmatprep.subr.mxu0 0.0
  %881 = vmatpush2.msra.mxu0 0.0
  %882 = vmatprep.subr.mxu0 0.0
  %883 = vmatpush2.msra.mxu0 0.0
  %884 = vmatprep.subr.mxu0 0.0
  %885 = vmatpush2.msra.mxu0 0.0
  %886 = vmatprep.subr.mxu0 0.0
  %887 = vmatpush2.msra.mxu0 0.0
  %888 = vmatprep.subr.mxu0 0.0
  %889 = vmatpush2.msra.mxu0 0.0
  %890 = vmatprep.subr.mxu0 0.0
  %891 = vmatpush2.msra.mxu0 0.0
  %892 = vmatprep.subr.mxu0 0.0
  %893 = vmatpush2.msra.mxu0 0.0
  %894 = vmatprep.subr.mxu0 0.0
  %895 = vmatpush2.msra.mxu0 0.0
  %896 = vmatprep.subr.mxu0 0.0
  %897 = vmatpush2.msra.mxu0 0.0
  %898 = vmatprep.mubr.f32.mxu0 0.0
  %899 = vmatmul.mubr.f32.gmra.mxu0 %v832
  %v900 = vpop.f32.mrf.mxu0
  %v901 = vadd.f32 0.0, %v900
  %v902 = vpop.f32.mrf.mxu0
  %903 = vdwg.mxu0
  %v905 = vsel %vm43, %v747, 0
  %907 = vmatprep.subr.mxu0 0.0
  %908 = vmatpush1.msra.mxu0 0.0
  %909 = vmatprep.subr.mxu0 0.0
  %910 = vmatpush1.msra.mxu0 0.0
  %911 = vmatprep.subr.mxu0 0.0
  %912 = vmatpush1.msra.mxu0 0.0
  %913 = vmatprep.subr.mxu0 0.0
  %914 = vmatpush1.msra.mxu0 0.0
  %915 = vmatprep.subr.mxu0 0.0
  %916 = vmatpush1.msra.mxu0 0.0
  %917 = vmatprep.subr.mxu0 0.0
  %918 = vmatpush1.msra.mxu0 0.0
  %919 = vmatprep.subr.mxu0 0.0
  %920 = vmatpush1.msra.mxu0 0.0
  %921 = vmatprep.subr.mxu0 0.0
  %922 = vmatpush1.msra.mxu0 0.0
  %923 = vmatprep.subr.mxu0 0.0
  %924 = vmatpush1.msra.mxu0 0.0
  %925 = vmatprep.subr.mxu0 0.0
  %926 = vmatpush1.msra.mxu0 0.0
  %927 = vmatprep.subr.mxu0 0.0
  %928 = vmatpush1.msra.mxu0 0.0
  %929 = vmatprep.subr.mxu0 0.0
  %930 = vmatpush1.msra.mxu0 0.0
  %931 = vmatprep.subr.mxu0 0.0
  %932 = vmatpush1.msra.mxu0 0.0
  %933 = vmatprep.subr.mxu0 0.0
  %934 = vmatpush1.msra.mxu0 0.0
  %935 = vmatprep.subr.mxu0 0.0
  %936 = vmatpush1.msra.mxu0 0.0
  %937 = vmatprep.subr.mxu0 0.0
  %938 = vmatpush1.msra.mxu0 %v35
  %939 = vmatprep.subr.mxu0 0.0
  %940 = vmatpush2.msra.mxu0 0.0
  %941 = vmatprep.subr.mxu0 0.0
  %942 = vmatpush2.msra.mxu0 0.0
  %943 = vmatprep.subr.mxu0 0.0
  %944 = vmatpush2.msra.mxu0 0.0
  %945 = vmatprep.subr.mxu0 0.0
  %946 = vmatpush2.msra.mxu0 0.0
  %947 = vmatprep.subr.mxu0 0.0
  %948 = vmatpush2.msra.mxu0 0.0
  %949 = vmatprep.subr.mxu0 0.0
  %950 = vmatpush2.msra.mxu0 0.0
  %951 = vmatprep.subr.mxu0 0.0
  %952 = vmatpush2.msra.mxu0 0.0
  %953 = vmatprep.subr.mxu0 0.0
  %954 = vmatpush2.msra.mxu0 0.0
  %955 = vmatprep.subr.mxu0 0.0
  %956 = vmatpush2.msra.mxu0 0.0
  %957 = vmatprep.subr.mxu0 0.0
  %958 = vmatpush2.msra.mxu0 0.0
  %959 = vmatprep.subr.mxu0 0.0
  %960 = vmatpush2.msra.mxu0 0.0
  %961 = vmatprep.subr.mxu0 0.0
  %962 = vmatpush2.msra.mxu0 0.0
  %963 = vmatprep.subr.mxu0 0.0
  %964 = vmatpush2.msra.mxu0 0.0
  %965 = vmatprep.subr.mxu0 0.0
  %966 = vmatpush2.msra.mxu0 0.0
  %967 = vmatprep.subr.mxu0 0.0
  %968 = vmatpush2.msra.mxu0 0.0
  %969 = vmatprep.subr.mxu0 0.0
  %970 = vmatpush2.msra.mxu0 0.0
  %971 = vmatprep.mubr.f32.mxu0 0.0
  %972 = vmatmul.mubr.f32.gmra.mxu0 %v905
  %v973 = vpop.f32.mrf.mxu0
  %v974 = vadd.f32 0.0, %v973
  %v975 = vpop.f32.mrf.mxu0
  %976 = vdwg.mxu0
  %v978 = vsel %vm43, %v749, 0
  %980 = vmatprep.subr.mxu0 0.0
  %981 = vmatpush1.msra.mxu0 0.0
  %982 = vmatprep.subr.mxu0 0.0
  %983 = vmatpush1.msra.mxu0 0.0
  %984 = vmatprep.subr.mxu0 0.0
  %985 = vmatpush1.msra.mxu0 0.0
  %986 = vmatprep.subr.mxu0 0.0
  %987 = vmatpush1.msra.mxu0 0.0
  %988 = vmatprep.subr.mxu0 0.0
  %989 = vmatpush1.msra.mxu0 0.0
  %990 = vmatprep.subr.mxu0 0.0
  %991 = vmatpush1.msra.mxu0 0.0
  %992 = vmatprep.subr.mxu0 0.0
  %993 = vmatpush1.msra.mxu0 0.0
  %994 = vmatprep.subr.mxu0 0.0
  %995 = vmatpush1.msra.mxu0 0.0
  %996 = vmatprep.subr.mxu0 0.0
  %997 = vmatpush1.msra.mxu0 0.0
  %998 = vmatprep.subr.mxu0 0.0
  %999 = vmatpush1.msra.mxu0 0.0
  %1000 = vmatprep.subr.mxu0 0.0
  %1001 = vmatpush1.msra.mxu0 0.0
  %1002 = vmatprep.subr.mxu0 0.0
  %1003 = vmatpush1.msra.mxu0 0.0
  %1004 = vmatprep.subr.mxu0 0.0
  %1005 = vmatpush1.msra.mxu0 0.0
  %1006 = vmatprep.subr.mxu0 0.0
  %1007 = vmatpush1.msra.mxu0 0.0
  %1008 = vmatprep.subr.mxu0 0.0
  %1009 = vmatpush1.msra.mxu0 0.0
  %1010 = vmatprep.subr.mxu0 0.0
  %1011 = vmatpush1.msra.mxu0 %v36
  %1012 = vmatprep.subr.mxu0 0.0
  %1013 = vmatpush2.msra.mxu0 0.0
  %1014 = vmatprep.subr.mxu0 0.0
  %1015 = vmatpush2.msra.mxu0 0.0
  %1016 = vmatprep.subr.mxu0 0.0
  %1017 = vmatpush2.msra.mxu0 0.0
  %1018 = vmatprep.subr.mxu0 0.0
  %1019 = vmatpush2.msra.mxu0 0.0
  %1020 = vmatprep.subr.mxu0 0.0
  %1021 = vmatpush2.msra.mxu0 0.0
  %1022 = vmatprep.subr.mxu0 0.0
  %1023 = vmatpush2.msra.mxu0 0.0
  %1024 = vmatprep.subr.mxu0 0.0
  %1025 = vmatpush2.msra.mxu0 0.0
  %1026 = vmatprep.subr.mxu0 0.0
  %1027 = vmatpush2.msra.mxu0 0.0
  %1028 = vmatprep.subr.mxu0 0.0
  %1029 = vmatpush2.msra.mxu0 0.0
  %1030 = vmatprep.subr.mxu0 0.0
  %1031 = vmatpush2.msra.mxu0 0.0
  %1032 = vmatprep.subr.mxu0 0.0
  %1033 = vmatpush2.msra.mxu0 0.0
  %1034 = vmatprep.subr.mxu0 0.0
  %1035 = vmatpush2.msra.mxu0 0.0
  %1036 = vmatprep.subr.mxu0 0.0
  %1037 = vmatpush2.msra.mxu0 0.0
  %1038 = vmatprep.subr.mxu0 0.0
  %1039 = vmatpush2.msra.mxu0 0.0
  %1040 = vmatprep.subr.mxu0 0.0
  %1041 = vmatpush2.msra.mxu0 0.0
  %1042 = vmatprep.subr.mxu0 0.0
  %1043 = vmatpush2.msra.mxu0 0.0
  %1044 = vmatprep.mubr.f32.mxu0 0.0
  %1045 = vmatmul.mubr.f32.gmra.mxu0 %v978
  %v1046 = vpop.f32.mrf.mxu0
  %v1047 = vadd.f32 0.0, %v1046
  %v1048 = vpop.f32.mrf.mxu0
  %1049 = vdwg.mxu0
  %v1051 = vsel %vm43, %v751, 0
  %1053 = vmatprep.subr.mxu0 0.0
  %1054 = vmatpush1.msra.mxu0 0.0
  %1055 = vmatprep.subr.mxu0 0.0
  %1056 = vmatpush1.msra.mxu0 0.0
  %1057 = vmatprep.subr.mxu0 0.0
  %1058 = vmatpush1.msra.mxu0 0.0
  %1059 = vmatprep.subr.mxu0 0.0
  %1060 = vmatpush1.msra.mxu0 0.0
  %1061 = vmatprep.subr.mxu0 0.0
  %1062 = vmatpush1.msra.mxu0 0.0
  %1063 = vmatprep.subr.mxu0 0.0
  %1064 = vmatpush1.msra.mxu0 0.0
  %1065 = vmatprep.subr.mxu0 0.0
  %1066 = vmatpush1.msra.mxu0 0.0
  %1067 = vmatprep.subr.mxu0 0.0
  %1068 = vmatpush1.msra.mxu0 0.0
  %1069 = vmatprep.subr.mxu0 0.0
  %1070 = vmatpush1.msra.mxu0 0.0
  %1071 = vmatprep.subr.mxu0 0.0
  %1072 = vmatpush1.msra.mxu0 0.0
  %1073 = vmatprep.subr.mxu0 0.0
  %1074 = vmatpush1.msra.mxu0 0.0
  %1075 = vmatprep.subr.mxu0 0.0
  %1076 = vmatpush1.msra.mxu0 0.0
  %1077 = vmatprep.subr.mxu0 0.0
  %1078 = vmatpush1.msra.mxu0 0.0
  %1079 = vmatprep.subr.mxu0 0.0
  %1080 = vmatpush1.msra.mxu0 0.0
  %1081 = vmatprep.subr.mxu0 0.0
  %1082 = vmatpush1.msra.mxu0 0.0
  %1083 = vmatprep.subr.mxu0 0.0
  %1084 = vmatpush1.msra.mxu0 %v37
  %1085 = vmatprep.subr.mxu0 0.0
  %1086 = vmatpush2.msra.mxu0 0.0
  %1087 = vmatprep.subr.mxu0 0.0
  %1088 = vmatpush2.msra.mxu0 0.0
  %1089 = vmatprep.subr.mxu0 0.0
  %1090 = vmatpush2.msra.mxu0 0.0
  %1091 = vmatprep.subr.mxu0 0.0
  %1092 = vmatpush2.msra.mxu0 0.0
  %1093 = vmatprep.subr.mxu0 0.0
  %1094 = vmatpush2.msra.mxu0 0.0
  %1095 = vmatprep.subr.mxu0 0.0
  %1096 = vmatpush2.msra.mxu0 0.0
  %1097 = vmatprep.subr.mxu0 0.0
  %1098 = vmatpush2.msra.mxu0 0.0
  %1099 = vmatprep.subr.mxu0 0.0
  %1100 = vmatpush2.msra.mxu0 0.0
  %1101 = vmatprep.subr.mxu0 0.0
  %1102 = vmatpush2.msra.mxu0 0.0
  %1103 = vmatprep.subr.mxu0 0.0
  %1104 = vmatpush2.msra.mxu0 0.0
  %1105 = vmatprep.subr.mxu0 0.0
  %1106 = vmatpush2.msra.mxu0 0.0
  %1107 = vmatprep.subr.mxu0 0.0
  %1108 = vmatpush2.msra.mxu0 0.0
  %1109 = vmatprep.subr.mxu0 0.0
  %1110 = vmatpush2.msra.mxu0 0.0
  %1111 = vmatprep.subr.mxu0 0.0
  %1112 = vmatpush2.msra.mxu0 0.0
  %1113 = vmatprep.subr.mxu0 0.0
  %1114 = vmatpush2.msra.mxu0 0.0
  %1115 = vmatprep.subr.mxu0 0.0
  %1116 = vmatpush2.msra.mxu0 0.0
  %1117 = vmatprep.mubr.f32.mxu0 0.0
  %1118 = vmatmul.mubr.f32.gmra.mxu0 %v1051
  %v1119 = vpop.f32.mrf.mxu0
  %v1120 = vadd.f32 0.0, %v1119
  %v1121 = vpop.f32.mrf.mxu0
  %1122 = vdwg.mxu0
  %v1124 = vsel %vm43, %v753, 0
  %1126 = vmatprep.subr.mxu0 0.0
  %1127 = vmatpush1.msra.mxu0 0.0
  %1128 = vmatprep.subr.mxu0 0.0
  %1129 = vmatpush1.msra.mxu0 0.0
  %1130 = vmatprep.subr.mxu0 0.0
  %1131 = vmatpush1.msra.mxu0 0.0
  %1132 = vmatprep.subr.mxu0 0.0
  %1133 = vmatpush1.msra.mxu0 0.0
  %1134 = vmatprep.subr.mxu0 0.0
  %1135 = vmatpush1.msra.mxu0 0.0
  %1136 = vmatprep.subr.mxu0 0.0
  %1137 = vmatpush1.msra.mxu0 0.0
  %1138 = vmatprep.subr.mxu0 0.0
  %1139 = vmatpush1.msra.mxu0 0.0
  %1140 = vmatprep.subr.mxu0 0.0
  %1141 = vmatpush1.msra.mxu0 0.0
  %1142 = vmatprep.subr.mxu0 0.0
  %1143 = vmatpush1.msra.mxu0 0.0
  %1144 = vmatprep.subr.mxu0 0.0
  %1145 = vmatpush1.msra.mxu0 0.0
  %1146 = vmatprep.subr.mxu0 0.0
  %1147 = vmatpush1.msra.mxu0 0.0
  %1148 = vmatprep.subr.mxu0 0.0
  %1149 = vmatpush1.msra.mxu0 0.0
  %1150 = vmatprep.subr.mxu0 0.0
  %1151 = vmatpush1.msra.mxu0 0.0
  %1152 = vmatprep.subr.mxu0 0.0
  %1153 = vmatpush1.msra.mxu0 0.0
  %1154 = vmatprep.subr.mxu0 0.0
  %1155 = vmatpush1.msra.mxu0 0.0
  %1156 = vmatprep.subr.mxu0 0.0
  %1157 = vmatpush1.msra.mxu0 %v38
  %1158 = vmatprep.subr.mxu0 0.0
  %1159 = vmatpush2.msra.mxu0 0.0
  %1160 = vmatprep.subr.mxu0 0.0
  %1161 = vmatpush2.msra.mxu0 0.0
  %1162 = vmatprep.subr.mxu0 0.0
  %1163 = vmatpush2.msra.mxu0 0.0
  %1164 = vmatprep.subr.mxu0 0.0
  %1165 = vmatpush2.msra.mxu0 0.0
  %1166 = vmatprep.subr.mxu0 0.0
  %1167 = vmatpush2.msra.mxu0 0.0
  %1168 = vmatprep.subr.mxu0 0.0
  %1169 = vmatpush2.msra.mxu0 0.0
  %1170 = vmatprep.subr.mxu0 0.0
  %1171 = vmatpush2.msra.mxu0 0.0
  %1172 = vmatprep.subr.mxu0 0.0
  %1173 = vmatpush2.msra.mxu0 0.0
  %1174 = vmatprep.subr.mxu0 0.0
  %1175 = vmatpush2.msra.mxu0 0.0
  %1176 = vmatprep.subr.mxu0 0.0
  %1177 = vmatpush2.msra.mxu0 0.0
  %1178 = vmatprep.subr.mxu0 0.0
  %1179 = vmatpush2.msra.mxu0 0.0
  %1180 = vmatprep.subr.mxu0 0.0
  %1181 = vmatpush2.msra.mxu0 0.0
  %1182 = vmatprep.subr.mxu0 0.0
  %1183 = vmatpush2.msra.mxu0 0.0
  %1184 = vmatprep.subr.mxu0 0.0
  %1185 = vmatpush2.msra.mxu0 0.0
  %1186 = vmatprep.subr.mxu0 0.0
  %1187 = vmatpush2.msra.mxu0 0.0
  %1188 = vmatprep.subr.mxu0 0.0
  %1189 = vmatpush2.msra.mxu0 0.0
  %1190 = vmatprep.mubr.f32.mxu0 0.0
  %1191 = vmatmul.mubr.f32.gmra.mxu0 %v1124
  %v1192 = vpop.f32.mrf.mxu0
  %v1193 = vadd.f32 0.0, %v1192
  %v1194 = vpop.f32.mrf.mxu0
  %1195 = vdwg.mxu0
  %v1197 = vsel %vm43, %v755, 0
  %1199 = vmatprep.subr.mxu0 0.0
  %1200 = vmatpush1.msra.mxu0 0.0
  %1201 = vmatprep.subr.mxu0 0.0
  %1202 = vmatpush1.msra.mxu0 0.0
  %1203 = vmatprep.subr.mxu0 0.0
  %1204 = vmatpush1.msra.mxu0 0.0
  %1205 = vmatprep.subr.mxu0 0.0
  %1206 = vmatpush1.msra.mxu0 0.0
  %1207 = vmatprep.subr.mxu0 0.0
  %1208 = vmatpush1.msra.mxu0 0.0
  %1209 = vmatprep.subr.mxu0 0.0
  %1210 = vmatpush1.msra.mxu0 0.0
  %1211 = vmatprep.subr.mxu0 0.0
  %1212 = vmatpush1.msra.mxu0 0.0
  %1213 = vmatprep.subr.mxu0 0.0
  %1214 = vmatpush1.msra.mxu0 0.0
  %1215 = vmatprep.subr.mxu0 0.0
  %1216 = vmatpush1.msra.mxu0 0.0
  %1217 = vmatprep.subr.mxu0 0.0
  %1218 = vmatpush1.msra.mxu0 0.0
  %1219 = vmatprep.subr.mxu0 0.0
  %1220 = vmatpush1.msra.mxu0 0.0
  %1221 = vmatprep.subr.mxu0 0.0
  %1222 = vmatpush1.msra.mxu0 0.0
  %1223 = vmatprep.subr.mxu0 0.0
  %1224 = vmatpush1.msra.mxu0 0.0
  %1225 = vmatprep.subr.mxu0 0.0
  %1226 = vmatpush1.msra.mxu0 0.0
  %1227 = vmatprep.subr.mxu0 0.0
  %1228 = vmatpush1.msra.mxu0 0.0
  %1229 = vmatprep.subr.mxu0 0.0
  %1230 = vmatpush1.msra.mxu0 %v39
  %1231 = vmatprep.subr.mxu0 0.0
  %1232 = vmatpush2.msra.mxu0 0.0
  %1233 = vmatprep.subr.mxu0 0.0
  %1234 = vmatpush2.msra.mxu0 0.0
  %1235 = vmatprep.subr.mxu0 0.0
  %1236 = vmatpush2.msra.mxu0 0.0
  %1237 = vmatprep.subr.mxu0 0.0
  %1238 = vmatpush2.msra.mxu0 0.0
  %1239 = vmatprep.subr.mxu0 0.0
  %1240 = vmatpush2.msra.mxu0 0.0
  %1241 = vmatprep.subr.mxu0 0.0
  %1242 = vmatpush2.msra.mxu0 0.0
  %1243 = vmatprep.subr.mxu0 0.0
  %1244 = vmatpush2.msra.mxu0 0.0
  %1245 = vmatprep.subr.mxu0 0.0
  %1246 = vmatpush2.msra.mxu0 0.0
  %1247 = vmatprep.subr.mxu0 0.0
  %1248 = vmatpush2.msra.mxu0 0.0
  %1249 = vmatprep.subr.mxu0 0.0
  %1250 = vmatpush2.msra.mxu0 0.0
  %1251 = vmatprep.subr.mxu0 0.0
  %1252 = vmatpush2.msra.mxu0 0.0
  %1253 = vmatprep.subr.mxu0 0.0
  %1254 = vmatpush2.msra.mxu0 0.0
  %1255 = vmatprep.subr.mxu0 0.0
  %1256 = vmatpush2.msra.mxu0 0.0
  %1257 = vmatprep.subr.mxu0 0.0
  %1258 = vmatpush2.msra.mxu0 0.0
  %1259 = vmatprep.subr.mxu0 0.0
  %1260 = vmatpush2.msra.mxu0 0.0
  %1261 = vmatprep.subr.mxu0 0.0
  %1262 = vmatpush2.msra.mxu0 0.0
  %1263 = vmatprep.mubr.f32.mxu0 0.0
  %1264 = vmatmul.mubr.f32.gmra.mxu0 %v1197
  %v1265 = vpop.f32.mrf.mxu0
  %v1266 = vadd.f32 0.0, %v1265
  %v1267 = vpop.f32.mrf.mxu0
  %1268 = vdwg.mxu0
  %v1270 = vsel %vm43, %v757, 0
  %1272 = vmatprep.subr.mxu0 0.0
  %1273 = vmatpush1.msra.mxu0 0.0
  %1274 = vmatprep.subr.mxu0 0.0
  %1275 = vmatpush1.msra.mxu0 0.0
  %1276 = vmatprep.subr.mxu0 0.0
  %1277 = vmatpush1.msra.mxu0 0.0
  %1278 = vmatprep.subr.mxu0 0.0
  %1279 = vmatpush1.msra.mxu0 0.0
  %1280 = vmatprep.subr.mxu0 0.0
  %1281 = vmatpush1.msra.mxu0 0.0
  %1282 = vmatprep.subr.mxu0 0.0
  %1283 = vmatpush1.msra.mxu0 0.0
  %1284 = vmatprep.subr.mxu0 0.0
  %1285 = vmatpush1.msra.mxu0 0.0
  %1286 = vmatprep.subr.mxu0 0.0
  %1287 = vmatpush1.msra.mxu0 0.0
  %1288 = vmatprep.subr.mxu0 0.0
  %1289 = vmatpush1.msra.mxu0 0.0
  %1290 = vmatprep.subr.mxu0 0.0
  %1291 = vmatpush1.msra.mxu0 0.0
  %1292 = vmatprep.subr.mxu0 0.0
  %1293 = vmatpush1.msra.mxu0 0.0
  %1294 = vmatprep.subr.mxu0 0.0
  %1295 = vmatpush1.msra.mxu0 0.0
  %1296 = vmatprep.subr.mxu0 0.0
  %1297 = vmatpush1.msra.mxu0 0.0
  %1298 = vmatprep.subr.mxu0 0.0
  %1299 = vmatpush1.msra.mxu0 0.0
  %1300 = vmatprep.subr.mxu0 0.0
  %1301 = vmatpush1.msra.mxu0 0.0
  %1302 = vmatprep.subr.mxu0 0.0
  %1303 = vmatpush1.msra.mxu0 %v40
  %1304 = vmatprep.subr.mxu0 0.0
  %1305 = vmatpush2.msra.mxu0 0.0
  %1306 = vmatprep.subr.mxu0 0.0
  %1307 = vmatpush2.msra.mxu0 0.0
  %1308 = vmatprep.subr.mxu0 0.0
  %1309 = vmatpush2.msra.mxu0 0.0
  %1310 = vmatprep.subr.mxu0 0.0
  %1311 = vmatpush2.msra.mxu0 0.0
  %1312 = vmatprep.subr.mxu0 0.0
  %1313 = vmatpush2.msra.mxu0 0.0
  %1314 = vmatprep.subr.mxu0 0.0
  %1315 = vmatpush2.msra.mxu0 0.0
  %1316 = vmatprep.subr.mxu0 0.0
  %1317 = vmatpush2.msra.mxu0 0.0
  %1318 = vmatprep.subr.mxu0 0.0
  %1319 = vmatpush2.msra.mxu0 0.0
  %1320 = vmatprep.subr.mxu0 0.0
  %1321 = vmatpush2.msra.mxu0 0.0
  %1322 = vmatprep.subr.mxu0 0.0
  %1323 = vmatpush2.msra.mxu0 0.0
  %1324 = vmatprep.subr.mxu0 0.0
  %1325 = vmatpush2.msra.mxu0 0.0
  %1326 = vmatprep.subr.mxu0 0.0
  %1327 = vmatpush2.msra.mxu0 0.0
  %1328 = vmatprep.subr.mxu0 0.0
  %1329 = vmatpush2.msra.mxu0 0.0
  %1330 = vmatprep.subr.mxu0 0.0
  %1331 = vmatpush2.msra.mxu0 0.0
  %1332 = vmatprep.subr.mxu0 0.0
  %1333 = vmatpush2.msra.mxu0 0.0
  %1334 = vmatprep.subr.mxu0 0.0
  %1335 = vmatpush2.msra.mxu0 0.0
  %1336 = vmatprep.mubr.f32.mxu0 0.0
  %1337 = vmatmul.mubr.f32.gmra.mxu0 %v1270
  %v1338 = vpop.f32.mrf.mxu0
  %v1339 = vadd.f32 0.0, %v1338
  %v1340 = vpop.f32.mrf.mxu0
  %1341 = vdwg.mxu0
  %1342 = vst.msk [vmem:[%s4] sm:$0xff] %vm43, %v828
  %1343 = vst.msk [vmem:[%s4 + $0x8] sm:$0xff] %vm43, %v901
  %1344 = vst.msk [vmem:[%s4 + $0x10] sm:$0xff] %vm43, %v974
  %1345 = vst.msk [vmem:[%s4 + $0x18] sm:$0xff] %vm43, %v1047
  %1346 = vst.msk [vmem:[%s4 + $0x20] sm:$0xff] %vm43, %v1120
  %1347 = vst.msk [vmem:[%s4 + $0x28] sm:$0xff] %vm43, %v1193
  %1348 = vst.msk [vmem:[%s4 + $0x30] sm:$0xff] %vm43, %v1266
  %1349 = vst.msk [vmem:[%s4 + $0x38] sm:$0xff] %vm43, %v1339
  // Predicated region
  $region18: #{trm_encoder_forward.6} parent=0 // pred_check
    _
  $region19: #{trm_encoder_forward.6} parent=0 // pred_check_branch
    %1351 = sbr.rel (0) target = $region21
  $region20: #{trm_encoder_forward.6} parent=0 // pred_region
    _
  $region21: #{trm_encoder_forward.6} parent=0 // pred_fallthru
    _
  // Predicated region
  $region22: #{trm_encoder_forward.6} parent=0 // pred_check
    _
  $region23: #{trm_encoder_forward.6} parent=0 // pred_check_branch
    %1353 = sbr.rel (0) target = $region25
  $region24: #{trm_encoder_forward.6} parent=0 // pred_region
    _
  $region25: #{trm_encoder_forward.6} parent=0 // pred_fallthru
    _

// kernel: trm_encoder_forward.9
$region0: #{trm_encoder_forward.9}
  #allocation0 [shape = 'u32[]', space=smem, size = 0x4, offset = 0x4, fixed_abs, tag = 'smem constant byte address 0x4 - core index']
  #allocation1 [shape = 'u32[144,128]{1,0:T(1,128)}', space=vmem, size = 0x12000, scoped, tag = 'internal scratch']
  %s0 = inlined_call_operand.smem [shape: u32[37], index: -1, kind: input, shape index: {}]
  %s1 = sld [smem:[%s0]]
  %s2 = scalar_lea.smem %s0, 1
  %s3 = sld [smem:[%s2]]
  %s4 = scalar_lea.smem %s0, 2
  %s5 = sld [smem:[%s4]]
  %s6 = scalar_lea.smem %s0, 3
  %s7 = sld [smem:[%s6]]
  %s8 = scalar_lea.smem %s0, 4
  %s9 = sld [smem:[%s8]]
  %s10 = scalar_lea.smem %s0, 5
  %s11 = sld [smem:[%s10]]
  %s12 = scalar_lea.smem %s0, 6
  %s13 = sld [smem:[%s12]]
  %s14 = scalar_lea.smem %s0, 7
  %s15 = sld [smem:[%s14]]
  %s16 = scalar_lea.smem %s0, 8
  %s17 = sld [smem:[%s16]]
  %s18 = scalar_lea.smem %s0, 9
  %s19 = sld [smem:[%s18]]
  %s20 = scalar_lea.smem %s0, 10
  %s21 = sld [smem:[%s20]]
  %s22 = scalar_lea.smem %s0, 11
  %s23 = sld [smem:[%s22]]
  %s24 = scalar_lea.smem %s0, 12
  %s25 = sld [smem:[%s24]]
  %s26 = scalar_lea.smem %s0, 13
  %s27 = sld [smem:[%s26]]
  %s28 = scalar_lea.smem %s0, 14
  %s29 = sld [smem:[%s28]]
  %s30 = scalar_lea.smem %s0, 15
  %s31 = sld [smem:[%s30]]
  %s32 = scalar_lea.smem %s0, 16
  %s33 = sld [smem:[%s32]]
  %s34 = scalar_lea.smem %s0, 17
  %s35 = sld [smem:[%s34]]
  %s36 = scalar_lea.smem %s0, 18
  %s37 = sld [smem:[%s36]]
  %s38 = scalar_lea.smem %s0, 19
  %s39 = sld [smem:[%s38]]
  %s40 = scalar_lea.smem %s0, 20
  %s41 = sld [smem:[%s40]]
  %s42 = scalar_lea.smem %s0, 21
  %s43 = sld [smem:[%s42]]
  %s44 = scalar_lea.smem %s0, 22
  %s45 = sld [smem:[%s44]]
  %s46 = scalar_lea.smem %s0, 23
  %s47 = sld [smem:[%s46]]
  %s48 = scalar_lea.smem %s0, 24
  %s49 = sld [smem:[%s48]]
  %s50 = scalar_lea.smem %s0, 25
  %s51 = sld [smem:[%s50]]
  %s52 = scalar_lea.smem %s0, 26
  %s53 = sld [smem:[%s52]]
  %s54 = scalar_lea.smem %s0, 27
  %s55 = sld [smem:[%s54]]
  %s56 = scalar_lea.smem %s0, 28
  %s57 = sld [smem:[%s56]]
  %s58 = scalar_lea.smem %s0, 29
  %s59 = sld [smem:[%s58]]
  %s60 = scalar_lea.smem %s0, 30
  %s61 = sld [smem:[%s60]]
  %s62 = scalar_lea.smem %s0, 31
  %s63 = sld [smem:[%s62]]
  %s64 = scalar_lea.smem %s0, 32
  %s65 = sld [smem:[%s64]]
  %s66 = scalar_lea.smem %s0, 33
  %s67 = sld [smem:[%s66]]
  %s68 = scalar_lea.smem %s0, 34
  %s69 = sld [smem:[%s68]]
  %s70 = scalar_lea.smem %s0, 35
  %s71 = sld [smem:[%s70]]
  %s72 = scalar_lea.smem %s0, 36
  %s73 = sld [smem:[%s72]]
  %74 = xla_tuple %s67, %s69, %s71, %s73
  %s75 = sld [smem:[#allocation0]]
  $region166: #{trm_encoder_forward.9} parent=0
    _
  %s77 = ssub.s32 1, %s75
  %s78 = scalar_select 0, %s77, %s75
  $region1: #{trm_encoder_forward.9} parent=0
    #allocation2 [shape = 'u8[8192]{0}', space=vmem, size = 0x2000, scoped, tag = 'output window, operand 0, single buffered']
    #allocation3 [shape = 's32[1]{0}', space=sflag, size = 0x4, scoped, tag = 'scoped memory for trm_encoder_forward.9']
    #allocation4 [shape = 'u8[8192]{0}', space=vmem, size = 0x2000, scoped, tag = 'output window, operand 1, single buffered']
    #allocation5 [shape = 's32[1]{0}', space=sflag, size = 0x4, scoped, tag = 'scoped memory for trm_encoder_forward.9']
    %79 = vsyncpa [#allocation3], 0
    %80 = vsyncpa [#allocation5], 0
    // Predicated region
    $region2: #{trm_encoder_forward.9} parent=1 // pred_check
      _
    $region3: #{trm_encoder_forward.9} parent=1 // pred_check_branch
      %82 = sbr.rel (0) target = $region5
    $region4: #{trm_encoder_forward.9} parent=1 // pred_region
      _
    $region5: #{trm_encoder_forward.9} parent=1 // pred_fallthru
      _
    // Predicated region
    $region6: #{trm_encoder_forward.9} parent=1 // pred_check
      _
    $region7: #{trm_encoder_forward.9} parent=1 // pred_check_branch
      %84 = sbr.rel (0) target = $region9
    $region8: #{trm_encoder_forward.9} parent=1 // pred_region
      _
    $region9: #{trm_encoder_forward.9} parent=1 // pred_fallthru
      _
    // Predicated region
    $region10: #{trm_encoder_forward.9} parent=1 // pred_check
      _
    $region11: #{trm_encoder_forward.9} parent=1 // pred_check_branch
      %86 = sbr.rel (0) target = $region13
    $region12: #{trm_encoder_forward.9} parent=1 // pred_region
      _
    $region13: #{trm_encoder_forward.9} parent=1 // pred_fallthru
      _
    // Predicated region
    $region14: #{trm_encoder_forward.9} parent=1 // pred_check
      _
    $region15: #{trm_encoder_forward.9} parent=1 // pred_check_branch
      %88 = sbr.rel (0) target = $region17
    $region16: #{trm_encoder_forward.9} parent=1 // pred_region
      _
    $region17: #{trm_encoder_forward.9} parent=1 // pred_fallthru
      _
    // Predicated region
    $region18: #{trm_encoder_forward.9} parent=1 // pred_check
      _
    $region19: #{trm_encoder_forward.9} parent=1 // pred_check_branch
      %90 = sbr.rel (0) target = $region21
    $region20: #{trm_encoder_forward.9} parent=1 // pred_region
      _
    $region21: #{trm_encoder_forward.9} parent=1 // pred_fallthru
      _
    // Predicated region
    $region22: #{trm_encoder_forward.9} parent=1 // pred_check
      _
    $region23: #{trm_encoder_forward.9} parent=1 // pred_check_branch
      %92 = sbr.rel (0) target = $region25
    $region24: #{trm_encoder_forward.9} parent=1 // pred_region
      _
    $region25: #{trm_encoder_forward.9} parent=1 // pred_fallthru
      _
    // Predicated region
    $region26: #{trm_encoder_forward.9} parent=1 // pred_check
      _
    $region27: #{trm_encoder_forward.9} parent=1 // pred_check_branch
      %94 = sbr.rel (0) target = $region29
    $region28: #{trm_encoder_forward.9} parent=1 // pred_region
      _
    $region29: #{trm_encoder_forward.9} parent=1 // pred_fallthru
      _
    // Predicated region
    $region30: #{trm_encoder_forward.9} parent=1 // pred_check
      _
    $region31: #{trm_encoder_forward.9} parent=1 // pred_check_branch
      %96 = sbr.rel (0) target = $region33
    $region32: #{trm_encoder_forward.9} parent=1 // pred_region
      _
    $region33: #{trm_encoder_forward.9} parent=1 // pred_fallthru
      _
    // Predicated region
    $region34: #{trm_encoder_forward.9} parent=1 // pred_check
      _
    $region35: #{trm_encoder_forward.9} parent=1 // pred_check_branch
      %98 = sbr.rel (0) target = $region37
    $region36: #{trm_encoder_forward.9} parent=1 // pred_region
      _
    $region37: #{trm_encoder_forward.9} parent=1 // pred_fallthru
      _
    // Predicated region
    $region38: #{trm_encoder_forward.9} parent=1 // pred_check
      _
    $region39: #{trm_encoder_forward.9} parent=1 // pred_check_branch
      %100 = sbr.rel (0) target = $region41
    $region40: #{trm_encoder_forward.9} parent=1 // pred_region
      _
    $region41: #{trm_encoder_forward.9} parent=1 // pred_fallthru
      _
    // Predicated region
    $region42: #{trm_encoder_forward.9} parent=1 // pred_check
      _
    $region43: #{trm_encoder_forward.9} parent=1 // pred_check_branch
      %102 = sbr.rel (0) target = $region45
    $region44: #{trm_encoder_forward.9} parent=1 // pred_region
      _
    $region45: #{trm_encoder_forward.9} parent=1 // pred_fallthru
      _
    // Predicated region
    $region46: #{trm_encoder_forward.9} parent=1 // pred_check
      _
    $region47: #{trm_encoder_forward.9} parent=1 // pred_check_branch
      %104 = sbr.rel (0) target = $region49
    $region48: #{trm_encoder_forward.9} parent=1 // pred_region
      _
    $region49: #{trm_encoder_forward.9} parent=1 // pred_fallthru
      _
    // Predicated region
    $region50: #{trm_encoder_forward.9} parent=1 // pred_check
      _
    $region51: #{trm_encoder_forward.9} parent=1 // pred_check_branch
      %106 = sbr.rel (0) target = $region53
    $region52: #{trm_encoder_forward.9} parent=1 // pred_region
      _
    $region53: #{trm_encoder_forward.9} parent=1 // pred_fallthru
      _
    // Predicated region
    $region54: #{trm_encoder_forward.9} parent=1 // pred_check
      _
    $region55: #{trm_encoder_forward.9} parent=1 // pred_check_branch
      %108 = sbr.rel (0) target = $region57
    $region56: #{trm_encoder_forward.9} parent=1 // pred_region
      _
    $region57: #{trm_encoder_forward.9} parent=1 // pred_fallthru
      _
    // Predicated region
    $region58: #{trm_encoder_forward.9} parent=1 // pred_check
      _
    $region59: #{trm_encoder_forward.9} parent=1 // pred_check_branch
      %110 = sbr.rel (0) target = $region61
    $region60: #{trm_encoder_forward.9} parent=1 // pred_region
      _
    $region61: #{trm_encoder_forward.9} parent=1 // pred_fallthru
      _
    // Predicated region
    $region62: #{trm_encoder_forward.9} parent=1 // pred_check
      _
    $region63: #{trm_encoder_forward.9} parent=1 // pred_check_branch
      %112 = sbr.rel (0) target = $region65
    $region64: #{trm_encoder_forward.9} parent=1 // pred_region
      _
    $region65: #{trm_encoder_forward.9} parent=1 // pred_fallthru
      _
    // Predicated region
    $region66: #{trm_encoder_forward.9} parent=1 // pred_check
      _
    $region67: #{trm_encoder_forward.9} parent=1 // pred_check_branch
      %114 = sbr.rel (0) target = $region69
    $region68: #{trm_encoder_forward.9} parent=1 // pred_region
      _
    $region69: #{trm_encoder_forward.9} parent=1 // pred_fallthru
      _
    // Predicated region
    $region70: #{trm_encoder_forward.9} parent=1 // pred_check
      _
    $region71: #{trm_encoder_forward.9} parent=1 // pred_check_branch
      %116 = sbr.rel (0) target = $region73
    $region72: #{trm_encoder_forward.9} parent=1 // pred_region
      _
    $region73: #{trm_encoder_forward.9} parent=1 // pred_fallthru
      _
    // Predicated region
    $region74: #{trm_encoder_forward.9} parent=1 // pred_check
      _
    $region75: #{trm_encoder_forward.9} parent=1 // pred_check_branch
      %118 = sbr.rel (0) target = $region77
    $region76: #{trm_encoder_forward.9} parent=1 // pred_region
      _
    $region77: #{trm_encoder_forward.9} parent=1 // pred_fallthru
      _
    // Predicated region
    $region78: #{trm_encoder_forward.9} parent=1 // pred_check
      _
    $region79: #{trm_encoder_forward.9} parent=1 // pred_check_branch
      %120 = sbr.rel (0) target = $region81
    $region80: #{trm_encoder_forward.9} parent=1 // pred_region
      _
    $region81: #{trm_encoder_forward.9} parent=1 // pred_fallthru
      _
    // Predicated region
    $region82: #{trm_encoder_forward.9} parent=1 // pred_check
      _
    $region83: #{trm_encoder_forward.9} parent=1 // pred_check_branch
      %122 = sbr.rel (0) target = $region85
    $region84: #{trm_encoder_forward.9} parent=1 // pred_region
      _
    $region85: #{trm_encoder_forward.9} parent=1 // pred_fallthru
      _
    // Predicated region
    $region86: #{trm_encoder_forward.9} parent=1 // pred_check
      _
    $region87: #{trm_encoder_forward.9} parent=1 // pred_check_branch
      %124 = sbr.rel (0) target = $region89
    $region88: #{trm_encoder_forward.9} parent=1 // pred_region
      _
    $region89: #{trm_encoder_forward.9} parent=1 // pred_fallthru
      _
    // Predicated region
    $region90: #{trm_encoder_forward.9} parent=1 // pred_check
      _
    $region91: #{trm_encoder_forward.9} parent=1 // pred_check_branch
      %126 = sbr.rel (0) target = $region93
    $region92: #{trm_encoder_forward.9} parent=1 // pred_region
      _
    $region93: #{trm_encoder_forward.9} parent=1 // pred_fallthru
      _
    // Predicated region
    $region94: #{trm_encoder_forward.9} parent=1 // pred_check
      _
    $region95: #{trm_encoder_forward.9} parent=1 // pred_check_branch
      %128 = sbr.rel (0) target = $region97
    $region96: #{trm_encoder_forward.9} parent=1 // pred_region
      _
    $region97: #{trm_encoder_forward.9} parent=1 // pred_fallthru
      _
    // Predicated region
    $region98: #{trm_encoder_forward.9} parent=1 // pred_check
      _
    $region99: #{trm_encoder_forward.9} parent=1 // pred_check_branch
      %130 = sbr.rel (0) target = $region101
    $region100: #{trm_encoder_forward.9} parent=1 // pred_region
      _
    $region101: #{trm_encoder_forward.9} parent=1 // pred_fallthru
      _
    // Predicated region
    $region102: #{trm_encoder_forward.9} parent=1 // pred_check
      _
    $region103: #{trm_encoder_forward.9} parent=1 // pred_check_branch
      %132 = sbr.rel (0) target = $region105
    $region104: #{trm_encoder_forward.9} parent=1 // pred_region
      _
    $region105: #{trm_encoder_forward.9} parent=1 // pred_fallthru
      _
    // Predicated region
    $region106: #{trm_encoder_forward.9} parent=1 // pred_check
      _
    $region107: #{trm_encoder_forward.9} parent=1 // pred_check_branch
      %134 = sbr.rel (0) target = $region109
    $region108: #{trm_encoder_forward.9} parent=1 // pred_region
      _
    $region109: #{trm_encoder_forward.9} parent=1 // pred_fallthru
      _
    // Predicated region
    $region110: #{trm_encoder_forward.9} parent=1 // pred_check
      _
    $region111: #{trm_encoder_forward.9} parent=1 // pred_check_branch
      %136 = sbr.rel (0) target = $region113
    $region112: #{trm_encoder_forward.9} parent=1 // pred_region
      _
    $region113: #{trm_encoder_forward.9} parent=1 // pred_fallthru
      _
    // Predicated region
    $region114: #{trm_encoder_forward.9} parent=1 // pred_check
      _
    $region115: #{trm_encoder_forward.9} parent=1 // pred_check_branch
      %138 = sbr.rel (0) target = $region117
    $region116: #{trm_encoder_forward.9} parent=1 // pred_region
      _
    $region117: #{trm_encoder_forward.9} parent=1 // pred_fallthru
      _
    // Predicated region
    $region118: #{trm_encoder_forward.9} parent=1 // pred_check
      _
    $region119: #{trm_encoder_forward.9} parent=1 // pred_check_branch
      %140 = sbr.rel (0) target = $region121
    $region120: #{trm_encoder_forward.9} parent=1 // pred_region
      _
    $region121: #{trm_encoder_forward.9} parent=1 // pred_fallthru
      _
    // Predicated region
    $region122: #{trm_encoder_forward.9} parent=1 // pred_check
      _
    $region123: #{trm_encoder_forward.9} parent=1 // pred_check_branch
      %142 = sbr.rel (0) target = $region125
    $region124: #{trm_encoder_forward.9} parent=1 // pred_region
      _
    $region125: #{trm_encoder_forward.9} parent=1 // pred_fallthru
      _
    // Predicated region
    $region126: #{trm_encoder_forward.9} parent=1 // pred_check
      _
    $region127: #{trm_encoder_forward.9} parent=1 // pred_check_branch
      %144 = sbr.rel (0) target = $region129
    $region128: #{trm_encoder_forward.9} parent=1 // pred_region
      _
    $region129: #{trm_encoder_forward.9} parent=1 // pred_fallthru
      _
    // Predicated region
    $region130: #{trm_encoder_forward.9} parent=1 // pred_check
      _
    $region131: #{trm_encoder_forward.9} parent=1 // pred_check_branch
      %146 = sbr.rel (0) target = $region133
    $region132: #{trm_encoder_forward.9} parent=1 // pred_region
      _
    $region133: #{trm_encoder_forward.9} parent=1 // pred_fallthru
      _
    %v147 = vld [vmem:[%s1] sm:$0xff]
    %v148 = vld [vmem:[%s1 + $0x8] sm:$0xff]
    %v149 = vld [vmem:[%s3] sm:$0xff]
    %v150 = vld [vmem:[%s3 + $0x8] sm:$0xff]
    %v151 = vld [vmem:[%s5] sm:$0xff]
    %v152 = vld [vmem:[%s5 + $0x8] sm:$0xff]
    %v153 = vld [vmem:[%s5 + $0x10] sm:$0xff]
    %v154 = vld [vmem:[%s5 + $0x18] sm:$0xff]
    %v155 = vld [vmem:[%s7] sm:$0x1]
    %v156 = vld [vmem:[%s9] sm:$0x1]
    %v157 = vld [vmem:[%s11] sm:$0x1]
    %v158 = vld [vmem:[%s13] sm:$0xff]
    %v159 = vld [vmem:[%s13 + $0x8] sm:$0xff]
    %v160 = vld [vmem:[%s13 + $0x10] sm:$0xff]
    %v161 = vld [vmem:[%s13 + $0x18] sm:$0xff]
    %v162 = vld [vmem:[%s15] sm:$0x1]
    %v163 = vld [vmem:[%s17] sm:$0xff]
    %v164 = vld [vmem:[%s17 + $0x8] sm:$0xff]
    %v165 = vld [vmem:[%s17 + $0x10] sm:$0xff]
    %v166 = vld [vmem:[%s17 + $0x18] sm:$0xff]
    %v167 = vld [vmem:[%s17 + $0x20] sm:$0xff]
    %v168 = vld [vmem:[%s17 + $0x28] sm:$0xff]
    %v169 = vld [vmem:[%s17 + $0x30] sm:$0xff]
    %v170 = vld [vmem:[%s17 + $0x38] sm:$0xff]
    %v171 = vld [vmem:[%s19] sm:$0x1]
    %v172 = vld [vmem:[%s21] sm:$0x1]
    %v173 = vld [vmem:[%s23] sm:$0x1]
    %v175 = vlaneseq
    %v176 = vshrl.u32 %v175, 7
    %v177 = vsub.s32 0, %v176
    %v178 = vrot.slane %v155, %v177
    %vm180 = vcmask 261120
    %v182 = vsel %vm180, %v149, 0
    %v185 = vsel %vm180, %v150, 0
    %187 = vmatprep.subr.mxu0 0.0
    %188 = vmatpush1.msra.mxu0 0.0
    %189 = vmatprep.subr.mxu0 0.0
    %190 = vmatpush1.msra.mxu0 0.0
    %191 = vmatprep.subr.mxu0 0.0
    %192 = vmatpush1.msra.mxu0 0.0
    %193 = vmatprep.subr.mxu0 0.0
    %194 = vmatpush1.msra.mxu0 0.0
    %195 = vmatprep.subr.mxu0 0.0
    %196 = vmatpush1.msra.mxu0 0.0
    %197 = vmatprep.subr.mxu0 0.0
    %198 = vmatpush1.msra.mxu0 0.0
    %199 = vmatprep.subr.mxu0 0.0
    %200 = vmatpush1.msra.mxu0 0.0
    %201 = vmatprep.subr.mxu0 0.0
    %202 = vmatpush1.msra.mxu0 0.0
    %203 = vmatprep.subr.mxu0 0.0
    %204 = vmatpush1.msra.mxu0 0.0
    %205 = vmatprep.subr.mxu0 0.0
    %206 = vmatpush1.msra.mxu0 0.0
    %207 = vmatprep.subr.mxu0 0.0
    %208 = vmatpush1.msra.mxu0 0.0
    %209 = vmatprep.subr.mxu0 0.0
    %210 = vmatpush1.msra.mxu0 0.0
    %211 = vmatprep.subr.mxu0 0.0
    %212 = vmatpush1.msra.mxu0 %v154
    %213 = vmatprep.subr.mxu0 0.0
    %214 = vmatpush1.msra.mxu0 %v153
    %215 = vmatprep.subr.mxu0 0.0
    %216 = vmatpush1.msra.mxu0 %v152
    %217 = vmatprep.subr.mxu0 0.0
    %218 = vmatpush1.msra.mxu0 %v151
    %219 = vmatprep.subr.mxu0 0.0
    %220 = vmatpush2.msra.mxu0 0.0
    %221 = vmatprep.subr.mxu0 0.0
    %222 = vmatpush2.msra.mxu0 0.0
    %223 = vmatprep.subr.mxu0 0.0
    %224 = vmatpush2.msra.mxu0 0.0
    %225 = vmatprep.subr.mxu0 0.0
    %226 = vmatpush2.msra.mxu0 0.0
    %227 = vmatprep.subr.mxu0 0.0
    %228 = vmatpush2.msra.mxu0 0.0
    %229 = vmatprep.subr.mxu0 0.0
    %230 = vmatpush2.msra.mxu0 0.0
    %231 = vmatprep.subr.mxu0 0.0
    %232 = vmatpush2.msra.mxu0 0.0
    %233 = vmatprep.subr.mxu0 0.0
    %234 = vmatpush2.msra.mxu0 0.0
    %235 = vmatprep.subr.mxu0 0.0
    %236 = vmatpush2.msra.mxu0 0.0
    %237 = vmatprep.subr.mxu0 0.0
    %238 = vmatpush2.msra.mxu0 0.0
    %239 = vmatprep.subr.mxu0 0.0
    %240 = vmatpush2.msra.mxu0 0.0
    %241 = vmatprep.subr.mxu0 0.0
    %242 = vmatpush2.msra.mxu0 0.0
    %243 = vmatprep.subr.mxu0 0.0
    %244 = vmatpush2.msra.mxu0 0.0
    %245 = vmatprep.subr.mxu0 0.0
    %246 = vmatpush2.msra.mxu0 0.0
    %247 = vmatprep.subr.mxu0 0.0
    %248 = vmatpush2.msra.mxu0 0.0
    %249 = vmatprep.subr.mxu0 0.0
    %250 = vmatpush2.msra.mxu0 0.0
    %251 = vmatprep.mubr.f32.mxu0 0.0
    %252 = vmatmul.mubr.f32.gmra.mxu0 %v182
    %v253 = vpop.f32.mrf.mxu0
    %v254 = vadd.f32 %v178, %v253
    %v255 = vpop.f32.mrf.mxu0
    %256 = vmatprep.mubr.f32.mxu0 0.0
    %257 = vmatmul.mubr.f32.gmra.mxu0 %v185
    %v258 = vpop.f32.mrf.mxu0
    %v259 = vadd.f32 %v178, %v258
    %v260 = vpop.f32.mrf.mxu0
    %261 = vdwg.mxu0
    %v262 = vadd.f32 %v147, %v254
    %v263 = vadd.f32 %v148, %v259
    %v264 = vsel %vm180, %v262, 0.0
    %265 = vadd.xlane.f32.xlu0 %v264
    %v266 = vpop.xlane.xlu0 %265
    %v267 = vsel %vm180, %v263, 0.0
    %268 = vadd.xlane.f32.xlu0 %v267
    %v269 = vpop.xlane.xlu0 %268
    %v270 = vrcp.pop 32.0
    %v271 = vmul.f32 %v266, %v270
    %v272 = vmul.f32 %v269, %v270
    %v273 = vsub.f32 %v262, %v271
    %v274 = vsub.f32 %v263, %v272
    %v275 = vmul.f32 %v273, %v273
    %v276 = vmul.f32 %v274, %v274
    %v277 = vsel %vm180, %v275, 0.0
    %278 = vadd.xlane.f32.xlu0 %v277
    %v279 = vpop.xlane.xlu0 %278
    %v280 = vsel %vm180, %v276, 0.0
    %281 = vadd.xlane.f32.xlu0 %v280
    %v282 = vpop.xlane.xlu0 %281
    %v283 = vmul.f32 %v279, %v270
    %v284 = vmul.f32 %v282, %v270
    %v285 = vadd.f32 %v283, 1e-05
    %v286 = vadd.f32 %v284, 1e-05
    %v287 = vrsqrt.pop %v285
    %v288 = vrsqrt.pop %v286
    %v289 = vmul.f32 %v273, %v287
    %v290 = vmul.f32 %v274, %v288
    %v292 = vlaneseq
    %v293 = vshrl.u32 %v292, 7
    %v294 = vsub.s32 0, %v293
    %v295 = vrot.slane %v156, %v294
    %v297 = vmul.f32 %v289, %v295
    %v298 = vmul.f32 %v290, %v295
    %v300 = vlaneseq
    %v301 = vshrl.u32 %v300, 7
    %v302 = vsub.s32 0, %v301
    %v303 = vrot.slane %v157, %v302
    %v305 = vadd.f32 %v297, %v303
    %v306 = vadd.f32 %v298, %v303
    %v308 = vlaneseq
    %v309 = vshrl.u32 %v308, 7
    %v310 = vsub.s32 0, %v309
    %v311 = vrot.slane %v162, %v310
    %v314 = vsel %vm180, %v305, 0
    %v317 = vsel %vm180, %v306, 0
    %319 = vmatprep.subr.mxu0 0.0
    %320 = vmatpush1.msra.mxu0 0.0
    %321 = vmatprep.subr.mxu0 0.0
    %322 = vmatpush1.msra.mxu0 0.0
    %323 = vmatprep.subr.mxu0 0.0
    %324 = vmatpush1.msra.mxu0 0.0
    %325 = vmatprep.subr.mxu0 0.0
    %326 = vmatpush1.msra.mxu0 0.0
    %327 = vmatprep.subr.mxu0 0.0
    %328 = vmatpush1.msra.mxu0 0.0
    %329 = vmatprep.subr.mxu0 0.0
    %330 = vmatpush1.msra.mxu0 0.0
    %331 = vmatprep.subr.mxu0 0.0
    %332 = vmatpush1.msra.mxu0 0.0
    %333 = vmatprep.subr.mxu0 0.0
    %334 = vmatpush1.msra.mxu0 0.0
    %335 = vmatprep.subr.mxu0 0.0
    %336 = vmatpush1.msra.mxu0 0.0
    %337 = vmatprep.subr.mxu0 0.0
    %338 = vmatpush1.msra.mxu0 0.0
    %339 = vmatprep.subr.mxu0 0.0
    %340 = vmatpush1.msra.mxu0 0.0
    %341 = vmatprep.subr.mxu0 0.0
    %342 = vmatpush1.msra.mxu0 0.0
    %343 = vmatprep.subr.mxu0 0.0
    %344 = vmatpush1.msra.mxu0 %v161
    %345 = vmatprep.subr.mxu0 0.0
    %346 = vmatpush1.msra.mxu0 %v160
    %347 = vmatprep.subr.mxu0 0.0
    %348 = vmatpush1.msra.mxu0 %v159
    %349 = vmatprep.subr.mxu0 0.0
    %350 = vmatpush1.msra.mxu0 %v158
    %351 = vmatprep.subr.mxu0 0.0
    %352 = vmatpush2.msra.mxu0 0.0
    %353 = vmatprep.subr.mxu0 0.0
    %354 = vmatpush2.msra.mxu0 0.0
    %355 = vmatprep.subr.mxu0 0.0
    %356 = vmatpush2.msra.mxu0 0.0
    %357 = vmatprep.subr.mxu0 0.0
    %358 = vmatpush2.msra.mxu0 0.0
    %359 = vmatprep.subr.mxu0 0.0
    %360 = vmatpush2.msra.mxu0 0.0
    %361 = vmatprep.subr.mxu0 0.0
    %362 = vmatpush2.msra.mxu0 0.0
    %363 = vmatprep.subr.mxu0 0.0
    %364 = vmatpush2.msra.mxu0 0.0
    %365 = vmatprep.subr.mxu0 0.0
    %366 = vmatpush2.msra.mxu0 0.0
    %367 = vmatprep.subr.mxu0 0.0
    %368 = vmatpush2.msra.mxu0 0.0
    %369 = vmatprep.subr.mxu0 0.0
    %370 = vmatpush2.msra.mxu0 0.0
    %371 = vmatprep.subr.mxu0 0.0
    %372 = vmatpush2.msra.mxu0 0.0
    %373 = vmatprep.subr.mxu0 0.0
    %374 = vmatpush2.msra.mxu0 0.0
    %375 = vmatprep.subr.mxu0 0.0
    %376 = vmatpush2.msra.mxu0 0.0
    %377 = vmatprep.subr.mxu0 0.0
    %378 = vmatpush2.msra.mxu0 0.0
    %379 = vmatprep.subr.mxu0 0.0
    %380 = vmatpush2.msra.mxu0 0.0
    %381 = vmatprep.subr.mxu0 0.0
    %382 = vmatpush2.msra.mxu0 0.0
    %383 = vmatprep.mubr.f32.mxu0 0.0
    %384 = vmatmul.mubr.f32.gmra.mxu0 %v314
    %v385 = vpop.f32.mrf.mxu0
    %v386 = vadd.f32 %v311, %v385
    %v387 = vpop.f32.mrf.mxu0
    %388 = vmatprep.mubr.f32.mxu0 0.0
    %389 = vmatmul.mubr.f32.gmra.mxu0 %v317
    %v390 = vpop.f32.mrf.mxu0
    %v391 = vadd.f32 %v311, %v390
    %v392 = vpop.f32.mrf.mxu0
    %393 = vdwg.mxu0
    %v394 = vmax.f32 %v386, 0.0
    %v395 = vmax.f32 %v391, 0.0
    %v397 = vlaneseq
    %v398 = vshrl.u32 %v397, 7
    %v399 = vsub.s32 0, %v398
    %v400 = vrot.slane %v171, %v399
    %vm402 = vcmask 523264
    %v404 = vsel %vm402, %v394, 0
    %v407 = vsel %vm402, %v395, 0
    %409 = vmatprep.subr.mxu0 0.0
    %410 = vmatpush1.msra.mxu0 0.0
    %411 = vmatprep.subr.mxu0 0.0
    %412 = vmatpush1.msra.mxu0 0.0
    %413 = vmatprep.subr.mxu0 0.0
    %414 = vmatpush1.msra.mxu0 0.0
    %415 = vmatprep.subr.mxu0 0.0
    %416 = vmatpush1.msra.mxu0 0.0
    %417 = vmatprep.subr.mxu0 0.0
    %418 = vmatpush1.msra.mxu0 0.0
    %419 = vmatprep.subr.mxu0 0.0
    %420 = vmatpush1.msra.mxu0 0.0
    %421 = vmatprep.subr.mxu0 0.0
    %422 = vmatpush1.msra.mxu0 0.0
    %423 = vmatprep.subr.mxu0 0.0
    %424 = vmatpush1.msra.mxu0 0.0
    %425 = vmatprep.subr.mxu0 0.0
    %426 = vmatpush1.msra.mxu0 %v170
    %427 = vmatprep.subr.mxu0 0.0
    %428 = vmatpush1.msra.mxu0 %v169
    %429 = vmatprep.subr.mxu0 0.0
    %430 = vmatpush1.msra.mxu0 %v168
    %431 = vmatprep.subr.mxu0 0.0
    %432 = vmatpush1.msra.mxu0 %v167
    %433 = vmatprep.subr.mxu0 0.0
    %434 = vmatpush1.msra.mxu0 %v166
    %435 = vmatprep.subr.mxu0 0.0
    %436 = vmatpush1.msra.mxu0 %v165
    %437 = vmatprep.subr.mxu0 0.0
    %438 = vmatpush1.msra.mxu0 %v164
    %439 = vmatprep.subr.mxu0 0.0
    %440 = vmatpush1.msra.mxu0 %v163
    %441 = vmatprep.subr.mxu0 0.0
    %442 = vmatpush2.msra.mxu0 0.0
    %443 = vmatprep.subr.mxu0 0.0
    %444 = vmatpush2.msra.mxu0 0.0
    %445 = vmatprep.subr.mxu0 0.0
    %446 = vmatpush2.msra.mxu0 0.0
    %447 = vmatprep.subr.mxu0 0.0
    %448 = vmatpush2.msra.mxu0 0.0
    %449 = vmatprep.subr.mxu0 0.0
    %450 = vmatpush2.msra.mxu0 0.0
    %451 = vmatprep.subr.mxu0 0.0
    %452 = vmatpush2.msra.mxu0 0.0
    %453 = vmatprep.subr.mxu0 0.0
    %454 = vmatpush2.msra.mxu0 0.0
    %455 = vmatprep.subr.mxu0 0.0
    %456 = vmatpush2.msra.mxu0 0.0
    %457 = vmatprep.subr.mxu0 0.0
    %458 = vmatpush2.msra.mxu0 0.0
    %459 = vmatprep.subr.mxu0 0.0
    %460 = vmatpush2.msra.mxu0 0.0
    %461 = vmatprep.subr.mxu0 0.0
    %462 = vmatpush2.msra.mxu0 0.0
    %463 = vmatprep.subr.mxu0 0.0
    %464 = vmatpush2.msra.mxu0 0.0
    %465 = vmatprep.subr.mxu0 0.0
    %466 = vmatpush2.msra.mxu0 0.0
    %467 = vmatprep.subr.mxu0 0.0
    %468 = vmatpush2.msra.mxu0 0.0
    %469 = vmatprep.subr.mxu0 0.0
    %470 = vmatpush2.msra.mxu0 0.0
    %471 = vmatprep.subr.mxu0 0.0
    %472 = vmatpush2.msra.mxu0 0.0
    %473 = vmatprep.mubr.f32.mxu0 0.0
    %474 = vmatmul.mubr.f32.gmra.mxu0 %v404
    %v475 = vpop.f32.mrf.mxu0
    %v476 = vadd.f32 %v400, %v475
    %v477 = vpop.f32.mrf.mxu0
    %478 = vmatprep.mubr.f32.mxu0 0.0
    %479 = vmatmul.mubr.f32.gmra.mxu0 %v407
    %v480 = vpop.f32.mrf.mxu0
    %v481 = vadd.f32 %v400, %v480
    %v482 = vpop.f32.mrf.mxu0
    %483 = vdwg.mxu0
    %v484 = vadd.f32 %v305, %v476
    %v485 = vadd.f32 %v306, %v481
    %v486 = vsel %vm180, %v484, 0.0
    %487 = vadd.xlane.f32.xlu0 %v486
    %v488 = vpop.xlane.xlu0 %487
    %v489 = vsel %vm180, %v485, 0.0
    %490 = vadd.xlane.f32.xlu0 %v489
    %v491 = vpop.xlane.xlu0 %490
    %v492 = vmul.f32 %v488, %v270
    %v493 = vmul.f32 %v491, %v270
    %v494 = vsub.f32 %v484, %v492
    %v495 = vsub.f32 %v485, %v493
    %v496 = vmul.f32 %v494, %v494
    %v497 = vmul.f32 %v495, %v495
    %v498 = vsel %vm180, %v496, 0.0
    %499 = vadd.xlane.f32.xlu0 %v498
    %v500 = vpop.xlane.xlu0 %499
    %v501 = vsel %vm180, %v497, 0.0
    %502 = vadd.xlane.f32.xlu0 %v501
    %v503 = vpop.xlane.xlu0 %502
    %v504 = vmul.f32 %v500, %v270
    %v505 = vmul.f32 %v503, %v270
    %v506 = vadd.f32 %v504, 1e-05
    %v507 = vadd.f32 %v505, 1e-05
    %v508 = vrsqrt.pop %v506
    %v509 = vrsqrt.pop %v507
    %v510 = vmul.f32 %v494, %v508
    %v511 = vmul.f32 %v495, %v509
    %v513 = vlaneseq
    %v514 = vshrl.u32 %v513, 7
    %v515 = vsub.s32 0, %v514
    %v516 = vrot.slane %v172, %v515
    %v518 = vmul.f32 %v510, %v516
    %v519 = vmul.f32 %v511, %v516
    %v521 = vlaneseq
    %v522 = vshrl.u32 %v521, 7
    %v523 = vsub.s32 0, %v522
    %v524 = vrot.slane %v173, %v523
    %v526 = vadd.f32 %v518, %v524
    %v527 = vadd.f32 %v519, %v524
    %v528 = vld [vmem:[%s25] sm:$0xff]
    %v529 = vld [vmem:[%s25 + $0x8] sm:$0xff]
    %v530 = vld [vmem:[%s25 + $0x10] sm:$0xff]
    %v531 = vld [vmem:[%s25 + $0x18] sm:$0xff]
    %v532 = vld [vmem:[%s27] sm:$0x1]
    %v534 = vlaneseq
    %v535 = vshrl.u32 %v534, 7
    %v536 = vsub.s32 0, %v535
    %v537 = vrot.slane %v532, %v536
    %v540 = vsel %vm180, %v526, 0
    %v543 = vsel %vm180, %v527, 0
    %545 = vmatprep.subr.mxu0 0.0
    %546 = vmatpush1.msra.mxu0 0.0
    %547 = vmatprep.subr.mxu0 0.0
    %548 = vmatpush1.msra.mxu0 0.0
    %549 = vmatprep.subr.mxu0 0.0
    %550 = vmatpush1.msra.mxu0 0.0
    %551 = vmatprep.subr.mxu0 0.0
    %552 = vmatpush1.msra.mxu0 0.0
    %553 = vmatprep.subr.mxu0 0.0
    %554 = vmatpush1.msra.mxu0 0.0
    %555 = vmatprep.subr.mxu0 0.0
    %556 = vmatpush1.msra.mxu0 0.0
    %557 = vmatprep.subr.mxu0 0.0
    %558 = vmatpush1.msra.mxu0 0.0
    %559 = vmatprep.subr.mxu0 0.0
    %560 = vmatpush1.msra.mxu0 0.0
    %561 = vmatprep.subr.mxu0 0.0
    %562 = vmatpush1.msra.mxu0 0.0
    %563 = vmatprep.subr.mxu0 0.0
    %564 = vmatpush1.msra.mxu0 0.0
    %565 = vmatprep.subr.mxu0 0.0
    %566 = vmatpush1.msra.mxu0 0.0
    %567 = vmatprep.subr.mxu0 0.0
    %568 = vmatpush1.msra.mxu0 0.0
    %569 = vmatprep.subr.mxu0 0.0
    %570 = vmatpush1.msra.mxu0 %v531
    %571 = vmatprep.subr.mxu0 0.0
    %572 = vmatpush1.msra.mxu0 %v530
    %573 = vmatprep.subr.mxu0 0.0
    %574 = vmatpush1.msra.mxu0 %v529
    %575 = vmatprep.subr.mxu0 0.0
    %576 = vmatpush1.msra.mxu0 %v528
    %577 = vmatprep.subr.mxu0 0.0
    %578 = vmatpush2.msra.mxu0 0.0
    %579 = vmatprep.subr.mxu0 0.0
    %580 = vmatpush2.msra.mxu0 0.0
    %581 = vmatprep.subr.mxu0 0.0
    %582 = vmatpush2.msra.mxu0 0.0
    %583 = vmatprep.subr.mxu0 0.0
    %584 = vmatpush2.msra.mxu0 0.0
    %585 = vmatprep.subr.mxu0 0.0
    %586 = vmatpush2.msra.mxu0 0.0
    %587 = vmatprep.subr.mxu0 0.0
    %588 = vmatpush2.msra.mxu0 0.0
    %589 = vmatprep.subr.mxu0 0.0
    %590 = vmatpush2.msra.mxu0 0.0
    %591 = vmatprep.subr.mxu0 0.0
    %592 = vmatpush2.msra.mxu0 0.0
    %593 = vmatprep.subr.mxu0 0.0
    %594 = vmatpush2.msra.mxu0 0.0
    %595 = vmatprep.subr.mxu0 0.0
    %596 = vmatpush2.msra.mxu0 0.0
    %597 = vmatprep.subr.mxu0 0.0
    %598 = vmatpush2.msra.mxu0 0.0
    %599 = vmatprep.subr.mxu0 0.0
    %600 = vmatpush2.msra.mxu0 0.0
    %601 = vmatprep.subr.mxu0 0.0
    %602 = vmatpush2.msra.mxu0 0.0
    %603 = vmatprep.subr.mxu0 0.0
    %604 = vmatpush2.msra.mxu0 0.0
    %605 = vmatprep.subr.mxu0 0.0
    %606 = vmatpush2.msra.mxu0 0.0
    %607 = vmatprep.subr.mxu0 0.0
    %608 = vmatpush2.msra.mxu0 0.0
    %609 = vmatprep.mubr.f32.mxu0 0.0
    %610 = vmatmul.mubr.f32.gmra.mxu0 %v540
    %v611 = vpop.f32.mrf.mxu0
    %v612 = vadd.f32 %v537, %v611
    %v613 = vpop.f32.mrf.mxu0
    %614 = vmatprep.mubr.f32.mxu0 0.0
    %615 = vmatmul.mubr.f32.gmra.mxu0 %v543
    %v616 = vpop.f32.mrf.mxu0
    %v617 = vadd.f32 %v537, %v616
    %v618 = vpop.f32.mrf.mxu0
    %619 = vdwg.mxu0
    %vm620 = vcmp.gt.f32.partialorder %v612, 0.0
    %vm621 = vcmp.gt.f32.partialorder %v617, 0.0
    %v622 = vmul.f32 %v612, 1.442695
    %v623 = vpow.pop %v622
    %v624 = vmul.f32 %v617, 1.442695
    %v625 = vpow.pop %v624
    %v626 = vsub.f32 %v623, 1.0
    %v627 = vsub.f32 %v625, 1.0
    %v628 = vmul.f32 %v626, 1.6732632
    %v629 = vmul.f32 %v627, 1.6732632
    %v630 = vsel %vm620, %v612, %v628
    %v631 = vsel %vm621, %v617, %v629
    %v632 = vmul.f32 %v630, 1.050701
    %v633 = vmul.f32 %v631, 1.050701
    %v634 = vld [vmem:[%s29] sm:$0xff]
    %v635 = vld [vmem:[%s29 + $0x8] sm:$0xff]
    %v636 = vld [vmem:[%s29 + $0x10] sm:$0xff]
    %v637 = vld [vmem:[%s29 + $0x18] sm:$0xff]
    %v638 = vld [vmem:[%s31] sm:$0x1]
    %v640 = vlaneseq
    %v641 = vshrl.u32 %v640, 7
    %v642 = vsub.s32 0, %v641
    %v643 = vrot.slane %v638, %v642
    %v646 = vsel %vm180, %v632, 0
    %v649 = vsel %vm180, %v633, 0
    %651 = vmatprep.subr.mxu0 0.0
    %652 = vmatpush1.msra.mxu0 0.0
    %653 = vmatprep.subr.mxu0 0.0
    %654 = vmatpush1.msra.mxu0 0.0
    %655 = vmatprep.subr.mxu0 0.0
    %656 = vmatpush1.msra.mxu0 0.0
    %657 = vmatprep.subr.mxu0 0.0
    %658 = vmatpush1.msra.mxu0 0.0
    %659 = vmatprep.subr.mxu0 0.0
    %660 = vmatpush1.msra.mxu0 0.0
    %661 = vmatprep.subr.mxu0 0.0
    %662 = vmatpush1.msra.mxu0 0.0
    %663 = vmatprep.subr.mxu0 0.0
    %664 = vmatpush1.msra.mxu0 0.0
    %665 = vmatprep.subr.mxu0 0.0
    %666 = vmatpush1.msra.mxu0 0.0
    %667 = vmatprep.subr.mxu0 0.0
    %668 = vmatpush1.msra.mxu0 0.0
    %669 = vmatprep.subr.mxu0 0.0
    %670 = vmatpush1.msra.mxu0 0.0
    %671 = vmatprep.subr.mxu0 0.0
    %672 = vmatpush1.msra.mxu0 0.0
    %673 = vmatprep.subr.mxu0 0.0
    %674 = vmatpush1.msra.mxu0 0.0
    %675 = vmatprep.subr.mxu0 0.0
    %676 = vmatpush1.msra.mxu0 %v637
    %677 = vmatprep.subr.mxu0 0.0
    %678 = vmatpush1.msra.mxu0 %v636
    %679 = vmatprep.subr.mxu0 0.0
    %680 = vmatpush1.msra.mxu0 %v635
    %681 = vmatprep.subr.mxu0 0.0
    %682 = vmatpush1.msra.mxu0 %v634
    %683 = vmatprep.subr.mxu0 0.0
    %684 = vmatpush2.msra.mxu0 0.0
    %685 = vmatprep.subr.mxu0 0.0
    %686 = vmatpush2.msra.mxu0 0.0
    %687 = vmatprep.subr.mxu0 0.0
    %688 = vmatpush2.msra.mxu0 0.0
    %689 = vmatprep.subr.mxu0 0.0
    %690 = vmatpush2.msra.mxu0 0.0
    %691 = vmatprep.subr.mxu0 0.0
    %692 = vmatpush2.msra.mxu0 0.0
    %693 = vmatprep.subr.mxu0 0.0
    %694 = vmatpush2.msra.mxu0 0.0
    %695 = vmatprep.subr.mxu0 0.0
    %696 = vmatpush2.msra.mxu0 0.0
    %697 = vmatprep.subr.mxu0 0.0
    %698 = vmatpush2.msra.mxu0 0.0
    %699 = vmatprep.subr.mxu0 0.0
    %700 = vmatpush2.msra.mxu0 0.0
    %701 = vmatprep.subr.mxu0 0.0
    %702 = vmatpush2.msra.mxu0 0.0
    %703 = vmatprep.subr.mxu0 0.0
    %704 = vmatpush2.msra.mxu0 0.0
    %705 = vmatprep.subr.mxu0 0.0
    %706 = vmatpush2.msra.mxu0 0.0
    %707 = vmatprep.subr.mxu0 0.0
    %708 = vmatpush2.msra.mxu0 0.0
    %709 = vmatprep.subr.mxu0 0.0
    %710 = vmatpush2.msra.mxu0 0.0
    %711 = vmatprep.subr.mxu0 0.0
    %712 = vmatpush2.msra.mxu0 0.0
    %713 = vmatprep.subr.mxu0 0.0
    %714 = vmatpush2.msra.mxu0 0.0
    %715 = vmatprep.mubr.f32.mxu0 0.0
    %716 = vmatmul.mubr.f32.gmra.mxu0 %v646
    %v717 = vpop.f32.mrf.mxu0
    %v718 = vadd.f32 %v643, %v717
    %v719 = vpop.f32.mrf.mxu0
    %720 = vmatprep.mubr.f32.mxu0 0.0
    %721 = vmatmul.mubr.f32.gmra.mxu0 %v649
    %v722 = vpop.f32.mrf.mxu0
    %v723 = vadd.f32 %v643, %v722
    %v724 = vpop.f32.mrf.mxu0
    %725 = vdwg.mxu0
    %vm726 = vcmp.gt.f32.partialorder %v718, 0.0
    %vm727 = vcmp.gt.f32.partialorder %v723, 0.0
    %v728 = vmul.f32 %v718, 1.442695
    %v729 = vpow.pop %v728
    %v730 = vmul.f32 %v723, 1.442695
    %v731 = vpow.pop %v730
    %v732 = vsub.f32 %v729, 1.0
    %v733 = vsub.f32 %v731, 1.0
    %v734 = vmul.f32 %v732, 1.6732632
    %v735 = vmul.f32 %v733, 1.6732632
    %v736 = vsel %vm726, %v718, %v734
    %v737 = vsel %vm727, %v723, %v735
    %v738 = vmul.f32 %v736, 1.050701
    %v739 = vmul.f32 %v737, 1.050701
    %v740 = vld [vmem:[%s33] sm:$0xff]
    %v741 = vld [vmem:[%s33 + $0x8] sm:$0xff]
    %v742 = vld [vmem:[%s33 + $0x10] sm:$0xff]
    %v743 = vld [vmem:[%s33 + $0x18] sm:$0xff]
    %v744 = vld [vmem:[%s35] sm:$0x1]
    %v746 = vlaneseq
    %v747 = vshrl.u32 %v746, 7
    %v748 = vsub.s32 0, %v747
    %v749 = vrot.slane %v744, %v748
    %751 = vmatprep.subr.mxu0 0.0
    %752 = vmatpush1.msra.mxu0 0.0
    %753 = vmatprep.subr.mxu0 0.0
    %754 = vmatpush1.msra.mxu0 0.0
    %755 = vmatprep.subr.mxu0 0.0
    %756 = vmatpush1.msra.mxu0 0.0
    %757 = vmatprep.subr.mxu0 0.0
    %758 = vmatpush1.msra.mxu0 0.0
    %759 = vmatprep.subr.mxu0 0.0
    %760 = vmatpush1.msra.mxu0 0.0
    %761 = vmatprep.subr.mxu0 0.0
    %762 = vmatpush1.msra.mxu0 0.0
    %763 = vmatprep.subr.mxu0 0.0
    %764 = vmatpush1.msra.mxu0 0.0
    %765 = vmatprep.subr.mxu0 0.0
    %766 = vmatpush1.msra.mxu0 0.0
    %767 = vmatprep.subr.mxu0 0.0
    %768 = vmatpush1.msra.mxu0 0.0
    %769 = vmatprep.subr.mxu0 0.0
    %770 = vmatpush1.msra.mxu0 0.0
    %771 = vmatprep.subr.mxu0 0.0
    %772 = vmatpush1.msra.mxu0 0.0
    %773 = vmatprep.subr.mxu0 0.0
    %774 = vmatpush1.msra.mxu0 0.0
    %775 = vmatprep.subr.mxu0 0.0
    %776 = vmatpush1.msra.mxu0 %v743
    %777 = vmatprep.subr.mxu0 0.0
    %778 = vmatpush1.msra.mxu0 %v742
    %779 = vmatprep.subr.mxu0 0.0
    %780 = vmatpush1.msra.mxu0 %v741
    %781 = vmatprep.subr.mxu0 0.0
    %782 = vmatpush1.msra.mxu0 %v740
    %783 = vmatprep.subr.mxu0 0.0
    %784 = vmatpush2.msra.mxu0 0.0
    %785 = vmatprep.subr.mxu0 0.0
    %786 = vmatpush2.msra.mxu0 0.0
    %787 = vmatprep.subr.mxu0 0.0
    %788 = vmatpush2.msra.mxu0 0.0
    %789 = vmatprep.subr.mxu0 0.0
    %790 = vmatpush2.msra.mxu0 0.0
    %791 = vmatprep.subr.mxu0 0.0
    %792 = vmatpush2.msra.mxu0 0.0
    %793 = vmatprep.subr.mxu0 0.0
    %794 = vmatpush2.msra.mxu0 0.0
    %795 = vmatprep.subr.mxu0 0.0
    %796 = vmatpush2.msra.mxu0 0.0
    %797 = vmatprep.subr.mxu0 0.0
    %798 = vmatpush2.msra.mxu0 0.0
    %799 = vmatprep.subr.mxu0 0.0
    %800 = vmatpush2.msra.mxu0 0.0
    %801 = vmatprep.subr.mxu0 0.0
    %802 = vmatpush2.msra.mxu0 0.0
    %803 = vmatprep.subr.mxu0 0.0
    %804 = vmatpush2.msra.mxu0 0.0
    %805 = vmatprep.subr.mxu0 0.0
    %806 = vmatpush2.msra.mxu0 0.0
    %807 = vmatprep.subr.mxu0 0.0
    %808 = vmatpush2.msra.mxu0 0.0
    %809 = vmatprep.subr.mxu0 0.0
    %810 = vmatpush2.msra.mxu0 0.0
    %811 = vmatprep.subr.mxu0 0.0
    %812 = vmatpush2.msra.mxu0 0.0
    %813 = vmatprep.subr.mxu0 0.0
    %814 = vmatpush2.msra.mxu0 0.0
    %815 = vmatprep.mubr.f32.mxu0 0.0
    %816 = vmatmul.mubr.f32.gmra.mxu0 %v540
    %v817 = vpop.f32.mrf.mxu0
    %v818 = vadd.f32 %v749, %v817
    %v819 = vpop.f32.mrf.mxu0
    %820 = vmatprep.mubr.f32.mxu0 0.0
    %821 = vmatmul.mubr.f32.gmra.mxu0 %v543
    %v822 = vpop.f32.mrf.mxu0
    %v823 = vadd.f32 %v749, %v822
    %v824 = vpop.f32.mrf.mxu0
    %825 = vdwg.mxu0
    %v826 = vld [vmem:[%s45] sm:$0xff]
    %v827 = vld [vmem:[%s45 + $0x8] sm:$0xff]
    %v828 = vld [vmem:[%s45 + $0x10] sm:$0xff]
    %v829 = vld [vmem:[%s45 + $0x18] sm:$0xff]
    %v830 = vld [vmem:[%s45 + $0x20] sm:$0xff]
    %v831 = vld [vmem:[%s45 + $0x28] sm:$0xff]
    %v832 = vld [vmem:[%s45 + $0x30] sm:$0xff]
    %v833 = vld [vmem:[%s45 + $0x38] sm:$0xff]
    %v834 = vld [vmem:[%s47] sm:$0xff]
    %v835 = vld [vmem:[%s47 + $0x8] sm:$0xff]
    %v836 = vld [vmem:[%s47 + $0x10] sm:$0xff]
    %v837 = vld [vmem:[%s47 + $0x18] sm:$0xff]
    %v838 = vld [vmem:[%s47 + $0x20] sm:$0xff]
    %v839 = vld [vmem:[%s47 + $0x28] sm:$0xff]
    %v840 = vld [vmem:[%s47 + $0x30] sm:$0xff]
    %v841 = vld [vmem:[%s47 + $0x38] sm:$0xff]
    %v842 = vld [vmem:[%s47 + $0x40] sm:$0xff]
    %v843 = vld [vmem:[%s47 + $0x48] sm:$0xff]
    %v844 = vld [vmem:[%s47 + $0x50] sm:$0xff]
    %v845 = vld [vmem:[%s47 + $0x58] sm:$0xff]
    %v846 = vld [vmem:[%s47 + $0x60] sm:$0xff]
    %v847 = vld [vmem:[%s47 + $0x68] sm:$0xff]
    %v848 = vld [vmem:[%s47 + $0x70] sm:$0xff]
    %v849 = vld [vmem:[%s47 + $0x78] sm:$0xff]
    %v850 = vld [vmem:[%s47 + $0x80] sm:$0xff]
    %v851 = vld [vmem:[%s47 + $0x88] sm:$0xff]
    %v852 = vld [vmem:[%s47 + $0x90] sm:$0xff]
    %v853 = vld [vmem:[%s47 + $0x98] sm:$0xff]
    %v854 = vld [vmem:[%s47 + $0xa0] sm:$0xff]
    %v855 = vld [vmem:[%s47 + $0xa8] sm:$0xff]
    %v856 = vld [vmem:[%s47 + $0xb0] sm:$0xff]
    %v857 = vld [vmem:[%s47 + $0xb8] sm:$0xff]
    %v858 = vld [vmem:[%s47 + $0xc0] sm:$0xff]
    %v859 = vld [vmem:[%s47 + $0xc8] sm:$0xff]
    %v860 = vld [vmem:[%s47 + $0xd0] sm:$0xff]
    %v861 = vld [vmem:[%s47 + $0xd8] sm:$0xff]
    %v862 = vld [vmem:[%s47 + $0xe0] sm:$0xff]
    %v863 = vld [vmem:[%s47 + $0xe8] sm:$0xff]
    %v864 = vld [vmem:[%s47 + $0xf0] sm:$0xff]
    %v865 = vld [vmem:[%s47 + $0xf8] sm:$0xff]
    %866 = vmatprep.subr.mxu0 %v865
    %867 = vmatpush1.msra.mxu0 %v864
    %868 = vmatprep.subr.mxu0 %v863
    %869 = vmatpush1.msra.mxu0 %v862
    %870 = vmatprep.subr.mxu0 %v861
    %871 = vmatpush1.msra.mxu0 %v860
    %872 = vmatprep.subr.mxu0 %v859
    %873 = vmatpush1.msra.mxu0 %v858
    %874 = vmatprep.subr.mxu0 %v857
    %875 = vmatpush1.msra.mxu0 %v856
    %876 = vmatprep.subr.mxu0 %v855
    %877 = vmatpush1.msra.mxu0 %v854
    %878 = vmatprep.subr.mxu0 %v853
    %879 = vmatpush1.msra.mxu0 %v852
    %880 = vmatprep.subr.mxu0 %v851
    %881 = vmatpush1.msra.mxu0 %v850
    %882 = vmatprep.subr.mxu0 %v849
    %883 = vmatpush1.msra.mxu0 %v848
    %884 = vmatprep.subr.mxu0 %v847
    %885 = vmatpush1.msra.mxu0 %v846
    %886 = vmatprep.subr.mxu0 %v845
    %887 = vmatpush1.msra.mxu0 %v844
    %888 = vmatprep.subr.mxu0 %v843
    %889 = vmatpush1.msra.mxu0 %v842
    %890 = vmatprep.subr.mxu0 %v841
    %891 = vmatpush1.msra.mxu0 %v840
    %892 = vmatprep.subr.mxu0 %v839
    %893 = vmatpush1.msra.mxu0 %v838
    %894 = vmatprep.subr.mxu0 %v837
    %895 = vmatpush1.msra.mxu0 %v836
    %896 = vmatprep.subr.mxu0 %v835
    %897 = vmatpush1.msra.mxu0 %v834
    %898 = vmatprep.subr.mxu0 0.0
    %899 = vmatpush2.msra.mxu0 0.0
    %900 = vmatprep.subr.mxu0 0.0
    %901 = vmatpush2.msra.mxu0 0.0
    %902 = vmatprep.subr.mxu0 0.0
    %903 = vmatpush2.msra.mxu0 0.0
    %904 = vmatprep.subr.mxu0 0.0
    %905 = vmatpush2.msra.mxu0 0.0
    %906 = vmatprep.subr.mxu0 0.0
    %907 = vmatpush2.msra.mxu0 0.0
    %908 = vmatprep.subr.mxu0 0.0
    %909 = vmatpush2.msra.mxu0 0.0
    %910 = vmatprep.subr.mxu0 0.0
    %911 = vmatpush2.msra.mxu0 0.0
    %912 = vmatprep.subr.mxu0 0.0
    %913 = vmatpush2.msra.mxu0 0.0
    %914 = vmatprep.subr.mxu0 0.0
    %915 = vmatpush2.msra.mxu0 0.0
    %916 = vmatprep.subr.mxu0 0.0
    %917 = vmatpush2.msra.mxu0 0.0
    %918 = vmatprep.subr.mxu0 0.0
    %919 = vmatpush2.msra.mxu0 0.0
    %920 = vmatprep.subr.mxu0 0.0
    %921 = vmatpush2.msra.mxu0 0.0
    %922 = vmatprep.subr.mxu0 0.0
    %923 = vmatpush2.msra.mxu0 0.0
    %924 = vmatprep.subr.mxu0 0.0
    %925 = vmatpush2.msra.mxu0 0.0
    %926 = vmatprep.subr.mxu0 0.0
    %927 = vmatpush2.msra.mxu0 0.0
    %928 = vmatprep.subr.mxu0 0.0
    %929 = vmatpush2.msra.mxu0 0.0
    %930 = vmatprep.mubr.f32.mxu0 0.0
    %931 = vmatmul.mubr.f32.gmra.mxu0 %v818
    %v932 = vpop.f32.mrf.mxu0
    %v933 = vadd.f32 0.0, %v932
    %v934 = vpop.f32.mrf.mxu0
    %v935 = vadd.f32 0.0, %v934
    %936 = vmatprep.mubr.f32.mxu0 0.0
    %937 = vmatmul.mubr.f32.gmra.mxu0 %v823
    %v938 = vpop.f32.mrf.mxu0
    %v939 = vadd.f32 0.0, %v938
    %v940 = vpop.f32.mrf.mxu0
    %v941 = vadd.f32 0.0, %v940
    %942 = vdwg.mxu0
    %v944 = vsel %vm180, %v738, 0
    %v947 = vsel %vm180, %v739, 0
    %949 = vmatprep.subr.mxu0 0.0
    %950 = vmatpush1.msra.mxu0 0.0
    %951 = vmatprep.subr.mxu0 0.0
    %952 = vmatpush1.msra.mxu0 0.0
    %953 = vmatprep.subr.mxu0 0.0
    %954 = vmatpush1.msra.mxu0 0.0
    %955 = vmatprep.subr.mxu0 0.0
    %956 = vmatpush1.msra.mxu0 0.0
    %957 = vmatprep.subr.mxu0 0.0
    %958 = vmatpush1.msra.mxu0 0.0
    %959 = vmatprep.subr.mxu0 0.0
    %960 = vmatpush1.msra.mxu0 0.0
    %961 = vmatprep.subr.mxu0 0.0
    %962 = vmatpush1.msra.mxu0 0.0
    %963 = vmatprep.subr.mxu0 0.0
    %964 = vmatpush1.msra.mxu0 0.0
    %965 = vmatprep.subr.mxu0 0.0
    %966 = vmatpush1.msra.mxu0 0.0
    %967 = vmatprep.subr.mxu0 0.0
    %968 = vmatpush1.msra.mxu0 0.0
    %969 = vmatprep.subr.mxu0 0.0
    %970 = vmatpush1.msra.mxu0 0.0
    %971 = vmatprep.subr.mxu0 0.0
    %972 = vmatpush1.msra.mxu0 0.0
    %973 = vmatprep.subr.mxu0 %v833
    %974 = vmatpush1.msra.mxu0 %v832
    %975 = vmatprep.subr.mxu0 %v831
    %976 = vmatpush1.msra.mxu0 %v830
    %977 = vmatprep.subr.mxu0 %v829
    %978 = vmatpush1.msra.mxu0 %v828
    %979 = vmatprep.subr.mxu0 %v827
    %980 = vmatpush1.msra.mxu0 %v826
    %981 = vmatprep.subr.mxu0 0.0
    %982 = vmatpush2.msra.mxu0 0.0
    %983 = vmatprep.subr.mxu0 0.0
    %984 = vmatpush2.msra.mxu0 0.0
    %985 = vmatprep.subr.mxu0 0.0
    %986 = vmatpush2.msra.mxu0 0.0
    %987 = vmatprep.subr.mxu0 0.0
    %988 = vmatpush2.msra.mxu0 0.0
    %989 = vmatprep.subr.mxu0 0.0
    %990 = vmatpush2.msra.mxu0 0.0
    %991 = vmatprep.subr.mxu0 0.0
    %992 = vmatpush2.msra.mxu0 0.0
    %993 = vmatprep.subr.mxu0 0.0
    %994 = vmatpush2.msra.mxu0 0.0
    %995 = vmatprep.subr.mxu0 0.0
    %996 = vmatpush2.msra.mxu0 0.0
    %997 = vmatprep.subr.mxu0 0.0
    %998 = vmatpush2.msra.mxu0 0.0
    %999 = vmatprep.subr.mxu0 0.0
    %1000 = vmatpush2.msra.mxu0 0.0
    %1001 = vmatprep.subr.mxu0 0.0
    %1002 = vmatpush2.msra.mxu0 0.0
    %1003 = vmatprep.subr.mxu0 0.0
    %1004 = vmatpush2.msra.mxu0 0.0
    %1005 = vmatprep.subr.mxu0 0.0
    %1006 = vmatpush2.msra.mxu0 0.0
    %1007 = vmatprep.subr.mxu0 0.0
    %1008 = vmatpush2.msra.mxu0 0.0
    %1009 = vmatprep.subr.mxu0 0.0
    %1010 = vmatpush2.msra.mxu0 0.0
    %1011 = vmatprep.subr.mxu0 0.0
    %1012 = vmatpush2.msra.mxu0 0.0
    %1013 = vmatprep.mubr.f32.mxu0 0.0
    %1014 = vmatmul.mubr.f32.gmra.mxu0 %v944
    %v1015 = vpop.f32.mrf.mxu0
    %v1016 = vadd.f32 %v933, %v1015
    %v1017 = vpop.f32.mrf.mxu0
    %v1018 = vadd.f32 %v935, %v1017
    %1019 = vmatprep.mubr.f32.mxu0 0.0
    %1020 = vmatmul.mubr.f32.gmra.mxu0 %v947
    %v1021 = vpop.f32.mrf.mxu0
    %v1022 = vadd.f32 %v939, %v1021
    %v1023 = vpop.f32.mrf.mxu0
    %v1024 = vadd.f32 %v941, %v1023
    %1025 = vdwg.mxu0
    %v1026 = vld [vmem:[%s49] sm:$0x3]
    %v1028 = vlaneseq
    %v1029 = vshrl.u32 %v1028, 7
    %v1030 = vsub.s32 0, %v1029
    %v1031 = vrot.slane %v1026, %v1030
    %v1032 = vlaneseq
    %v1033 = vshrl.u32 %v1032, 7
    %v1034 = vsub.s32 1, %v1033
    %v1035 = vrot.slane %v1026, %v1034
    %v1038 = vadd.f32 %v1016, %v1031
    %v1039 = vadd.f32 %v1018, %v1035
    %v1040 = vadd.f32 %v1022, %v1031
    %v1041 = vadd.f32 %v1024, %v1035
    %vm1042 = vcmp.gt.f32.partialorder %v1038, 0.0
    %vm1043 = vcmp.gt.f32.partialorder %v1039, 0.0
    %vm1044 = vcmp.gt.f32.partialorder %v1040, 0.0
    %vm1045 = vcmp.gt.f32.partialorder %v1041, 0.0
    %v1046 = vmul.f32 %v1038, 1.442695
    %v1047 = vpow.pop %v1046
    %v1048 = vmul.f32 %v1039, 1.442695
    %v1049 = vpow.pop %v1048
    %v1050 = vmul.f32 %v1040, 1.442695
    %v1051 = vpow.pop %v1050
    %v1052 = vmul.f32 %v1041, 1.442695
    %v1053 = vpow.pop %v1052
    %v1054 = vsub.f32 %v1047, 1.0
    %v1055 = vsub.f32 %v1049, 1.0
    %v1056 = vsub.f32 %v1051, 1.0
    %v1057 = vsub.f32 %v1053, 1.0
    %v1058 = vmul.f32 %v1054, 1.6732632
    %v1059 = vmul.f32 %v1055, 1.6732632
    %v1060 = vmul.f32 %v1056, 1.6732632
    %v1061 = vmul.f32 %v1057, 1.6732632
    %v1062 = vsel %vm1042, %v1038, %v1058
    %v1063 = vsel %vm1043, %v1039, %v1059
    %v1064 = vsel %vm1044, %v1040, %v1060
    %v1065 = vsel %vm1045, %v1041, %v1061
    %v1066 = vmul.f32 %v1062, 1.050701
    %v1067 = vmul.f32 %v1063, 1.050701
    %v1068 = vmul.f32 %v1064, 1.050701
    %v1069 = vmul.f32 %v1065, 1.050701
    %v1070 = vld [vmem:[%s51] sm:$0xff]
    %v1071 = vld [vmem:[%s51 + $0x8] sm:$0xff]
    %v1072 = vld [vmem:[%s51 + $0x10] sm:$0xff]
    %v1073 = vld [vmem:[%s51 + $0x18] sm:$0xff]
    %v1074 = vld [vmem:[%s51 + $0x20] sm:$0xff]
    %v1075 = vld [vmem:[%s51 + $0x28] sm:$0xff]
    %v1076 = vld [vmem:[%s51 + $0x30] sm:$0xff]
    %v1077 = vld [vmem:[%s51 + $0x38] sm:$0xff]
    %v1078 = vld [vmem:[%s51 + $0x40] sm:$0xff]
    %v1079 = vld [vmem:[%s51 + $0x48] sm:$0xff]
    %v1080 = vld [vmem:[%s51 + $0x50] sm:$0xff]
    %v1081 = vld [vmem:[%s51 + $0x58] sm:$0xff]
    %v1082 = vld [vmem:[%s51 + $0x60] sm:$0xff]
    %v1083 = vld [vmem:[%s51 + $0x68] sm:$0xff]
    %v1084 = vld [vmem:[%s51 + $0x70] sm:$0xff]
    %v1085 = vld [vmem:[%s51 + $0x78] sm:$0xff]
    %v1086 = vld [vmem:[%s51 + $0x80] sm:$0xff]
    %v1087 = vld [vmem:[%s51 + $0x88] sm:$0xff]
    %v1088 = vld [vmem:[%s51 + $0x90] sm:$0xff]
    %v1089 = vld [vmem:[%s51 + $0x98] sm:$0xff]
    %v1090 = vld [vmem:[%s53] sm:$0x1]
    %v1092 = vlaneseq
    %v1093 = vshrl.u32 %v1092, 7
    %v1094 = vsub.s32 0, %v1093
    %v1095 = vrot.slane %v1090, %v1094
    %v1098 = vsel %vm180, %v1067, 0
    %v1101 = vsel %vm180, %v1069, 0
    %1103 = vmatprep.subr.mxu0 0.0
    %1104 = vmatpush1.msra.mxu0 %v1085
    %1105 = vmatprep.subr.mxu0 0.0
    %1106 = vmatpush1.msra.mxu0 %v1084
    %1107 = vmatprep.subr.mxu0 0.0
    %1108 = vmatpush1.msra.mxu0 %v1083
    %1109 = vmatprep.subr.mxu0 0.0
    %1110 = vmatpush1.msra.mxu0 %v1082
    %1111 = vmatprep.subr.mxu0 0.0
    %1112 = vmatpush1.msra.mxu0 %v1081
    %1113 = vmatprep.subr.mxu0 0.0
    %1114 = vmatpush1.msra.mxu0 %v1080
    %1115 = vmatprep.subr.mxu0 0.0
    %1116 = vmatpush1.msra.mxu0 %v1079
    %1117 = vmatprep.subr.mxu0 0.0
    %1118 = vmatpush1.msra.mxu0 %v1078
    %1119 = vmatprep.subr.mxu0 0.0
    %1120 = vmatpush1.msra.mxu0 %v1077
    %1121 = vmatprep.subr.mxu0 0.0
    %1122 = vmatpush1.msra.mxu0 %v1076
    %1123 = vmatprep.subr.mxu0 0.0
    %1124 = vmatpush1.msra.mxu0 %v1075
    %1125 = vmatprep.subr.mxu0 0.0
    %1126 = vmatpush1.msra.mxu0 %v1074
    %1127 = vmatprep.subr.mxu0 0.0
    %1128 = vmatpush1.msra.mxu0 %v1073
    %1129 = vmatprep.subr.mxu0 0.0
    %1130 = vmatpush1.msra.mxu0 %v1072
    %1131 = vmatprep.subr.mxu0 0.0
    %1132 = vmatpush1.msra.mxu0 %v1071
    %1133 = vmatprep.subr.mxu0 0.0
    %1134 = vmatpush1.msra.mxu0 %v1070
    %1135 = vmatprep.subr.mxu0 0.0
    %1136 = vmatpush2.msra.mxu0 0.0
    %1137 = vmatprep.subr.mxu0 0.0
    %1138 = vmatpush2.msra.mxu0 0.0
    %1139 = vmatprep.subr.mxu0 0.0
    %1140 = vmatpush2.msra.mxu0 0.0
    %1141 = vmatprep.subr.mxu0 0.0
    %1142 = vmatpush2.msra.mxu0 0.0
    %1143 = vmatprep.subr.mxu0 0.0
    %1144 = vmatpush2.msra.mxu0 0.0
    %1145 = vmatprep.subr.mxu0 0.0
    %1146 = vmatpush2.msra.mxu0 0.0
    %1147 = vmatprep.subr.mxu0 0.0
    %1148 = vmatpush2.msra.mxu0 0.0
    %1149 = vmatprep.subr.mxu0 0.0
    %1150 = vmatpush2.msra.mxu0 0.0
    %1151 = vmatprep.subr.mxu0 0.0
    %1152 = vmatpush2.msra.mxu0 0.0
    %1153 = vmatprep.subr.mxu0 0.0
    %1154 = vmatpush2.msra.mxu0 0.0
    %1155 = vmatprep.subr.mxu0 0.0
    %1156 = vmatpush2.msra.mxu0 0.0
    %1157 = vmatprep.subr.mxu0 0.0
    %1158 = vmatpush2.msra.mxu0 0.0
    %1159 = vmatprep.subr.mxu0 0.0
    %1160 = vmatpush2.msra.mxu0 %v1089
    %1161 = vmatprep.subr.mxu0 0.0
    %1162 = vmatpush2.msra.mxu0 %v1088
    %1163 = vmatprep.subr.mxu0 0.0
    %1164 = vmatpush2.msra.mxu0 %v1087
    %1165 = vmatprep.subr.mxu0 0.0
    %1166 = vmatpush2.msra.mxu0 %v1086
    %1167 = vmatprep.mubr.f32.mxu0 %v1098
    %1168 = vmatmul.mubr.f32.gmra.mxu0 %v1066
    %v1169 = vpop.f32.mrf.mxu0
    %v1170 = vadd.f32 %v1095, %v1169
    %v1171 = vpop.f32.mrf.mxu0
    %1172 = vmatprep.mubr.f32.mxu0 %v1101
    %1173 = vmatmul.mubr.f32.gmra.mxu0 %v1068
    %v1174 = vpop.f32.mrf.mxu0
    %v1175 = vadd.f32 %v1095, %v1174
    %v1176 = vpop.f32.mrf.mxu0
    %1177 = vdwg.mxu0
    %vm1178 = vcmp.gt.f32.partialorder %v1170, 0.0
    %vm1179 = vcmp.gt.f32.partialorder %v1175, 0.0
    %v1180 = vmul.f32 %v1170, 1.442695
    %v1181 = vpow.pop %v1180
    %v1182 = vmul.f32 %v1175, 1.442695
    %v1183 = vpow.pop %v1182
    %v1184 = vsub.f32 %v1181, 1.0
    %v1185 = vsub.f32 %v1183, 1.0
    %v1186 = vmul.f32 %v1184, 1.6732632
    %v1187 = vmul.f32 %v1185, 1.6732632
    %v1188 = vsel %vm1178, %v1170, %v1186
    %v1189 = vsel %vm1179, %v1175, %v1187
    %v1190 = vmul.f32 %v1188, 1.050701
    %v1191 = vmul.f32 %v1189, 1.050701
    %1192 = vst [vmem:[#allocation2] sm:$0xff] %v1190
    %1193 = vst [vmem:[#allocation2 + $0x8] sm:$0xff] %v1191
    %v1194 = vld [vmem:[%s55] sm:$0xff]
    %v1195 = vld [vmem:[%s55 + $0x8] sm:$0xff]
    %v1196 = vld [vmem:[%s55 + $0x10] sm:$0xff]
    %v1197 = vld [vmem:[%s55 + $0x18] sm:$0xff]
    %v1198 = vld [vmem:[%s55 + $0x20] sm:$0xff]
    %v1199 = vld [vmem:[%s55 + $0x28] sm:$0xff]
    %v1200 = vld [vmem:[%s55 + $0x30] sm:$0xff]
    %v1201 = vld [vmem:[%s55 + $0x38] sm:$0xff]
    %v1202 = vld [vmem:[%s55 + $0x40] sm:$0xff]
    %v1203 = vld [vmem:[%s55 + $0x48] sm:$0xff]
    %v1204 = vld [vmem:[%s55 + $0x50] sm:$0xff]
    %v1205 = vld [vmem:[%s55 + $0x58] sm:$0xff]
    %v1206 = vld [vmem:[%s55 + $0x60] sm:$0xff]
    %v1207 = vld [vmem:[%s55 + $0x68] sm:$0xff]
    %v1208 = vld [vmem:[%s55 + $0x70] sm:$0xff]
    %v1209 = vld [vmem:[%s55 + $0x78] sm:$0xff]
    %v1210 = vld [vmem:[%s57] sm:$0x1]
    %v1212 = vlaneseq
    %v1213 = vshrl.u32 %v1212, 7
    %v1214 = vsub.s32 0, %v1213
    %v1215 = vrot.slane %v1210, %v1214
    %1217 = vmatprep.subr.mxu0 0.0
    %1218 = vmatpush1.msra.mxu0 %v1209
    %1219 = vmatprep.subr.mxu0 0.0
    %1220 = vmatpush1.msra.mxu0 %v1208
    %1221 = vmatprep.subr.mxu0 0.0
    %1222 = vmatpush1.msra.mxu0 %v1207
    %1223 = vmatprep.subr.mxu0 0.0
    %1224 = vmatpush1.msra.mxu0 %v1206
    %1225 = vmatprep.subr.mxu0 0.0
    %1226 = vmatpush1.msra.mxu0 %v1205
    %1227 = vmatprep.subr.mxu0 0.0
    %1228 = vmatpush1.msra.mxu0 %v1204
    %1229 = vmatprep.subr.mxu0 0.0
    %1230 = vmatpush1.msra.mxu0 %v1203
    %1231 = vmatprep.subr.mxu0 0.0
    %1232 = vmatpush1.msra.mxu0 %v1202
    %1233 = vmatprep.subr.mxu0 0.0
    %1234 = vmatpush1.msra.mxu0 %v1201
    %1235 = vmatprep.subr.mxu0 0.0
    %1236 = vmatpush1.msra.mxu0 %v1200
    %1237 = vmatprep.subr.mxu0 0.0
    %1238 = vmatpush1.msra.mxu0 %v1199
    %1239 = vmatprep.subr.mxu0 0.0
    %1240 = vmatpush1.msra.mxu0 %v1198
    %1241 = vmatprep.subr.mxu0 0.0
    %1242 = vmatpush1.msra.mxu0 %v1197
    %1243 = vmatprep.subr.mxu0 0.0
    %1244 = vmatpush1.msra.mxu0 %v1196
    %1245 = vmatprep.subr.mxu0 0.0
    %1246 = vmatpush1.msra.mxu0 %v1195
    %1247 = vmatprep.subr.mxu0 0.0
    %1248 = vmatpush1.msra.mxu0 %v1194
    %1249 = vmatprep.subr.mxu0 0.0
    %1250 = vmatpush2.msra.mxu0 0.0
    %1251 = vmatprep.subr.mxu0 0.0
    %1252 = vmatpush2.msra.mxu0 0.0
    %1253 = vmatprep.subr.mxu0 0.0
    %1254 = vmatpush2.msra.mxu0 0.0
    %1255 = vmatprep.subr.mxu0 0.0
    %1256 = vmatpush2.msra.mxu0 0.0
    %1257 = vmatprep.subr.mxu0 0.0
    %1258 = vmatpush2.msra.mxu0 0.0
    %1259 = vmatprep.subr.mxu0 0.0
    %1260 = vmatpush2.msra.mxu0 0.0
    %1261 = vmatprep.subr.mxu0 0.0
    %1262 = vmatpush2.msra.mxu0 0.0
    %1263 = vmatprep.subr.mxu0 0.0
    %1264 = vmatpush2.msra.mxu0 0.0
    %1265 = vmatprep.subr.mxu0 0.0
    %1266 = vmatpush2.msra.mxu0 0.0
    %1267 = vmatprep.subr.mxu0 0.0
    %1268 = vmatpush2.msra.mxu0 0.0
    %1269 = vmatprep.subr.mxu0 0.0
    %1270 = vmatpush2.msra.mxu0 0.0
    %1271 = vmatprep.subr.mxu0 0.0
    %1272 = vmatpush2.msra.mxu0 0.0
    %1273 = vmatprep.subr.mxu0 0.0
    %1274 = vmatpush2.msra.mxu0 0.0
    %1275 = vmatprep.subr.mxu0 0.0
    %1276 = vmatpush2.msra.mxu0 0.0
    %1277 = vmatprep.subr.mxu0 0.0
    %1278 = vmatpush2.msra.mxu0 0.0
    %1279 = vmatprep.subr.mxu0 0.0
    %1280 = vmatpush2.msra.mxu0 0.0
    %1281 = vmatprep.mubr.f32.mxu0 0.0
    %1282 = vmatmul.mubr.f32.gmra.mxu0 %v1190
    %v1283 = vpop.f32.mrf.mxu0
    %v1284 = vadd.f32 %v1215, %v1283
    %v1285 = vpop.f32.mrf.mxu0
    %1286 = vmatprep.mubr.f32.mxu0 0.0
    %1287 = vmatmul.mubr.f32.gmra.mxu0 %v1191
    %v1288 = vpop.f32.mrf.mxu0
    %v1289 = vadd.f32 %v1215, %v1288
    %v1290 = vpop.f32.mrf.mxu0
    %1291 = vdwg.mxu0
    %1292 = vst [vmem:[#allocation4] sm:$0xff] %v1284
    %1293 = vst [vmem:[#allocation4 + $0x8] sm:$0xff] %v1289
    %v1294 = vld [vmem:[%s37] sm:$0xff]
    %v1295 = vld [vmem:[%s37 + $0x8] sm:$0xff]
    %v1296 = vld [vmem:[%s37 + $0x10] sm:$0xff]
    %v1297 = vld [vmem:[%s37 + $0x18] sm:$0xff]
    %v1298 = vld [vmem:[%s39] sm:$0x1]
    %v1300 = vlaneseq
    %v1301 = vshrl.u32 %v1300, 7
    %v1302 = vsub.s32 0, %v1301
    %v1303 = vrot.slane %v1298, %v1302
    %1305 = vmatprep.subr.mxu0 0.0
    %1306 = vmatpush1.msra.mxu0 0.0
    %1307 = vmatprep.subr.mxu0 0.0
    %1308 = vmatpush1.msra.mxu0 0.0
    %1309 = vmatprep.subr.mxu0 0.0
    %1310 = vmatpush1.msra.mxu0 0.0
    %1311 = vmatprep.subr.mxu0 0.0
    %1312 = vmatpush1.msra.mxu0 0.0
    %1313 = vmatprep.subr.mxu0 0.0
    %1314 = vmatpush1.msra.mxu0 0.0
    %1315 = vmatprep.subr.mxu0 0.0
    %1316 = vmatpush1.msra.mxu0 0.0
    %1317 = vmatprep.subr.mxu0 0.0
    %1318 = vmatpush1.msra.mxu0 0.0
    %1319 = vmatprep.subr.mxu0 0.0
    %1320 = vmatpush1.msra.mxu0 0.0
    %1321 = vmatprep.subr.mxu0 0.0
    %1322 = vmatpush1.msra.mxu0 0.0
    %1323 = vmatprep.subr.mxu0 0.0
    %1324 = vmatpush1.msra.mxu0 0.0
    %1325 = vmatprep.subr.mxu0 0.0
    %1326 = vmatpush1.msra.mxu0 0.0
    %1327 = vmatprep.subr.mxu0 0.0
    %1328 = vmatpush1.msra.mxu0 0.0
    %1329 = vmatprep.subr.mxu0 0.0
    %1330 = vmatpush1.msra.mxu0 %v1297
    %1331 = vmatprep.subr.mxu0 0.0
    %1332 = vmatpush1.msra.mxu0 %v1296
    %1333 = vmatprep.subr.mxu0 0.0
    %1334 = vmatpush1.msra.mxu0 %v1295
    %1335 = vmatprep.subr.mxu0 0.0
    %1336 = vmatpush1.msra.mxu0 %v1294
    %1337 = vmatprep.subr.mxu0 0.0
    %1338 = vmatpush2.msra.mxu0 0.0
    %1339 = vmatprep.subr.mxu0 0.0
    %1340 = vmatpush2.msra.mxu0 0.0
    %1341 = vmatprep.subr.mxu0 0.0
    %1342 = vmatpush2.msra.mxu0 0.0
    %1343 = vmatprep.subr.mxu0 0.0
    %1344 = vmatpush2.msra.mxu0 0.0
    %1345 = vmatprep.subr.mxu0 0.0
    %1346 = vmatpush2.msra.mxu0 0.0
    %1347 = vmatprep.subr.mxu0 0.0
    %1348 = vmatpush2.msra.mxu0 0.0
    %1349 = vmatprep.subr.mxu0 0.0
    %1350 = vmatpush2.msra.mxu0 0.0
    %1351 = vmatprep.subr.mxu0 0.0
    %1352 = vmatpush2.msra.mxu0 0.0
    %1353 = vmatprep.subr.mxu0 0.0
    %1354 = vmatpush2.msra.mxu0 0.0
    %1355 = vmatprep.subr.mxu0 0.0
    %1356 = vmatpush2.msra.mxu0 0.0
    %1357 = vmatprep.subr.mxu0 0.0
    %1358 = vmatpush2.msra.mxu0 0.0
    %1359 = vmatprep.subr.mxu0 0.0
    %1360 = vmatpush2.msra.mxu0 0.0
    %1361 = vmatprep.subr.mxu0 0.0
    %1362 = vmatpush2.msra.mxu0 0.0
    %1363 = vmatprep.subr.mxu0 0.0
    %1364 = vmatpush2.msra.mxu0 0.0
    %1365 = vmatprep.subr.mxu0 0.0
    %1366 = vmatpush2.msra.mxu0 0.0
    %1367 = vmatprep.subr.mxu0 0.0
    %1368 = vmatpush2.msra.mxu0 0.0
    %1369 = vmatprep.mubr.f32.mxu0 0.0
    %1370 = vmatmul.mubr.f32.gmra.mxu0 %v540
    %v1371 = vpop.f32.mrf.mxu0
    %v1372 = vadd.f32 %v1303, %v1371
    %v1373 = vpop.f32.mrf.mxu0
    %1374 = vmatprep.mubr.f32.mxu0 0.0
    %1375 = vmatmul.mubr.f32.gmra.mxu0 %v543
    %v1376 = vpop.f32.mrf.mxu0
    %v1377 = vadd.f32 %v1303, %v1376
    %v1378 = vpop.f32.mrf.mxu0
    %1379 = vdwg.mxu0
    %v1380 = vld [vmem:[%s41] sm:$0xff]
    %v1381 = vld [vmem:[%s41 + $0x8] sm:$0xff]
    %v1382 = vld [vmem:[%s41 + $0x10] sm:$0xff]
    %v1383 = vld [vmem:[%s41 + $0x18] sm:$0xff]
    %v1384 = vld [vmem:[%s41 + $0x20] sm:$0xff]
    %v1385 = vld [vmem:[%s41 + $0x28] sm:$0xff]
    %v1386 = vld [vmem:[%s41 + $0x30] sm:$0xff]
    %v1387 = vld [vmem:[%s41 + $0x38] sm:$0xff]
    %v1388 = vld [vmem:[%s43] sm:$0x1]
    %v1390 = vlaneseq
    %v1391 = vshrl.u32 %v1390, 7
    %v1392 = vsub.s32 0, %v1391
    %v1393 = vrot.slane %v1388, %v1392
    %v1396 = vsel %vm402, %v1372, 0
    %v1399 = vsel %vm402, %v1377, 0
    %1401 = vmatprep.subr.mxu0 0.0
    %1402 = vmatpush1.msra.mxu0 0.0
    %1403 = vmatprep.subr.mxu0 0.0
    %1404 = vmatpush1.msra.mxu0 0.0
    %1405 = vmatprep.subr.mxu0 0.0
    %1406 = vmatpush1.msra.mxu0 0.0
    %1407 = vmatprep.subr.mxu0 0.0
    %1408 = vmatpush1.msra.mxu0 0.0
    %1409 = vmatprep.subr.mxu0 0.0
    %1410 = vmatpush1.msra.mxu0 0.0
    %1411 = vmatprep.subr.mxu0 0.0
    %1412 = vmatpush1.msra.mxu0 0.0
    %1413 = vmatprep.subr.mxu0 0.0
    %1414 = vmatpush1.msra.mxu0 0.0
    %1415 = vmatprep.subr.mxu0 0.0
    %1416 = vmatpush1.msra.mxu0 0.0
    %1417 = vmatprep.subr.mxu0 0.0
    %1418 = vmatpush1.msra.mxu0 %v1387
    %1419 = vmatprep.subr.mxu0 0.0
    %1420 = vmatpush1.msra.mxu0 %v1386
    %1421 = vmatprep.subr.mxu0 0.0
    %1422 = vmatpush1.msra.mxu0 %v1385
    %1423 = vmatprep.subr.mxu0 0.0
    %1424 = vmatpush1.msra.mxu0 %v1384
    %1425 = vmatprep.subr.mxu0 0.0
    %1426 = vmatpush1.msra.mxu0 %v1383
    %1427 = vmatprep.subr.mxu0 0.0
    %1428 = vmatpush1.msra.mxu0 %v1382
    %1429 = vmatprep.subr.mxu0 0.0
    %1430 = vmatpush1.msra.mxu0 %v1381
    %1431 = vmatprep.subr.mxu0 0.0
    %1432 = vmatpush1.msra.mxu0 %v1380
    %1433 = vmatprep.subr.mxu0 0.0
    %1434 = vmatpush2.msra.mxu0 0.0
    %1435 = vmatprep.subr.mxu0 0.0
    %1436 = vmatpush2.msra.mxu0 0.0
    %1437 = vmatprep.subr.mxu0 0.0
    %1438 = vmatpush2.msra.mxu0 0.0
    %1439 = vmatprep.subr.mxu0 0.0
    %1440 = vmatpush2.msra.mxu0 0.0
    %1441 = vmatprep.subr.mxu0 0.0
    %1442 = vmatpush2.msra.mxu0 0.0
    %1443 = vmatprep.subr.mxu0 0.0
    %1444 = vmatpush2.msra.mxu0 0.0
    %1445 = vmatprep.subr.mxu0 0.0
    %1446 = vmatpush2.msra.mxu0 0.0
    %1447 = vmatprep.subr.mxu0 0.0
    %1448 = vmatpush2.msra.mxu0 0.0
    %1449 = vmatprep.subr.mxu0 0.0
    %1450 = vmatpush2.msra.mxu0 0.0
    %1451 = vmatprep.subr.mxu0 0.0
    %1452 = vmatpush2.msra.mxu0 0.0
    %1453 = vmatprep.subr.mxu0 0.0
    %1454 = vmatpush2.msra.mxu0 0.0
    %1455 = vmatprep.subr.mxu0 0.0
    %1456 = vmatpush2.msra.mxu0 0.0
    %1457 = vmatprep.subr.mxu0 0.0
    %1458 = vmatpush2.msra.mxu0 0.0
    %1459 = vmatprep.subr.mxu0 0.0
    %1460 = vmatpush2.msra.mxu0 0.0
    %1461 = vmatprep.subr.mxu0 0.0
    %1462 = vmatpush2.msra.mxu0 0.0
    %1463 = vmatprep.subr.mxu0 0.0
    %1464 = vmatpush2.msra.mxu0 0.0
    %1465 = vmatprep.mubr.f32.mxu0 0.0
    %1466 = vmatmul.mubr.f32.gmra.mxu0 %v1396
    %v1467 = vpop.f32.mrf.mxu0
    %v1468 = vadd.f32 %v1393, %v1467
    %v1469 = vpop.f32.mrf.mxu0
    %1470 = vmatprep.mubr.f32.mxu0 0.0
    %1471 = vmatmul.mubr.f32.gmra.mxu0 %v1399
    %v1472 = vpop.f32.mrf.mxu0
    %v1473 = vadd.f32 %v1393, %v1472
    %v1474 = vpop.f32.mrf.mxu0
    %1475 = vdwg.mxu0
    %v1476 = vld [vmem:[%s59] sm:$0x3]
    %v1477 = vld [vmem:[%s61] sm:$0x3]
    %1479 = vset.pattern.permute.xlu0 0
    %1480 = vperm.xlu0 %1479, %v1477
    %v1481 = vpop.permute.xlu0 %1480
    %vm1483 = vcmask 64512
    %v1485 = vsel %vm1483, %v1476, 0
    %1487 = vmatprep.subr.mxu0 0.0
    %1488 = vmatpush1.msra.mxu0 0.0
    %1489 = vmatprep.subr.mxu0 0.0
    %1490 = vmatpush1.msra.mxu0 0.0
    %1491 = vmatprep.subr.mxu0 0.0
    %1492 = vmatpush1.msra.mxu0 0.0
    %1493 = vmatprep.subr.mxu0 0.0
    %1494 = vmatpush1.msra.mxu0 0.0
    %1495 = vmatprep.subr.mxu0 0.0
    %1496 = vmatpush1.msra.mxu0 0.0
    %1497 = vmatprep.subr.mxu0 0.0
    %1498 = vmatpush1.msra.mxu0 0.0
    %1499 = vmatprep.subr.mxu0 0.0
    %1500 = vmatpush1.msra.mxu0 0.0
    %1501 = vmatprep.subr.mxu0 0.0
    %1502 = vmatpush1.msra.mxu0 0.0
    %1503 = vmatprep.subr.mxu0 0.0
    %1504 = vmatpush1.msra.mxu0 0.0
    %1505 = vmatprep.subr.mxu0 0.0
    %1506 = vmatpush1.msra.mxu0 0.0
    %1507 = vmatprep.subr.mxu0 0.0
    %1508 = vmatpush1.msra.mxu0 0.0
    %1509 = vmatprep.subr.mxu0 0.0
    %1510 = vmatpush1.msra.mxu0 0.0
    %1511 = vmatprep.subr.mxu0 0.0
    %1512 = vmatpush1.msra.mxu0 0.0
    %1513 = vmatprep.subr.mxu0 0.0
    %1514 = vmatpush1.msra.mxu0 0.0
    %1515 = vmatprep.subr.mxu0 0.0
    %1516 = vmatpush1.msra.mxu0 0.0
    %1517 = vmatprep.subr.mxu0 0.0
    %1518 = vmatpush1.msra.mxu0 %v526
    %1519 = vmatprep.subr.mxu0 0.0
    %1520 = vmatpush2.msra.mxu0 0.0
    %1521 = vmatprep.subr.mxu0 0.0
    %1522 = vmatpush2.msra.mxu0 0.0
    %1523 = vmatprep.subr.mxu0 0.0
    %1524 = vmatpush2.msra.mxu0 0.0
    %1525 = vmatprep.subr.mxu0 0.0
    %1526 = vmatpush2.msra.mxu0 0.0
    %1527 = vmatprep.subr.mxu0 0.0
    %1528 = vmatpush2.msra.mxu0 0.0
    %1529 = vmatprep.subr.mxu0 0.0
    %1530 = vmatpush2.msra.mxu0 0.0
    %1531 = vmatprep.subr.mxu0 0.0
    %1532 = vmatpush2.msra.mxu0 0.0
    %1533 = vmatprep.subr.mxu0 0.0
    %1534 = vmatpush2.msra.mxu0 0.0
    %1535 = vmatprep.subr.mxu0 0.0
    %1536 = vmatpush2.msra.mxu0 0.0
    %1537 = vmatprep.subr.mxu0 0.0
    %1538 = vmatpush2.msra.mxu0 0.0
    %1539 = vmatprep.subr.mxu0 0.0
    %1540 = vmatpush2.msra.mxu0 0.0
    %1541 = vmatprep.subr.mxu0 0.0
    %1542 = vmatpush2.msra.mxu0 0.0
    %1543 = vmatprep.subr.mxu0 0.0
    %1544 = vmatpush2.msra.mxu0 0.0
    %1545 = vmatprep.subr.mxu0 0.0
    %1546 = vmatpush2.msra.mxu0 0.0
    %1547 = vmatprep.subr.mxu0 0.0
    %1548 = vmatpush2.msra.mxu0 0.0
    %1549 = vmatprep.subr.mxu0 0.0
    %1550 = vmatpush2.msra.mxu0 0.0
    %1551 = vmatprep.mubr.f32.mxu0 0.0
    %1552 = vmatmul.mubr.f32.gmra.mxu0 %v1485
    %v1553 = vpop.f32.mrf.mxu0
    %v1554 = vadd.f32 %v1481, %v1553
    %v1555 = vpop.f32.mrf.mxu0
    %1556 = vdwg.mxu0
    %vm1557 = vcmask 254976
    %1558 = vst.msk [vmem:[%s71] sm:$0x3] %vm1557, %v1554
    %v1559 = vld [vmem:[%s63] sm:$0x3]
    %v1560 = vld [vmem:[%s65] sm:$0x3]
    %1562 = vset.pattern.permute.xlu0 0
    %1563 = vperm.xlu0 %1562, %v1560
    %v1564 = vpop.permute.xlu0 %1563
    %v1567 = vsel %vm1483, %v1559, 0
    %1569 = vmatprep.subr.mxu0 0.0
    %1570 = vmatpush1.msra.mxu0 0.0
    %1571 = vmatprep.subr.mxu0 0.0
    %1572 = vmatpush1.msra.mxu0 0.0
    %1573 = vmatprep.subr.mxu0 0.0
    %1574 = vmatpush1.msra.mxu0 0.0
    %1575 = vmatprep.subr.mxu0 0.0
    %1576 = vmatpush1.msra.mxu0 0.0
    %1577 = vmatprep.subr.mxu0 0.0
    %1578 = vmatpush1.msra.mxu0 0.0
    %1579 = vmatprep.subr.mxu0 0.0
    %1580 = vmatpush1.msra.mxu0 0.0
    %1581 = vmatprep.subr.mxu0 0.0
    %1582 = vmatpush1.msra.mxu0 0.0
    %1583 = vmatprep.subr.mxu0 0.0
    %1584 = vmatpush1.msra.mxu0 0.0
    %1585 = vmatprep.subr.mxu0 0.0
    %1586 = vmatpush1.msra.mxu0 0.0
    %1587 = vmatprep.subr.mxu0 0.0
    %1588 = vmatpush1.msra.mxu0 0.0
    %1589 = vmatprep.subr.mxu0 0.0
    %1590 = vmatpush1.msra.mxu0 0.0
    %1591 = vmatprep.subr.mxu0 0.0
    %1592 = vmatpush1.msra.mxu0 0.0
    %1593 = vmatprep.subr.mxu0 0.0
    %1594 = vmatpush1.msra.mxu0 0.0
    %1595 = vmatprep.subr.mxu0 0.0
    %1596 = vmatpush1.msra.mxu0 0.0
    %1597 = vmatprep.subr.mxu0 0.0
    %1598 = vmatpush1.msra.mxu0 0.0
    %1599 = vmatprep.subr.mxu0 0.0
    %1600 = vmatpush1.msra.mxu0 %v1468
    %1601 = vmatprep.subr.mxu0 0.0
    %1602 = vmatpush2.msra.mxu0 0.0
    %1603 = vmatprep.subr.mxu0 0.0
    %1604 = vmatpush2.msra.mxu0 0.0
    %1605 = vmatprep.subr.mxu0 0.0
    %1606 = vmatpush2.msra.mxu0 0.0
    %1607 = vmatprep.subr.mxu0 0.0
    %1608 = vmatpush2.msra.mxu0 0.0
    %1609 = vmatprep.subr.mxu0 0.0
    %1610 = vmatpush2.msra.mxu0 0.0
    %1611 = vmatprep.subr.mxu0 0.0
    %1612 = vmatpush2.msra.mxu0 0.0
    %1613 = vmatprep.subr.mxu0 0.0
    %1614 = vmatpush2.msra.mxu0 0.0
    %1615 = vmatprep.subr.mxu0 0.0
    %1616 = vmatpush2.msra.mxu0 0.0
    %1617 = vmatprep.subr.mxu0 0.0
    %1618 = vmatpush2.msra.mxu0 0.0
    %1619 = vmatprep.subr.mxu0 0.0
    %1620 = vmatpush2.msra.mxu0 0.0
    %1621 = vmatprep.subr.mxu0 0.0
    %1622 = vmatpush2.msra.mxu0 0.0
    %1623 = vmatprep.subr.mxu0 0.0
    %1624 = vmatpush2.msra.mxu0 0.0
    %1625 = vmatprep.subr.mxu0 0.0
    %1626 = vmatpush2.msra.mxu0 0.0
    %1627 = vmatprep.subr.mxu0 0.0
    %1628 = vmatpush2.msra.mxu0 0.0
    %1629 = vmatprep.subr.mxu0 0.0
    %1630 = vmatpush2.msra.mxu0 0.0
    %1631 = vmatprep.subr.mxu0 0.0
    %1632 = vmatpush2.msra.mxu0 0.0
    %1633 = vmatprep.mubr.f32.mxu0 0.0
    %1634 = vmatmul.mubr.f32.gmra.mxu0 %v1567
    %v1635 = vpop.f32.mrf.mxu0
    %v1636 = vadd.f32 %v1564, %v1635
    %v1637 = vpop.f32.mrf.mxu0
    %1638 = vdwg.mxu0
    %1639 = vst.msk [vmem:[%s73] sm:$0x3] %vm1557, %v1636
    %v1640 = vld [vmem:[%s59] sm:$0x3]
    %v1641 = vld [vmem:[%s61] sm:$0x3]
    %1643 = vset.pattern.permute.xlu0 0
    %1644 = vperm.xlu0 %1643, %v1641
    %v1645 = vpop.permute.xlu0 %1644
    %v1648 = vsel %vm1483, %v1640, 0
    %1650 = vmatprep.subr.mxu0 0.0
    %1651 = vmatpush1.msra.mxu0 0.0
    %1652 = vmatprep.subr.mxu0 0.0
    %1653 = vmatpush1.msra.mxu0 0.0
    %1654 = vmatprep.subr.mxu0 0.0
    %1655 = vmatpush1.msra.mxu0 0.0
    %1656 = vmatprep.subr.mxu0 0.0
    %1657 = vmatpush1.msra.mxu0 0.0
    %1658 = vmatprep.subr.mxu0 0.0
    %1659 = vmatpush1.msra.mxu0 0.0
    %1660 = vmatprep.subr.mxu0 0.0
    %1661 = vmatpush1.msra.mxu0 0.0
    %1662 = vmatprep.subr.mxu0 0.0
    %1663 = vmatpush1.msra.mxu0 0.0
    %1664 = vmatprep.subr.mxu0 0.0
    %1665 = vmatpush1.msra.mxu0 0.0
    %1666 = vmatprep.subr.mxu0 0.0
    %1667 = vmatpush1.msra.mxu0 0.0
    %1668 = vmatprep.subr.mxu0 0.0
    %1669 = vmatpush1.msra.mxu0 0.0
    %1670 = vmatprep.subr.mxu0 0.0
    %1671 = vmatpush1.msra.mxu0 0.0
    %1672 = vmatprep.subr.mxu0 0.0
    %1673 = vmatpush1.msra.mxu0 0.0
    %1674 = vmatprep.subr.mxu0 0.0
    %1675 = vmatpush1.msra.mxu0 0.0
    %1676 = vmatprep.subr.mxu0 0.0
    %1677 = vmatpush1.msra.mxu0 0.0
    %1678 = vmatprep.subr.mxu0 0.0
    %1679 = vmatpush1.msra.mxu0 0.0
    %1680 = vmatprep.subr.mxu0 0.0
    %1681 = vmatpush1.msra.mxu0 %v527
    %1682 = vmatprep.subr.mxu0 0.0
    %1683 = vmatpush2.msra.mxu0 0.0
    %1684 = vmatprep.subr.mxu0 0.0
    %1685 = vmatpush2.msra.mxu0 0.0
    %1686 = vmatprep.subr.mxu0 0.0
    %1687 = vmatpush2.msra.mxu0 0.0
    %1688 = vmatprep.subr.mxu0 0.0
    %1689 = vmatpush2.msra.mxu0 0.0
    %1690 = vmatprep.subr.mxu0 0.0
    %1691 = vmatpush2.msra.mxu0 0.0
    %1692 = vmatprep.subr.mxu0 0.0
    %1693 = vmatpush2.msra.mxu0 0.0
    %1694 = vmatprep.subr.mxu0 0.0
    %1695 = vmatpush2.msra.mxu0 0.0
    %1696 = vmatprep.subr.mxu0 0.0
    %1697 = vmatpush2.msra.mxu0 0.0
    %1698 = vmatprep.subr.mxu0 0.0
    %1699 = vmatpush2.msra.mxu0 0.0
    %1700 = vmatprep.subr.mxu0 0.0
    %1701 = vmatpush2.msra.mxu0 0.0
    %1702 = vmatprep.subr.mxu0 0.0
    %1703 = vmatpush2.msra.mxu0 0.0
    %1704 = vmatprep.subr.mxu0 0.0
    %1705 = vmatpush2.msra.mxu0 0.0
    %1706 = vmatprep.subr.mxu0 0.0
    %1707 = vmatpush2.msra.mxu0 0.0
    %1708 = vmatprep.subr.mxu0 0.0
    %1709 = vmatpush2.msra.mxu0 0.0
    %1710 = vmatprep.subr.mxu0 0.0
    %1711 = vmatpush2.msra.mxu0 0.0
    %1712 = vmatprep.subr.mxu0 0.0
    %1713 = vmatpush2.msra.mxu0 0.0
    %1714 = vmatprep.mubr.f32.mxu0 0.0
    %1715 = vmatmul.mubr.f32.gmra.mxu0 %v1648
    %v1716 = vpop.f32.mrf.mxu0
    %v1717 = vadd.f32 %v1645, %v1716
    %v1718 = vpop.f32.mrf.mxu0
    %1719 = vdwg.mxu0
    %s1720 = scalar_lea.vmem %s71, 2
    %1721 = vst.msk [vmem:[%s1720] sm:$0x3] %vm1557, %v1717
    %v1722 = vld [vmem:[%s63] sm:$0x3]
    %v1723 = vld [vmem:[%s65] sm:$0x3]
    %1725 = vset.pattern.permute.xlu0 0
    %1726 = vperm.xlu0 %1725, %v1723
    %v1727 = vpop.permute.xlu0 %1726
    %v1730 = vsel %vm1483, %v1722, 0
    %1732 = vmatprep.subr.mxu0 0.0
    %1733 = vmatpush1.msra.mxu0 0.0
    %1734 = vmatprep.subr.mxu0 0.0
    %1735 = vmatpush1.msra.mxu0 0.0
    %1736 = vmatprep.subr.mxu0 0.0
    %1737 = vmatpush1.msra.mxu0 0.0
    %1738 = vmatprep.subr.mxu0 0.0
    %1739 = vmatpush1.msra.mxu0 0.0
    %1740 = vmatprep.subr.mxu0 0.0
    %1741 = vmatpush1.msra.mxu0 0.0
    %1742 = vmatprep.subr.mxu0 0.0
    %1743 = vmatpush1.msra.mxu0 0.0
    %1744 = vmatprep.subr.mxu0 0.0
    %1745 = vmatpush1.msra.mxu0 0.0
    %1746 = vmatprep.subr.mxu0 0.0
    %1747 = vmatpush1.msra.mxu0 0.0
    %1748 = vmatprep.subr.mxu0 0.0
    %1749 = vmatpush1.msra.mxu0 0.0
    %1750 = vmatprep.subr.mxu0 0.0
    %1751 = vmatpush1.msra.mxu0 0.0
    %1752 = vmatprep.subr.mxu0 0.0
    %1753 = vmatpush1.msra.mxu0 0.0
    %1754 = vmatprep.subr.mxu0 0.0
    %1755 = vmatpush1.msra.mxu0 0.0
    %1756 = vmatprep.subr.mxu0 0.0
    %1757 = vmatpush1.msra.mxu0 0.0
    %1758 = vmatprep.subr.mxu0 0.0
    %1759 = vmatpush1.msra.mxu0 0.0
    %1760 = vmatprep.subr.mxu0 0.0
    %1761 = vmatpush1.msra.mxu0 0.0
    %1762 = vmatprep.subr.mxu0 0.0
    %1763 = vmatpush1.msra.mxu0 %v1473
    %1764 = vmatprep.subr.mxu0 0.0
    %1765 = vmatpush2.msra.mxu0 0.0
    %1766 = vmatprep.subr.mxu0 0.0
    %1767 = vmatpush2.msra.mxu0 0.0
    %1768 = vmatprep.subr.mxu0 0.0
    %1769 = vmatpush2.msra.mxu0 0.0
    %1770 = vmatprep.subr.mxu0 0.0
    %1771 = vmatpush2.msra.mxu0 0.0
    %1772 = vmatprep.subr.mxu0 0.0
    %1773 = vmatpush2.msra.mxu0 0.0
    %1774 = vmatprep.subr.mxu0 0.0
    %1775 = vmatpush2.msra.mxu0 0.0
    %1776 = vmatprep.subr.mxu0 0.0
    %1777 = vmatpush2.msra.mxu0 0.0
    %1778 = vmatprep.subr.mxu0 0.0
    %1779 = vmatpush2.msra.mxu0 0.0
    %1780 = vmatprep.subr.mxu0 0.0
    %1781 = vmatpush2.msra.mxu0 0.0
    %1782 = vmatprep.subr.mxu0 0.0
    %1783 = vmatpush2.msra.mxu0 0.0
    %1784 = vmatprep.subr.mxu0 0.0
    %1785 = vmatpush2.msra.mxu0 0.0
    %1786 = vmatprep.subr.mxu0 0.0
    %1787 = vmatpush2.msra.mxu0 0.0
    %1788 = vmatprep.subr.mxu0 0.0
    %1789 = vmatpush2.msra.mxu0 0.0
    %1790 = vmatprep.subr.mxu0 0.0
    %1791 = vmatpush2.msra.mxu0 0.0
    %1792 = vmatprep.subr.mxu0 0.0
    %1793 = vmatpush2.msra.mxu0 0.0
    %1794 = vmatprep.subr.mxu0 0.0
    %1795 = vmatpush2.msra.mxu0 0.0
    %1796 = vmatprep.mubr.f32.mxu0 0.0
    %1797 = vmatmul.mubr.f32.gmra.mxu0 %v1730
    %v1798 = vpop.f32.mrf.mxu0
    %v1799 = vadd.f32 %v1727, %v1798
    %v1800 = vpop.f32.mrf.mxu0
    %1801 = vdwg.mxu0
    %s1802 = scalar_lea.vmem %s73, 2
    %1803 = vst.msk [vmem:[%s1802] sm:$0x3] %vm1557, %v1799
    // Predicated region
    $region134: #{trm_encoder_forward.9} parent=1 // pred_check
      _
    $region135: #{trm_encoder_forward.9} parent=1 // pred_check_branch
      %1805 = sbr.rel (0) target = $region137
    $region136: #{trm_encoder_forward.9} parent=1 // pred_region
      %s1807 = ssub.s32 256, 256
      %1808 = vsyncadd [#allocation3], %s1807
      %s1809 = sshll.u32 [#allocation2], 4
      %s1810 = int_to_ptr.vmem [resolvable:$true] %s1809
      %1815 = dma.vmem_to_hbm [thread:$0]  %s1810, 256, %s67, [#allocation3], 128, 128, 8
    $region137: #{trm_encoder_forward.9} parent=1 // pred_fallthru
      _
    // Predicated region
    $region138: #{trm_encoder_forward.9} parent=1 // pred_check
      _
    $region139: #{trm_encoder_forward.9} parent=1 // pred_check_branch
      %1817 = sbr.rel (0) target = $region141
    $region140: #{trm_encoder_forward.9} parent=1 // pred_region
      %s1819 = ssub.s32 256, 256
      %1820 = vsyncadd [#allocation5], %s1819
      %s1821 = sshll.u32 [#allocation4], 4
      %s1822 = int_to_ptr.vmem [resolvable:$true] %s1821
      %1827 = dma.vmem_to_hbm [thread:$0]  %s1822, 256, %s69, [#allocation5], 128, 128, 8
    $region141: #{trm_encoder_forward.9} parent=1 // pred_fallthru
      _
    // Predicated region
    $region142: #{trm_encoder_forward.9} parent=1 // pred_check
      _
    $region143: #{trm_encoder_forward.9} parent=1 // pred_check_branch
      %1829 = sbr.rel (0) target = $region145
    $region144: #{trm_encoder_forward.9} parent=1 // pred_region
      _
    $region145: #{trm_encoder_forward.9} parent=1 // pred_fallthru
      _
    // Predicated region
    $region146: #{trm_encoder_forward.9} parent=1 // pred_check
      _
    $region147: #{trm_encoder_forward.9} parent=1 // pred_check_branch
      %1831 = sbr.rel (0) target = $region149
    $region148: #{trm_encoder_forward.9} parent=1 // pred_region
      _
    $region149: #{trm_encoder_forward.9} parent=1 // pred_fallthru
      _
    // Predicated region
    $region150: #{trm_encoder_forward.9} parent=1 // pred_check
      _
    $region151: #{trm_encoder_forward.9} parent=1 // pred_check_branch
      %1833 = sbr.rel (0) target = $region153
    $region152: #{trm_encoder_forward.9} parent=1 // pred_region
      %1834 = dma.done [#allocation3], 256
    $region153: #{trm_encoder_forward.9} parent=1 // pred_fallthru
      _
    // Predicated region
    $region154: #{trm_encoder_forward.9} parent=1 // pred_check
      _
    $region155: #{trm_encoder_forward.9} parent=1 // pred_check_branch
      %1836 = sbr.rel (0) target = $region157
    $region156: #{trm_encoder_forward.9} parent=1 // pred_region
      %1837 = dma.done [#allocation5], 256
    $region157: #{trm_encoder_forward.9} parent=1 // pred_fallthru
      _
    // Predicated region
    $region158: #{trm_encoder_forward.9} parent=1 // pred_check
      _
    $region159: #{trm_encoder_forward.9} parent=1 // pred_check_branch
      %1839 = sbr.rel (0) target = $region161
    $region160: #{trm_encoder_forward.9} parent=1 // pred_region
      _
    $region161: #{trm_encoder_forward.9} parent=1 // pred_fallthru
      _
    // Predicated region
    $region162: #{trm_encoder_forward.9} parent=1 // pred_check
      _
    $region163: #{trm_encoder_forward.9} parent=1 // pred_check_branch
      %1841 = sbr.rel (0) target = $region165
    $region164: #{trm_encoder_forward.9} parent=1 // pred_region
      _
    $region165: #{trm_encoder_forward.9} parent=1 // pred_fallthru
      _
    %1842 = vsyncpa [#allocation3], 1
    %1843 = vsyncpa [#allocation5], 1

</llo_original>
